<compile_context>
chip_gen: v7x
topology: tpu7x:2x2x1
jax: 0.10.0
libtpu: 0.0.40
codegen_flags: <defaults>
</compile_context>

<pallas_src>
import jax
import jax.numpy as jnp
from jax.experimental import pallas as pl
from jax.experimental.pallas import tpu as pltpu

IN_FEATURES = 1792      # efficientnet_b4 classifier.fc.in_features
HIDDEN = 1024
OUT_CLASSES = 3         # output_classes, classification_strategy='categorical'
PAD_OUT = 128           # lane-dense padded logits width
TB_DEFAULT = 8          # batch tile (grid axis; "parallel" -> megacore-sharded on v7x)


def _head_kernel(feat_ref, w1_ref, b1_ref, w2_ref, b2_ref, out_ref):
    # feat_ref: (TB, HW, C) bf16 — lane-dense channels, spatial on sublanes.
    # AdaptiveMaxPool2d(1): global max over the spatial axis (exact; promoted to f32
    # for a robust sublane reduce — max is value-preserving on bf16 inputs).
    pooled = jnp.max(feat_ref[...].astype(jnp.float32), axis=1)          # (TB, C) f32

    # Linear(1792 -> 1024): bf16 x bf16 on the MXU, f32 accumulation, f32 bias.
    h = jnp.dot(pooled.astype(jnp.bfloat16), w1_ref[...],
                preferred_element_type=jnp.float32) + b1_ref[...]        # (TB, 1024)

    # Dropout(0.4) is identity in eval mode.

    # Linear(1024 -> 3) on a 128-wide padded slab: padded weight columns are zero and
    # padded biases are -1e30, so padded lanes get probability exactly 0.
    logits = jnp.dot(h.astype(jnp.bfloat16), w2_ref[...],
                     preferred_element_type=jnp.float32) + b2_ref[...]   # (TB, 128)

    # Softmax(dim=1); denominator reciprocal on the EUP (approx, essentially free).
    m = jnp.max(logits, axis=-1, keepdims=True)
    e = jnp.exp(logits - m)
    out_ref[...] = e * pl.reciprocal(jnp.sum(e, axis=-1, keepdims=True), approx=True)


def prepare_params(w1_torch, b1_torch, w2_torch, b2_torch):
    """One-time conversion of PyTorch-layout nn.Linear params to kernel form.

    PyTorch stores weight as (out_features, in_features); transpose so a real
    checkpoint maps correctly. Weights are stored bf16 (MXU-native), biases f32.
    """
    w1 = jnp.asarray(w1_torch, jnp.float32).T.astype(jnp.bfloat16)        # (1792, 1024)
    b1 = jnp.asarray(b1_torch, jnp.float32).reshape(1, HIDDEN)
    w2 = jnp.asarray(w2_torch, jnp.float32).T                             # (1024, 3)
    w2_pad = (jnp.zeros((HIDDEN, PAD_OUT), jnp.float32)
              .at[:, :OUT_CLASSES].set(w2).astype(jnp.bfloat16))
    b2_pad = jnp.full((1, PAD_OUT), -1e30, jnp.float32).at[0, :OUT_CLASSES].set(
        jnp.asarray(b2_torch, jnp.float32).reshape(OUT_CLASSES))
    return w1, b1, w2_pad, b2_pad


@jax.jit
def model_out_head(x_nchw, w1_bf16, b1, w2_pad, b2_pad):
    """Head: AdaptiveMaxPool2d(1) -> Linear(1792,1024) -> Dropout(eval) -> Linear(1024,3) -> Softmax."""
    n, c, hgt, wid = x_nchw.shape
    assert c == IN_FEATURES
    hw = hgt * wid

    # NCHW -> (N, HW, C): one XLA relayout pass so channels are lane-dense in-kernel.
    # Cast to bf16: halves the dominant HBM stream (feat is the roofline at real N).
    feat = jnp.transpose(x_nchw.reshape(n, c, hw), (0, 2, 1)).astype(jnp.bfloat16)

    tb = n if n < TB_DEFAULT else TB_DEFAULT
    n_pad = pl.cdiv(n, tb) * tb
    if n_pad != n:
        feat = jnp.pad(feat, ((0, n_pad - n), (0, 0), (0, 0)))
    num_blocks = n_pad // tb

    # VMEM budget derived from actual tiles (x2 for the auto-pipeline's buffering,
    # including grid-invariant operands) + in-kernel f32 pooling temp + headroom.
    hw_pad = ((hw + 15) // 16) * 16                       # bf16 sublane packing
    feat_tile = tb * hw_pad * c * 2                       # bf16 bytes per feat tile
    vmem_bytes = (2 * feat_tile                           # feat (double-buffered)
                  + 2 * c * HIDDEN * 2                    # w1 (bf16, DMA'd once)
                  + 2 * 8 * HIDDEN * 4                    # b1
                  + 2 * HIDDEN * PAD_OUT * 2              # w2 (bf16)
                  + 2 * 8 * PAD_OUT * 4                   # b2
                  + 2 * max(tb, 8) * PAD_OUT * 4          # output tile
                  + 2 * feat_tile                         # f32 pooling temporary
                  + (4 << 20))                            # compiler scratch headroom
    vmem_bytes = int(min(max(vmem_bytes, 16 << 20), 48 << 20))

    probs_pad = pl.pallas_call(
        _head_kernel,
        out_shape=jax.ShapeDtypeStruct((n_pad, PAD_OUT), jnp.float32),
        grid=(num_blocks,),
        in_specs=[
            pl.BlockSpec((tb, hw, c), lambda i: (i, 0, 0)),      # streamed feat tile
            pl.BlockSpec((c, HIDDEN), lambda i: (0, 0)),          # resident w1 (bf16)
            pl.BlockSpec((1, HIDDEN), lambda i: (0, 0)),          # resident b1
            pl.BlockSpec((HIDDEN, PAD_OUT), lambda i: (0, 0)),    # resident w2 (bf16)
            pl.BlockSpec((1, PAD_OUT), lambda i: (0, 0)),         # resident b2 (padded)
        ],
        out_specs=pl.BlockSpec((tb, PAD_OUT), lambda i: (i, 0)),  # lane-dense stores
        compiler_params=pltpu.CompilerParams(
            # batch tiles are independent -> shard across v7x's 2 TensorCores without
            # duplicating the feature-map stream per core.
            dimension_semantics=("parallel",),
            vmem_limit_bytes=vmem_bytes,
        ),
        cost_estimate=pl.CostEstimate(
            flops=(n_pad * hw * c                        # max-pool compares
                   + 2 * n_pad * c * HIDDEN              # fc1
                   + 2 * n_pad * HIDDEN * PAD_OUT        # fc2 (padded)
                   + 5 * n_pad * PAD_OUT),               # softmax elementwise
            transcendentals=n_pad * PAD_OUT + n_pad,     # exp + reciprocal
            bytes_accessed=(n_pad * hw * c * 2           # feat stream (bf16)
                            + c * HIDDEN * 2 + HIDDEN * 4
                            + HIDDEN * PAD_OUT * 2 + PAD_OUT * 4
                            + n_pad * PAD_OUT * 4),
        ),
    )(feat, w1_bf16, b1, w2_pad, b2_pad)

    return probs_pad[:n, :OUT_CLASSES]


def _reference_f32(x, w1_t, b1_t, w2_t, b2_t):
    """Pure-f32 JAX reference matching the PyTorch module semantics (eval mode)."""
    n, c, hh, ww = x.shape
    pooled = jnp.max(x.reshape(n, c, hh * ww), axis=-1)       # AdaptiveMaxPool2d(1)
    hdn = pooled @ w1_t.T + b1_t
    logits = hdn @ w2_t.T + b2_t
    return jax.nn.softmax(logits, axis=1)


def _reference_bf16(x, w1_t, b1_t, w2_t, b2_t):
    """Reference matching the kernel's bf16 streaming numerics."""
    n, c, hh, ww = x.shape
    pooled = jnp.max(x.reshape(n, c, hh * ww).astype(jnp.bfloat16), axis=-1)
    hdn = jnp.dot(pooled, w1_t.T.astype(jnp.bfloat16),
                  preferred_element_type=jnp.float32) + b1_t
    logits = jnp.dot(hdn.astype(jnp.bfloat16), w2_t.T.astype(jnp.bfloat16),
                     preferred_element_type=jnp.float32) + b2_t
    return jax.nn.softmax(logits, axis=1)


if __name__ == "__main__":
    key = jax.random.PRNGKey(0)
    kx, k1, k2, k3, k4 = jax.random.split(key, 5)

    # Small, module-consistent shapes: batch=2, channels=1792 (B4 head width),
    # 4x4 backbone feature map (NCHW, as the torch backbone would emit).
    N, H, W = 2, 4, 4
    x = jax.random.normal(kx, (N, IN_FEATURES, H, W), jnp.float32)

    # PyTorch-layout nn.Linear params: weight (out, in), bias (out,)
    lim1 = 1.0 / (IN_FEATURES ** 0.5)
    lim2 = 1.0 / (HIDDEN ** 0.5)
    w1_t = jax.random.uniform(k1, (HIDDEN, IN_FEATURES), jnp.float32, -lim1, lim1)
    b1_t = jax.random.uniform(k2, (HIDDEN,), jnp.float32, -lim1, lim1)
    w2_t = jax.random.uniform(k3, (OUT_CLASSES, HIDDEN), jnp.float32, -lim2, lim2)
    b2_t = jax.random.uniform(k4, (OUT_CLASSES,), jnp.float32, -lim2, lim2)

    params = prepare_params(w1_t, b1_t, w2_t, b2_t)   # one-time weight prep
    out = jax.block_until_ready(model_out_head(x, *params))

    ref16 = _reference_bf16(x, w1_t, b1_t, w2_t, b2_t)
    ref32 = _reference_f32(x, w1_t, b1_t, w2_t, b2_t)

    assert out.shape == (N, OUT_CLASSES)
    assert bool(jnp.all(jnp.isfinite(out)))
    # approx-reciprocal softmax denominator => slightly relaxed row-sum tolerance
    assert jnp.allclose(jnp.sum(out, axis=1), 1.0, atol=5e-3), "softmax rows must sum to ~1"
    assert jnp.allclose(out, ref16, atol=5e-3), "mismatch vs bf16-streaming reference"
    # bf16 activation/weight streaming => relaxed tolerance vs the full-f32 module reference
    assert jnp.allclose(out, ref32, atol=3e-2), "mismatch vs f32 module reference"

    print("KERNEL_OK")
</pallas_src>

<mosaic_0001>
module attributes {stable_mosaic.version = 11 : i64} {
  func.func @_head_kernel(%arg0: i32, %arg1: memref<2x16x1792xbf16, #tpu.memory_space<vmem>>, %arg2: memref<1792x1024xbf16, #tpu.memory_space<vmem>>, %arg3: memref<1x1024xf32, #tpu.memory_space<vmem>>, %arg4: memref<1024x128xbf16, #tpu.memory_space<vmem>>, %arg5: memref<1x128xf32, #tpu.memory_space<vmem>>, %arg6: memref<2x128xf32, #tpu.memory_space<vmem>>) attributes {dimension_semantics = [#tpu.dimension_semantics<parallel>], iteration_bounds = array<i64: 1>, scalar_prefetch = 0 : i64, scratch_operands = 0 : i64, tpu.core_type = #tpu.core_type<tc>, window_params = [{transform_indices = @transform_0, window_bounds = array<i64: 2, 16, 1792>}, {pipeline_mode = #tpu.pipeline_mode<synchronous>, transform_indices = @transform_1, window_bounds = array<i64: 1792, 1024>}, {pipeline_mode = #tpu.pipeline_mode<synchronous>, transform_indices = @transform_2, window_bounds = array<i64: 1, 1024>}, {pipeline_mode = #tpu.pipeline_mode<synchronous>, transform_indices = @transform_3, window_bounds = array<i64: 1024, 128>}, {pipeline_mode = #tpu.pipeline_mode<synchronous>, transform_indices = @transform_4, window_bounds = array<i64: 1, 128>}, {transform_indices = @transform_5, window_bounds = array<i64: 2, 128>}]} {
    %c0 = arith.constant 0 : index
    %c0_0 = arith.constant 0 : index
    %c0_1 = arith.constant 0 : index
    %0 = vector.load %arg1[%c0, %c0_0, %c0_1] : memref<2x16x1792xbf16, #tpu.memory_space<vmem>>, vector<2x16x1792xbf16>
    %1 = arith.extf %0 : vector<2x16x1792xbf16> to vector<2x16x1792xf32>
    %cst = arith.constant dense<0xFF800000> : vector<2x1792xf32>
    %2 = vector.multi_reduction <maximumf>, %1, %cst [1] : vector<2x16x1792xf32> to vector<2x1792xf32>
    %3 = arith.truncf %2 : vector<2x1792xf32> to vector<2x1792xbf16>
    %c0_2 = arith.constant 0 : index
    %c0_3 = arith.constant 0 : index
    %4 = vector.load %arg2[%c0_2, %c0_3] : memref<1792x1024xbf16, #tpu.memory_space<vmem>>, vector<1792x1024xbf16>
    %cst_4 = arith.constant dense<0.000000e+00> : vector<2x1024xf32>
    %5 = tpu.matmul %3, %4, %cst_4 {dimension_numbers = #tpu.dot_dimension_numbers<[1], [0], [0], [1], [0, 0, 1, 1], [], []>} : vector<2x1792xbf16>, vector<1792x1024xbf16>, vector<2x1024xf32> -> vector<2x1024xf32>
    %c0_5 = arith.constant 0 : index
    %c0_6 = arith.constant 0 : index
    %6 = vector.load %arg3[%c0_5, %c0_6] : memref<1x1024xf32, #tpu.memory_space<vmem>>, vector<1x1024xf32>
    %7 = vector.broadcast %6 : vector<1x1024xf32> to vector<2x1024xf32>
    %8 = arith.addf %5, %7 : vector<2x1024xf32>
    %9 = arith.truncf %8 : vector<2x1024xf32> to vector<2x1024xbf16>
    %c0_7 = arith.constant 0 : index
    %c0_8 = arith.constant 0 : index
    %10 = vector.load %arg4[%c0_7, %c0_8] : memref<1024x128xbf16, #tpu.memory_space<vmem>>, vector<1024x128xbf16>
    %cst_9 = arith.constant dense<0.000000e+00> : vector<2x128xf32>
    %11 = tpu.matmul %9, %10, %cst_9 {dimension_numbers = #tpu.dot_dimension_numbers<[1], [0], [0], [1], [0, 0, 1, 1], [], []>} : vector<2x1024xbf16>, vector<1024x128xbf16>, vector<2x128xf32> -> vector<2x128xf32>
    %c0_10 = arith.constant 0 : index
    %c0_11 = arith.constant 0 : index
    %12 = vector.load %arg5[%c0_10, %c0_11] : memref<1x128xf32, #tpu.memory_space<vmem>>, vector<1x128xf32>
    %13 = vector.broadcast %12 : vector<1x128xf32> to vector<2x128xf32>
    %14 = arith.addf %11, %13 : vector<2x128xf32>
    %cst_12 = arith.constant dense<0xFF800000> : vector<2xf32>
    %15 = vector.multi_reduction <maximumf>, %14, %cst_12 [1] : vector<2x128xf32> to vector<2xf32>
    %16 = vector.shape_cast %15 : vector<2xf32> to vector<2x1xf32>
    %17 = vector.broadcast %16 : vector<2x1xf32> to vector<2x128xf32>
    %18 = arith.subf %14, %17 : vector<2x128xf32>
    %19 = math.exp %18 : vector<2x128xf32>
    %cst_13 = arith.constant dense<0.000000e+00> : vector<2xf32>
    %20 = vector.multi_reduction <add>, %19, %cst_13 [1] : vector<2x128xf32> to vector<2xf32>
    %21 = vector.shape_cast %20 : vector<2xf32> to vector<2x1xf32>
    %22 = tpu.reciprocal %21 {approx = true} : vector<2x1xf32> -> vector<2x1xf32>
    %23 = vector.broadcast %22 : vector<2x1xf32> to vector<2x128xf32>
    %24 = arith.mulf %19, %23 : vector<2x128xf32>
    %c0_14 = arith.constant 0 : index
    %c0_15 = arith.constant 0 : index
    %25 = vector.load %arg6[%c0_14, %c0_15] : memref<2x128xf32, #tpu.memory_space<vmem>>, vector<2x128xf32>
    tpu.vector_store %arg6[%c0_14, %c0_15], %24 {strides = array<i32>} : memref<2x128xf32, #tpu.memory_space<vmem>>, vector<2x128xf32>,
    return
  }
  func.func @transform_0(%arg0: i32) -> (i32, i32, i32) {
    %c0_i32 = arith.constant 0 : i32
    %c0_i32_0 = arith.constant 0 : i32
    %c0_i32_1 = arith.constant 0 : i32
    return %arg0, %c0_i32, %c0_i32_0 : i32, i32, i32
  }
  func.func @transform_1(%arg0: i32) -> (i32, i32) {
    %c0_i32 = arith.constant 0 : i32
    %c0_i32_0 = arith.constant 0 : i32
    %c0_i32_1 = arith.constant 0 : i32
    return %c0_i32, %c0_i32_0 : i32, i32
  }
  func.func @transform_2(%arg0: i32) -> (i32, i32) {
    %c0_i32 = arith.constant 0 : i32
    %c0_i32_0 = arith.constant 0 : i32
    %c0_i32_1 = arith.constant 0 : i32
    return %c0_i32, %c0_i32_0 : i32, i32
  }
  func.func @transform_3(%arg0: i32) -> (i32, i32) {
    %c0_i32 = arith.constant 0 : i32
    %c0_i32_0 = arith.constant 0 : i32
    %c0_i32_1 = arith.constant 0 : i32
    return %c0_i32, %c0_i32_0 : i32, i32
  }
  func.func @transform_4(%arg0: i32) -> (i32, i32) {
    %c0_i32 = arith.constant 0 : i32
    %c0_i32_0 = arith.constant 0 : i32
    %c0_i32_1 = arith.constant 0 : i32
    return %c0_i32, %c0_i32_0 : i32, i32
  }
  func.func @transform_5(%arg0: i32) -> (i32, i32) {
    %c0_i32 = arith.constant 0 : i32
    %c0_i32_0 = arith.constant 0 : i32
    return %arg0, %c0_i32 : i32, i32
  }
}

</mosaic_0001>

<llo_original>
// kernel: model_out_head.1
$region0: #{model_out_head.1}
  #allocation0 [shape = 'u32[]', space=smem, size = 0x4, offset = 0x4, fixed_abs, tag = 'smem constant byte address 0x4 - core index']
  #allocation1 [shape = 'u32[144,128]{1,0:T(1,128)}', space=vmem, size = 0x12000, scoped, tag = 'internal scratch']
  %s0 = inlined_call_operand.vmem [shape: bf16[2,16,1792], index: 0, kind: input, shape index: {}]
  %s1 = inlined_call_operand.hbm [shape: bf16[1792,1024], index: 1, kind: input, shape index: {}]
  %s2 = inlined_call_operand.hbm [shape: f32[1,1024], index: 2, kind: input, shape index: {}]
  %s3 = inlined_call_operand.hbm [shape: bf16[1024,128], index: 3, kind: input, shape index: {}]
  %s4 = inlined_call_operand.hbm [shape: f32[1,128], index: 4, kind: input, shape index: {}]
  %s5 = inlined_call_operand.hbm [shape: f32[2,128], index: 5, kind: output, shape index: {}]
  %s6 = sld [smem:[#allocation0]]
  $region46: #{model_out_head.1} parent=0
    _
  %s8 = ssub.s32 1, %s6
  %s9 = scalar_select 0, %s8, %s6
  $region1: #{model_out_head.1} parent=0
    #allocation2 [shape = 'u8[3670016]{0}', space=vmem, size = 0x380000, scoped, tag = 'input window, operand 1, single buffered']
    #allocation3 [shape = 's32[1]{0}', space=sflag, size = 0x4, scoped, tag = 'scoped memory for model_out_head.1']
    #allocation4 [shape = 's32[1]{0}', space=sflag, size = 0x4, scoped, tag = 'scoped memory for model_out_head.1']
    #allocation5 [shape = 'u8[4096]{0}', space=vmem, size = 0x1000, scoped, tag = 'input window, operand 2, single buffered']
    #allocation6 [shape = 's32[1]{0}', space=sflag, size = 0x4, scoped, tag = 'scoped memory for model_out_head.1']
    #allocation7 [shape = 'u8[262144]{0}', space=vmem, size = 0x40000, scoped, tag = 'input window, operand 3, single buffered']
    #allocation8 [shape = 'u8[512]{0}', space=vmem, size = 0x400, scoped, tag = 'input window, operand 4, single buffered']
    #allocation9 [shape = 's32[1]{0}', space=sflag, size = 0x4, scoped, tag = 'scoped memory for model_out_head.1']
    #allocation10 [shape = 'u8[1024]{0}', space=vmem, size = 0x400, scoped, tag = 'output window, operand 0, single buffered']
    %10 = vsyncpa [#allocation3], 0
    %11 = vsyncpa [#allocation6], 0
    %12 = vsyncpa [#allocation9], 0
    %13 = vsyncpa [#allocation4], 0
    // Predicated region
    $region2: #{model_out_head.1} parent=1 // pred_check
      _
    $region3: #{model_out_head.1} parent=1 // pred_check_branch
      %15 = sbr.rel (0) target = $region5
    $region4: #{model_out_head.1} parent=1 // pred_region
      _
    $region5: #{model_out_head.1} parent=1 // pred_fallthru
      _
    // Predicated region
    $region6: #{model_out_head.1} parent=1 // pred_check
      _
    $region7: #{model_out_head.1} parent=1 // pred_check_branch
      %17 = sbr.rel (0) target = $region9
    $region8: #{model_out_head.1} parent=1 // pred_region
      %s19 = ssub.s32 114688, 114688
      %20 = vsyncadd [#allocation3], %s19
      %s21 = sshll.u32 [#allocation2], 4
      %s22 = int_to_ptr.vmem [resolvable:$true] %s21
      %27 = dma.hbm_to_vmem [thread:$0]  %s1, 114688, %s22, [#allocation3], 512, 512, 32
    $region9: #{model_out_head.1} parent=1 // pred_fallthru
      _
    // Predicated region
    $region10: #{model_out_head.1} parent=1 // pred_check
      _
    $region11: #{model_out_head.1} parent=1 // pred_check_branch
      %29 = sbr.rel (0) target = $region13
    $region12: #{model_out_head.1} parent=1 // pred_region
      %s31 = ssub.s32 128, 128
      %32 = vsyncadd [#allocation6], %s31
      %s34 = sshll.u32 [#allocation5], 4
      %s35 = int_to_ptr.vmem [resolvable:$true] %s34
      %37 = dma.hbm_to_vmem [thread:$0]  %s2, 128, %s35, [#allocation6]
    $region13: #{model_out_head.1} parent=1 // pred_fallthru
      _
    // Predicated region
    $region14: #{model_out_head.1} parent=1 // pred_check
      _
    $region15: #{model_out_head.1} parent=1 // pred_check_branch
      %39 = sbr.rel (0) target = $region17
    $region16: #{model_out_head.1} parent=1 // pred_region
      %s41 = ssub.s32 8192, 8192
      %42 = vsyncadd [#allocation6], %s41
      %s43 = sshll.u32 [#allocation7], 4
      %s44 = int_to_ptr.vmem [resolvable:$true] %s43
      %49 = dma.hbm_to_vmem [thread:$0]  %s3, 8192, %s44, [#allocation6], 64, 64, 4
    $region17: #{model_out_head.1} parent=1 // pred_fallthru
      _
    // Predicated region
    $region18: #{model_out_head.1} parent=1 // pred_check
      _
    $region19: #{model_out_head.1} parent=1 // pred_check_branch
      %51 = sbr.rel (0) target = $region21
    $region20: #{model_out_head.1} parent=1 // pred_region
      %s53 = ssub.s32 16, 16
      %54 = vsyncadd [#allocation9], %s53
      %s56 = sshll.u32 [#allocation8], 4
      %s57 = int_to_ptr.vmem [resolvable:$true] %s56
      %59 = dma.hbm_to_vmem [thread:$0]  %s4, 16, %s57, [#allocation9]
    $region21: #{model_out_head.1} parent=1 // pred_fallthru
      _
    // Predicated region
    $region22: #{model_out_head.1} parent=1 // pred_check
      _
    $region23: #{model_out_head.1} parent=1 // pred_check_branch
      %61 = sbr.rel (0) target = $region25
    $region24: #{model_out_head.1} parent=1 // pred_region
      %62 = dma.done [#allocation3], 114688
    $region25: #{model_out_head.1} parent=1 // pred_fallthru
      _
    // Predicated region
    $region26: #{model_out_head.1} parent=1 // pred_check
      _
    $region27: #{model_out_head.1} parent=1 // pred_check_branch
      %64 = sbr.rel (0) target = $region29
    $region28: #{model_out_head.1} parent=1 // pred_region
      %65 = dma.done [#allocation6], 128
    $region29: #{model_out_head.1} parent=1 // pred_fallthru
      _
    // Predicated region
    $region30: #{model_out_head.1} parent=1 // pred_check
      _
    $region31: #{model_out_head.1} parent=1 // pred_check_branch
      %67 = sbr.rel (0) target = $region33
    $region32: #{model_out_head.1} parent=1 // pred_region
      %68 = dma.done [#allocation6], 8192
    $region33: #{model_out_head.1} parent=1 // pred_fallthru
      _
    // Predicated region
    $region34: #{model_out_head.1} parent=1 // pred_check
      _
    $region35: #{model_out_head.1} parent=1 // pred_check_branch
      %70 = sbr.rel (0) target = $region37
    $region36: #{model_out_head.1} parent=1 // pred_region
      %71 = dma.done [#allocation9], 16
    $region37: #{model_out_head.1} parent=1 // pred_fallthru
      _
    %v73 = vld [vmem:[%s0] sm:$0xff]
    %v74 = vld [vmem:[%s0 + $0x8] sm:$0xff]
    %v75 = vld [vmem:[%s0 + $0x10] sm:$0xff]
    %v76 = vld [vmem:[%s0 + $0x18] sm:$0xff]
    %v77 = vld [vmem:[%s0 + $0x20] sm:$0xff]
    %v78 = vld [vmem:[%s0 + $0x28] sm:$0xff]
    %v79 = vld [vmem:[%s0 + $0x30] sm:$0xff]
    %v80 = vld [vmem:[%s0 + $0x38] sm:$0xff]
    %v81 = vld [vmem:[%s0 + $0x40] sm:$0xff]
    %v82 = vld [vmem:[%s0 + $0x48] sm:$0xff]
    %v83 = vld [vmem:[%s0 + $0x50] sm:$0xff]
    %v84 = vld [vmem:[%s0 + $0x58] sm:$0xff]
    %v85 = vld [vmem:[%s0 + $0x60] sm:$0xff]
    %v86 = vld [vmem:[%s0 + $0x68] sm:$0xff]
    %v87 = vld [vmem:[%s0 + $0x70] sm:$0xff]
    %v88 = vld [vmem:[%s0 + $0x78] sm:$0xff]
    %v89 = vld [vmem:[%s0 + $0x80] sm:$0xff]
    %v90 = vld [vmem:[%s0 + $0x88] sm:$0xff]
    %v91 = vld [vmem:[%s0 + $0x90] sm:$0xff]
    %v92 = vld [vmem:[%s0 + $0x98] sm:$0xff]
    %v93 = vld [vmem:[%s0 + $0xa0] sm:$0xff]
    %v94 = vld [vmem:[%s0 + $0xa8] sm:$0xff]
    %v95 = vld [vmem:[%s0 + $0xb0] sm:$0xff]
    %v96 = vld [vmem:[%s0 + $0xb8] sm:$0xff]
    %v97 = vld [vmem:[%s0 + $0xc0] sm:$0xff]
    %v98 = vld [vmem:[%s0 + $0xc8] sm:$0xff]
    %v99 = vld [vmem:[%s0 + $0xd0] sm:$0xff]
    %v100 = vld [vmem:[%s0 + $0xd8] sm:$0xff]
    %v101 = vunpack.c.l.bf16 %v73
    %v102 = vunpack.c.h.bf16 %v73
    %v103 = vunpack.c.l.bf16 %v74
    %v104 = vunpack.c.h.bf16 %v74
    %v105 = vunpack.c.l.bf16 %v75
    %v106 = vunpack.c.h.bf16 %v75
    %v107 = vunpack.c.l.bf16 %v76
    %v108 = vunpack.c.h.bf16 %v76
    %v109 = vunpack.c.l.bf16 %v77
    %v110 = vunpack.c.h.bf16 %v77
    %v111 = vunpack.c.l.bf16 %v78
    %v112 = vunpack.c.h.bf16 %v78
    %v113 = vunpack.c.l.bf16 %v79
    %v114 = vunpack.c.h.bf16 %v79
    %v115 = vunpack.c.l.bf16 %v80
    %v116 = vunpack.c.h.bf16 %v80
    %v117 = vunpack.c.l.bf16 %v81
    %v118 = vunpack.c.h.bf16 %v81
    %v119 = vunpack.c.l.bf16 %v82
    %v120 = vunpack.c.h.bf16 %v82
    %v121 = vunpack.c.l.bf16 %v83
    %v122 = vunpack.c.h.bf16 %v83
    %v123 = vunpack.c.l.bf16 %v84
    %v124 = vunpack.c.h.bf16 %v84
    %v125 = vunpack.c.l.bf16 %v85
    %v126 = vunpack.c.h.bf16 %v85
    %v127 = vunpack.c.l.bf16 %v86
    %v128 = vunpack.c.h.bf16 %v86
    %v129 = vunpack.c.l.bf16 %v87
    %v130 = vunpack.c.h.bf16 %v87
    %v131 = vunpack.c.l.bf16 %v88
    %v132 = vunpack.c.h.bf16 %v88
    %v133 = vunpack.c.l.bf16 %v89
    %v134 = vunpack.c.h.bf16 %v89
    %v135 = vunpack.c.l.bf16 %v90
    %v136 = vunpack.c.h.bf16 %v90
    %v137 = vunpack.c.l.bf16 %v91
    %v138 = vunpack.c.h.bf16 %v91
    %v139 = vunpack.c.l.bf16 %v92
    %v140 = vunpack.c.h.bf16 %v92
    %v141 = vunpack.c.l.bf16 %v93
    %v142 = vunpack.c.h.bf16 %v93
    %v143 = vunpack.c.l.bf16 %v94
    %v144 = vunpack.c.h.bf16 %v94
    %v145 = vunpack.c.l.bf16 %v95
    %v146 = vunpack.c.h.bf16 %v95
    %v147 = vunpack.c.l.bf16 %v96
    %v148 = vunpack.c.h.bf16 %v96
    %v149 = vunpack.c.l.bf16 %v97
    %v150 = vunpack.c.h.bf16 %v97
    %v151 = vunpack.c.l.bf16 %v98
    %v152 = vunpack.c.h.bf16 %v98
    %v153 = vunpack.c.l.bf16 %v99
    %v154 = vunpack.c.h.bf16 %v99
    %v155 = vunpack.c.l.bf16 %v100
    %v156 = vunpack.c.h.bf16 %v100
    %v157 = vmax.f32 %v101, %v115
    %v158 = vrot.slane %v157, 4
    %v159 = vmax.f32 %v157, %v158
    %v160 = vrot.slane %v159, 2
    %v161 = vmax.f32 %v159, %v160
    %v162 = vrot.slane %v161, 1
    %v163 = vmax.f32 %v161, %v162
    %v164 = vmax.f32 %v102, %v116
    %v165 = vrot.slane %v164, 4
    %v166 = vmax.f32 %v164, %v165
    %v167 = vrot.slane %v166, 2
    %v168 = vmax.f32 %v166, %v167
    %v169 = vrot.slane %v168, 1
    %v170 = vmax.f32 %v168, %v169
    %v171 = vmax.f32 %v103, %v117
    %v172 = vrot.slane %v171, 4
    %v173 = vmax.f32 %v171, %v172
    %v174 = vrot.slane %v173, 2
    %v175 = vmax.f32 %v173, %v174
    %v176 = vrot.slane %v175, 1
    %v177 = vmax.f32 %v175, %v176
    %v178 = vmax.f32 %v104, %v118
    %v179 = vrot.slane %v178, 4
    %v180 = vmax.f32 %v178, %v179
    %v181 = vrot.slane %v180, 2
    %v182 = vmax.f32 %v180, %v181
    %v183 = vrot.slane %v182, 1
    %v184 = vmax.f32 %v182, %v183
    %v185 = vmax.f32 %v105, %v119
    %v186 = vrot.slane %v185, 4
    %v187 = vmax.f32 %v185, %v186
    %v188 = vrot.slane %v187, 2
    %v189 = vmax.f32 %v187, %v188
    %v190 = vrot.slane %v189, 1
    %v191 = vmax.f32 %v189, %v190
    %v192 = vmax.f32 %v106, %v120
    %v193 = vrot.slane %v192, 4
    %v194 = vmax.f32 %v192, %v193
    %v195 = vrot.slane %v194, 2
    %v196 = vmax.f32 %v194, %v195
    %v197 = vrot.slane %v196, 1
    %v198 = vmax.f32 %v196, %v197
    %v199 = vmax.f32 %v107, %v121
    %v200 = vrot.slane %v199, 4
    %v201 = vmax.f32 %v199, %v200
    %v202 = vrot.slane %v201, 2
    %v203 = vmax.f32 %v201, %v202
    %v204 = vrot.slane %v203, 1
    %v205 = vmax.f32 %v203, %v204
    %v206 = vmax.f32 %v108, %v122
    %v207 = vrot.slane %v206, 4
    %v208 = vmax.f32 %v206, %v207
    %v209 = vrot.slane %v208, 2
    %v210 = vmax.f32 %v208, %v209
    %v211 = vrot.slane %v210, 1
    %v212 = vmax.f32 %v210, %v211
    %v213 = vmax.f32 %v109, %v123
    %v214 = vrot.slane %v213, 4
    %v215 = vmax.f32 %v213, %v214
    %v216 = vrot.slane %v215, 2
    %v217 = vmax.f32 %v215, %v216
    %v218 = vrot.slane %v217, 1
    %v219 = vmax.f32 %v217, %v218
    %v220 = vmax.f32 %v110, %v124
    %v221 = vrot.slane %v220, 4
    %v222 = vmax.f32 %v220, %v221
    %v223 = vrot.slane %v222, 2
    %v224 = vmax.f32 %v222, %v223
    %v225 = vrot.slane %v224, 1
    %v226 = vmax.f32 %v224, %v225
    %v227 = vmax.f32 %v111, %v125
    %v228 = vrot.slane %v227, 4
    %v229 = vmax.f32 %v227, %v228
    %v230 = vrot.slane %v229, 2
    %v231 = vmax.f32 %v229, %v230
    %v232 = vrot.slane %v231, 1
    %v233 = vmax.f32 %v231, %v232
    %v234 = vmax.f32 %v112, %v126
    %v235 = vrot.slane %v234, 4
    %v236 = vmax.f32 %v234, %v235
    %v237 = vrot.slane %v236, 2
    %v238 = vmax.f32 %v236, %v237
    %v239 = vrot.slane %v238, 1
    %v240 = vmax.f32 %v238, %v239
    %v241 = vmax.f32 %v113, %v127
    %v242 = vrot.slane %v241, 4
    %v243 = vmax.f32 %v241, %v242
    %v244 = vrot.slane %v243, 2
    %v245 = vmax.f32 %v243, %v244
    %v246 = vrot.slane %v245, 1
    %v247 = vmax.f32 %v245, %v246
    %v248 = vmax.f32 %v114, %v128
    %v249 = vrot.slane %v248, 4
    %v250 = vmax.f32 %v248, %v249
    %v251 = vrot.slane %v250, 2
    %v252 = vmax.f32 %v250, %v251
    %v253 = vrot.slane %v252, 1
    %v254 = vmax.f32 %v252, %v253
    %v255 = vmax.f32 %v129, %v143
    %v256 = vrot.slane %v255, 4
    %v257 = vmax.f32 %v255, %v256
    %v258 = vrot.slane %v257, 2
    %v259 = vmax.f32 %v257, %v258
    %v260 = vrot.slane %v259, 1
    %v261 = vmax.f32 %v259, %v260
    %v262 = vmax.f32 %v130, %v144
    %v263 = vrot.slane %v262, 4
    %v264 = vmax.f32 %v262, %v263
    %v265 = vrot.slane %v264, 2
    %v266 = vmax.f32 %v264, %v265
    %v267 = vrot.slane %v266, 1
    %v268 = vmax.f32 %v266, %v267
    %v269 = vmax.f32 %v131, %v145
    %v270 = vrot.slane %v269, 4
    %v271 = vmax.f32 %v269, %v270
    %v272 = vrot.slane %v271, 2
    %v273 = vmax.f32 %v271, %v272
    %v274 = vrot.slane %v273, 1
    %v275 = vmax.f32 %v273, %v274
    %v276 = vmax.f32 %v132, %v146
    %v277 = vrot.slane %v276, 4
    %v278 = vmax.f32 %v276, %v277
    %v279 = vrot.slane %v278, 2
    %v280 = vmax.f32 %v278, %v279
    %v281 = vrot.slane %v280, 1
    %v282 = vmax.f32 %v280, %v281
    %v283 = vmax.f32 %v133, %v147
    %v284 = vrot.slane %v283, 4
    %v285 = vmax.f32 %v283, %v284
    %v286 = vrot.slane %v285, 2
    %v287 = vmax.f32 %v285, %v286
    %v288 = vrot.slane %v287, 1
    %v289 = vmax.f32 %v287, %v288
    %v290 = vmax.f32 %v134, %v148
    %v291 = vrot.slane %v290, 4
    %v292 = vmax.f32 %v290, %v291
    %v293 = vrot.slane %v292, 2
    %v294 = vmax.f32 %v292, %v293
    %v295 = vrot.slane %v294, 1
    %v296 = vmax.f32 %v294, %v295
    %v297 = vmax.f32 %v135, %v149
    %v298 = vrot.slane %v297, 4
    %v299 = vmax.f32 %v297, %v298
    %v300 = vrot.slane %v299, 2
    %v301 = vmax.f32 %v299, %v300
    %v302 = vrot.slane %v301, 1
    %v303 = vmax.f32 %v301, %v302
    %v304 = vmax.f32 %v136, %v150
    %v305 = vrot.slane %v304, 4
    %v306 = vmax.f32 %v304, %v305
    %v307 = vrot.slane %v306, 2
    %v308 = vmax.f32 %v306, %v307
    %v309 = vrot.slane %v308, 1
    %v310 = vmax.f32 %v308, %v309
    %v311 = vmax.f32 %v137, %v151
    %v312 = vrot.slane %v311, 4
    %v313 = vmax.f32 %v311, %v312
    %v314 = vrot.slane %v313, 2
    %v315 = vmax.f32 %v313, %v314
    %v316 = vrot.slane %v315, 1
    %v317 = vmax.f32 %v315, %v316
    %v318 = vmax.f32 %v138, %v152
    %v319 = vrot.slane %v318, 4
    %v320 = vmax.f32 %v318, %v319
    %v321 = vrot.slane %v320, 2
    %v322 = vmax.f32 %v320, %v321
    %v323 = vrot.slane %v322, 1
    %v324 = vmax.f32 %v322, %v323
    %v325 = vmax.f32 %v139, %v153
    %v326 = vrot.slane %v325, 4
    %v327 = vmax.f32 %v325, %v326
    %v328 = vrot.slane %v327, 2
    %v329 = vmax.f32 %v327, %v328
    %v330 = vrot.slane %v329, 1
    %v331 = vmax.f32 %v329, %v330
    %v332 = vmax.f32 %v140, %v154
    %v333 = vrot.slane %v332, 4
    %v334 = vmax.f32 %v332, %v333
    %v335 = vrot.slane %v334, 2
    %v336 = vmax.f32 %v334, %v335
    %v337 = vrot.slane %v336, 1
    %v338 = vmax.f32 %v336, %v337
    %v339 = vmax.f32 %v141, %v155
    %v340 = vrot.slane %v339, 4
    %v341 = vmax.f32 %v339, %v340
    %v342 = vrot.slane %v341, 2
    %v343 = vmax.f32 %v341, %v342
    %v344 = vrot.slane %v343, 1
    %v345 = vmax.f32 %v343, %v344
    %v346 = vmax.f32 %v142, %v156
    %v347 = vrot.slane %v346, 4
    %v348 = vmax.f32 %v346, %v347
    %v349 = vrot.slane %v348, 2
    %v350 = vmax.f32 %v348, %v349
    %v351 = vrot.slane %v350, 1
    %v352 = vmax.f32 %v350, %v351
    %v353 = vpack.c.bf16 %v163, %v163
    %v354 = vpack.c.bf16 %v170, %v170
    %v355 = vpack.c.bf16 %v177, %v177
    %v356 = vpack.c.bf16 %v184, %v184
    %v357 = vpack.c.bf16 %v191, %v191
    %v358 = vpack.c.bf16 %v198, %v198
    %v359 = vpack.c.bf16 %v205, %v205
    %v360 = vpack.c.bf16 %v212, %v212
    %v361 = vpack.c.bf16 %v219, %v219
    %v362 = vpack.c.bf16 %v226, %v226
    %v363 = vpack.c.bf16 %v233, %v233
    %v364 = vpack.c.bf16 %v240, %v240
    %v365 = vpack.c.bf16 %v247, %v247
    %v366 = vpack.c.bf16 %v254, %v254
    %v367 = vpack.c.bf16 %v261, %v261
    %v368 = vpack.c.bf16 %v268, %v268
    %v369 = vpack.c.bf16 %v275, %v275
    %v370 = vpack.c.bf16 %v282, %v282
    %v371 = vpack.c.bf16 %v289, %v289
    %v372 = vpack.c.bf16 %v296, %v296
    %v373 = vpack.c.bf16 %v303, %v303
    %v374 = vpack.c.bf16 %v310, %v310
    %v375 = vpack.c.bf16 %v317, %v317
    %v376 = vpack.c.bf16 %v324, %v324
    %v377 = vpack.c.bf16 %v331, %v331
    %v378 = vpack.c.bf16 %v338, %v338
    %v379 = vpack.c.bf16 %v345, %v345
    %v380 = vpack.c.bf16 %v352, %v352
    %v381 = vld [vmem:[#allocation2] sm:$0xff]
    %v382 = vld [vmem:[#allocation2 + $0x8] sm:$0xff]
    %v383 = vld [vmem:[#allocation2 + $0x10] sm:$0xff]
    %v384 = vld [vmem:[#allocation2 + $0x18] sm:$0xff]
    %v385 = vld [vmem:[#allocation2 + $0x20] sm:$0xff]
    %v386 = vld [vmem:[#allocation2 + $0x28] sm:$0xff]
    %v387 = vld [vmem:[#allocation2 + $0x30] sm:$0xff]
    %v388 = vld [vmem:[#allocation2 + $0x38] sm:$0xff]
    %v389 = vld [vmem:[#allocation2 + $0x40] sm:$0xff]
    %v390 = vld [vmem:[#allocation2 + $0x48] sm:$0xff]
    %v391 = vld [vmem:[#allocation2 + $0x50] sm:$0xff]
    %v392 = vld [vmem:[#allocation2 + $0x58] sm:$0xff]
    %v393 = vld [vmem:[#allocation2 + $0x60] sm:$0xff]
    %v394 = vld [vmem:[#allocation2 + $0x68] sm:$0xff]
    %v395 = vld [vmem:[#allocation2 + $0x70] sm:$0xff]
    %v396 = vld [vmem:[#allocation2 + $0x78] sm:$0xff]
    %v397 = vld [vmem:[#allocation2 + $0x80] sm:$0xff]
    %v398 = vld [vmem:[#allocation2 + $0x88] sm:$0xff]
    %v399 = vld [vmem:[#allocation2 + $0x90] sm:$0xff]
    %v400 = vld [vmem:[#allocation2 + $0x98] sm:$0xff]
    %v401 = vld [vmem:[#allocation2 + $0xa0] sm:$0xff]
    %v402 = vld [vmem:[#allocation2 + $0xa8] sm:$0xff]
    %v403 = vld [vmem:[#allocation2 + $0xb0] sm:$0xff]
    %v404 = vld [vmem:[#allocation2 + $0xb8] sm:$0xff]
    %v405 = vld [vmem:[#allocation2 + $0xc0] sm:$0xff]
    %v406 = vld [vmem:[#allocation2 + $0xc8] sm:$0xff]
    %v407 = vld [vmem:[#allocation2 + $0xd0] sm:$0xff]
    %v408 = vld [vmem:[#allocation2 + $0xd8] sm:$0xff]
    %v409 = vld [vmem:[#allocation2 + $0xe0] sm:$0xff]
    %v410 = vld [vmem:[#allocation2 + $0xe8] sm:$0xff]
    %v411 = vld [vmem:[#allocation2 + $0xf0] sm:$0xff]
    %v412 = vld [vmem:[#allocation2 + $0xf8] sm:$0xff]
    %v413 = vld [vmem:[#allocation2 + $0x100] sm:$0xff]
    %v414 = vld [vmem:[#allocation2 + $0x108] sm:$0xff]
    %v415 = vld [vmem:[#allocation2 + $0x110] sm:$0xff]
    %v416 = vld [vmem:[#allocation2 + $0x118] sm:$0xff]
    %v417 = vld [vmem:[#allocation2 + $0x120] sm:$0xff]
    %v418 = vld [vmem:[#allocation2 + $0x128] sm:$0xff]
    %v419 = vld [vmem:[#allocation2 + $0x130] sm:$0xff]
    %v420 = vld [vmem:[#allocation2 + $0x138] sm:$0xff]
    %v421 = vld [vmem:[#allocation2 + $0x140] sm:$0xff]
    %v422 = vld [vmem:[#allocation2 + $0x148] sm:$0xff]
    %v423 = vld [vmem:[#allocation2 + $0x150] sm:$0xff]
    %v424 = vld [vmem:[#allocation2 + $0x158] sm:$0xff]
    %v425 = vld [vmem:[#allocation2 + $0x160] sm:$0xff]
    %v426 = vld [vmem:[#allocation2 + $0x168] sm:$0xff]
    %v427 = vld [vmem:[#allocation2 + $0x170] sm:$0xff]
    %v428 = vld [vmem:[#allocation2 + $0x178] sm:$0xff]
    %v429 = vld [vmem:[#allocation2 + $0x180] sm:$0xff]
    %v430 = vld [vmem:[#allocation2 + $0x188] sm:$0xff]
    %v431 = vld [vmem:[#allocation2 + $0x190] sm:$0xff]
    %v432 = vld [vmem:[#allocation2 + $0x198] sm:$0xff]
    %v433 = vld [vmem:[#allocation2 + $0x1a0] sm:$0xff]
    %v434 = vld [vmem:[#allocation2 + $0x1a8] sm:$0xff]
    %v435 = vld [vmem:[#allocation2 + $0x1b0] sm:$0xff]
    %v436 = vld [vmem:[#allocation2 + $0x1b8] sm:$0xff]
    %v437 = vld [vmem:[#allocation2 + $0x1c0] sm:$0xff]
    %v438 = vld [vmem:[#allocation2 + $0x1c8] sm:$0xff]
    %v439 = vld [vmem:[#allocation2 + $0x1d0] sm:$0xff]
    %v440 = vld [vmem:[#allocation2 + $0x1d8] sm:$0xff]
    %v441 = vld [vmem:[#allocation2 + $0x1e0] sm:$0xff]
    %v442 = vld [vmem:[#allocation2 + $0x1e8] sm:$0xff]
    %v443 = vld [vmem:[#allocation2 + $0x1f0] sm:$0xff]
    %v444 = vld [vmem:[#allocation2 + $0x1f8] sm:$0xff]
    %v445 = vld [vmem:[#allocation2 + $0x200] sm:$0xff]
    %v446 = vld [vmem:[#allocation2 + $0x208] sm:$0xff]
    %v447 = vld [vmem:[#allocation2 + $0x210] sm:$0xff]
    %v448 = vld [vmem:[#allocation2 + $0x218] sm:$0xff]
    %v449 = vld [vmem:[#allocation2 + $0x220] sm:$0xff]
    %v450 = vld [vmem:[#allocation2 + $0x228] sm:$0xff]
    %v451 = vld [vmem:[#allocation2 + $0x230] sm:$0xff]
    %v452 = vld [vmem:[#allocation2 + $0x238] sm:$0xff]
    %v453 = vld [vmem:[#allocation2 + $0x240] sm:$0xff]
    %v454 = vld [vmem:[#allocation2 + $0x248] sm:$0xff]
    %v455 = vld [vmem:[#allocation2 + $0x250] sm:$0xff]
    %v456 = vld [vmem:[#allocation2 + $0x258] sm:$0xff]
    %v457 = vld [vmem:[#allocation2 + $0x260] sm:$0xff]
    %v458 = vld [vmem:[#allocation2 + $0x268] sm:$0xff]
    %v459 = vld [vmem:[#allocation2 + $0x270] sm:$0xff]
    %v460 = vld [vmem:[#allocation2 + $0x278] sm:$0xff]
    %v461 = vld [vmem:[#allocation2 + $0x280] sm:$0xff]
    %v462 = vld [vmem:[#allocation2 + $0x288] sm:$0xff]
    %v463 = vld [vmem:[#allocation2 + $0x290] sm:$0xff]
    %v464 = vld [vmem:[#allocation2 + $0x298] sm:$0xff]
    %v465 = vld [vmem:[#allocation2 + $0x2a0] sm:$0xff]
    %v466 = vld [vmem:[#allocation2 + $0x2a8] sm:$0xff]
    %v467 = vld [vmem:[#allocation2 + $0x2b0] sm:$0xff]
    %v468 = vld [vmem:[#allocation2 + $0x2b8] sm:$0xff]
    %v469 = vld [vmem:[#allocation2 + $0x2c0] sm:$0xff]
    %v470 = vld [vmem:[#allocation2 + $0x2c8] sm:$0xff]
    %v471 = vld [vmem:[#allocation2 + $0x2d0] sm:$0xff]
    %v472 = vld [vmem:[#allocation2 + $0x2d8] sm:$0xff]
    %v473 = vld [vmem:[#allocation2 + $0x2e0] sm:$0xff]
    %v474 = vld [vmem:[#allocation2 + $0x2e8] sm:$0xff]
    %v475 = vld [vmem:[#allocation2 + $0x2f0] sm:$0xff]
    %v476 = vld [vmem:[#allocation2 + $0x2f8] sm:$0xff]
    %v477 = vld [vmem:[#allocation2 + $0x300] sm:$0xff]
    %v478 = vld [vmem:[#allocation2 + $0x308] sm:$0xff]
    %v479 = vld [vmem:[#allocation2 + $0x310] sm:$0xff]
    %v480 = vld [vmem:[#allocation2 + $0x318] sm:$0xff]
    %v481 = vld [vmem:[#allocation2 + $0x320] sm:$0xff]
    %v482 = vld [vmem:[#allocation2 + $0x328] sm:$0xff]
    %v483 = vld [vmem:[#allocation2 + $0x330] sm:$0xff]
    %v484 = vld [vmem:[#allocation2 + $0x338] sm:$0xff]
    %v485 = vld [vmem:[#allocation2 + $0x340] sm:$0xff]
    %v486 = vld [vmem:[#allocation2 + $0x348] sm:$0xff]
    %v487 = vld [vmem:[#allocation2 + $0x350] sm:$0xff]
    %v488 = vld [vmem:[#allocation2 + $0x358] sm:$0xff]
    %v489 = vld [vmem:[#allocation2 + $0x360] sm:$0xff]
    %v490 = vld [vmem:[#allocation2 + $0x368] sm:$0xff]
    %v491 = vld [vmem:[#allocation2 + $0x370] sm:$0xff]
    %v492 = vld [vmem:[#allocation2 + $0x378] sm:$0xff]
    %v493 = vld [vmem:[#allocation2 + $0x380] sm:$0xff]
    %v494 = vld [vmem:[#allocation2 + $0x388] sm:$0xff]
    %v495 = vld [vmem:[#allocation2 + $0x390] sm:$0xff]
    %v496 = vld [vmem:[#allocation2 + $0x398] sm:$0xff]
    %v497 = vld [vmem:[#allocation2 + $0x3a0] sm:$0xff]
    %v498 = vld [vmem:[#allocation2 + $0x3a8] sm:$0xff]
    %v499 = vld [vmem:[#allocation2 + $0x3b0] sm:$0xff]
    %v500 = vld [vmem:[#allocation2 + $0x3b8] sm:$0xff]
    %v501 = vld [vmem:[#allocation2 + $0x3c0] sm:$0xff]
    %v502 = vld [vmem:[#allocation2 + $0x3c8] sm:$0xff]
    %v503 = vld [vmem:[#allocation2 + $0x3d0] sm:$0xff]
    %v504 = vld [vmem:[#allocation2 + $0x3d8] sm:$0xff]
    %v505 = vld [vmem:[#allocation2 + $0x3e0] sm:$0xff]
    %v506 = vld [vmem:[#allocation2 + $0x3e8] sm:$0xff]
    %v507 = vld [vmem:[#allocation2 + $0x3f0] sm:$0xff]
    %v508 = vld [vmem:[#allocation2 + $0x3f8] sm:$0xff]
    %v509 = vld [vmem:[#allocation2 + $0x400] sm:$0xff]
    %v510 = vld [vmem:[#allocation2 + $0x408] sm:$0xff]
    %v511 = vld [vmem:[#allocation2 + $0x410] sm:$0xff]
    %v512 = vld [vmem:[#allocation2 + $0x418] sm:$0xff]
    %v513 = vld [vmem:[#allocation2 + $0x420] sm:$0xff]
    %v514 = vld [vmem:[#allocation2 + $0x428] sm:$0xff]
    %v515 = vld [vmem:[#allocation2 + $0x430] sm:$0xff]
    %v516 = vld [vmem:[#allocation2 + $0x438] sm:$0xff]
    %v517 = vld [vmem:[#allocation2 + $0x440] sm:$0xff]
    %v518 = vld [vmem:[#allocation2 + $0x448] sm:$0xff]
    %v519 = vld [vmem:[#allocation2 + $0x450] sm:$0xff]
    %v520 = vld [vmem:[#allocation2 + $0x458] sm:$0xff]
    %v521 = vld [vmem:[#allocation2 + $0x460] sm:$0xff]
    %v522 = vld [vmem:[#allocation2 + $0x468] sm:$0xff]
    %v523 = vld [vmem:[#allocation2 + $0x470] sm:$0xff]
    %v524 = vld [vmem:[#allocation2 + $0x478] sm:$0xff]
    %v525 = vld [vmem:[#allocation2 + $0x480] sm:$0xff]
    %v526 = vld [vmem:[#allocation2 + $0x488] sm:$0xff]
    %v527 = vld [vmem:[#allocation2 + $0x490] sm:$0xff]
    %v528 = vld [vmem:[#allocation2 + $0x498] sm:$0xff]
    %v529 = vld [vmem:[#allocation2 + $0x4a0] sm:$0xff]
    %v530 = vld [vmem:[#allocation2 + $0x4a8] sm:$0xff]
    %v531 = vld [vmem:[#allocation2 + $0x4b0] sm:$0xff]
    %v532 = vld [vmem:[#allocation2 + $0x4b8] sm:$0xff]
    %v533 = vld [vmem:[#allocation2 + $0x4c0] sm:$0xff]
    %v534 = vld [vmem:[#allocation2 + $0x4c8] sm:$0xff]
    %v535 = vld [vmem:[#allocation2 + $0x4d0] sm:$0xff]
    %v536 = vld [vmem:[#allocation2 + $0x4d8] sm:$0xff]
    %v537 = vld [vmem:[#allocation2 + $0x4e0] sm:$0xff]
    %v538 = vld [vmem:[#allocation2 + $0x4e8] sm:$0xff]
    %v539 = vld [vmem:[#allocation2 + $0x4f0] sm:$0xff]
    %v540 = vld [vmem:[#allocation2 + $0x4f8] sm:$0xff]
    %v541 = vld [vmem:[#allocation2 + $0x500] sm:$0xff]
    %v542 = vld [vmem:[#allocation2 + $0x508] sm:$0xff]
    %v543 = vld [vmem:[#allocation2 + $0x510] sm:$0xff]
    %v544 = vld [vmem:[#allocation2 + $0x518] sm:$0xff]
    %v545 = vld [vmem:[#allocation2 + $0x520] sm:$0xff]
    %v546 = vld [vmem:[#allocation2 + $0x528] sm:$0xff]
    %v547 = vld [vmem:[#allocation2 + $0x530] sm:$0xff]
    %v548 = vld [vmem:[#allocation2 + $0x538] sm:$0xff]
    %v549 = vld [vmem:[#allocation2 + $0x540] sm:$0xff]
    %v550 = vld [vmem:[#allocation2 + $0x548] sm:$0xff]
    %v551 = vld [vmem:[#allocation2 + $0x550] sm:$0xff]
    %v552 = vld [vmem:[#allocation2 + $0x558] sm:$0xff]
    %v553 = vld [vmem:[#allocation2 + $0x560] sm:$0xff]
    %v554 = vld [vmem:[#allocation2 + $0x568] sm:$0xff]
    %v555 = vld [vmem:[#allocation2 + $0x570] sm:$0xff]
    %v556 = vld [vmem:[#allocation2 + $0x578] sm:$0xff]
    %v557 = vld [vmem:[#allocation2 + $0x580] sm:$0xff]
    %v558 = vld [vmem:[#allocation2 + $0x588] sm:$0xff]
    %v559 = vld [vmem:[#allocation2 + $0x590] sm:$0xff]
    %v560 = vld [vmem:[#allocation2 + $0x598] sm:$0xff]
    %v561 = vld [vmem:[#allocation2 + $0x5a0] sm:$0xff]
    %v562 = vld [vmem:[#allocation2 + $0x5a8] sm:$0xff]
    %v563 = vld [vmem:[#allocation2 + $0x5b0] sm:$0xff]
    %v564 = vld [vmem:[#allocation2 + $0x5b8] sm:$0xff]
    %v565 = vld [vmem:[#allocation2 + $0x5c0] sm:$0xff]
    %v566 = vld [vmem:[#allocation2 + $0x5c8] sm:$0xff]
    %v567 = vld [vmem:[#allocation2 + $0x5d0] sm:$0xff]
    %v568 = vld [vmem:[#allocation2 + $0x5d8] sm:$0xff]
    %v569 = vld [vmem:[#allocation2 + $0x5e0] sm:$0xff]
    %v570 = vld [vmem:[#allocation2 + $0x5e8] sm:$0xff]
    %v571 = vld [vmem:[#allocation2 + $0x5f0] sm:$0xff]
    %v572 = vld [vmem:[#allocation2 + $0x5f8] sm:$0xff]
    %v573 = vld [vmem:[#allocation2 + $0x600] sm:$0xff]
    %v574 = vld [vmem:[#allocation2 + $0x608] sm:$0xff]
    %v575 = vld [vmem:[#allocation2 + $0x610] sm:$0xff]
    %v576 = vld [vmem:[#allocation2 + $0x618] sm:$0xff]
    %v577 = vld [vmem:[#allocation2 + $0x620] sm:$0xff]
    %v578 = vld [vmem:[#allocation2 + $0x628] sm:$0xff]
    %v579 = vld [vmem:[#allocation2 + $0x630] sm:$0xff]
    %v580 = vld [vmem:[#allocation2 + $0x638] sm:$0xff]
    %v581 = vld [vmem:[#allocation2 + $0x640] sm:$0xff]
    %v582 = vld [vmem:[#allocation2 + $0x648] sm:$0xff]
    %v583 = vld [vmem:[#allocation2 + $0x650] sm:$0xff]
    %v584 = vld [vmem:[#allocation2 + $0x658] sm:$0xff]
    %v585 = vld [vmem:[#allocation2 + $0x660] sm:$0xff]
    %v586 = vld [vmem:[#allocation2 + $0x668] sm:$0xff]
    %v587 = vld [vmem:[#allocation2 + $0x670] sm:$0xff]
    %v588 = vld [vmem:[#allocation2 + $0x678] sm:$0xff]
    %v589 = vld [vmem:[#allocation2 + $0x680] sm:$0xff]
    %v590 = vld [vmem:[#allocation2 + $0x688] sm:$0xff]
    %v591 = vld [vmem:[#allocation2 + $0x690] sm:$0xff]
    %v592 = vld [vmem:[#allocation2 + $0x698] sm:$0xff]
    %v593 = vld [vmem:[#allocation2 + $0x6a0] sm:$0xff]
    %v594 = vld [vmem:[#allocation2 + $0x6a8] sm:$0xff]
    %v595 = vld [vmem:[#allocation2 + $0x6b0] sm:$0xff]
    %v596 = vld [vmem:[#allocation2 + $0x6b8] sm:$0xff]
    %v597 = vld [vmem:[#allocation2 + $0x6c0] sm:$0xff]
    %v598 = vld [vmem:[#allocation2 + $0x6c8] sm:$0xff]
    %v599 = vld [vmem:[#allocation2 + $0x6d0] sm:$0xff]
    %v600 = vld [vmem:[#allocation2 + $0x6d8] sm:$0xff]
    %v601 = vld [vmem:[#allocation2 + $0x6e0] sm:$0xff]
    %v602 = vld [vmem:[#allocation2 + $0x6e8] sm:$0xff]
    %v603 = vld [vmem:[#allocation2 + $0x6f0] sm:$0xff]
    %v604 = vld [vmem:[#allocation2 + $0x6f8] sm:$0xff]
    %v605 = vld [vmem:[#allocation2 + $0x700] sm:$0xff]
    %v606 = vld [vmem:[#allocation2 + $0x708] sm:$0xff]
    %v607 = vld [vmem:[#allocation2 + $0x710] sm:$0xff]
    %v608 = vld [vmem:[#allocation2 + $0x718] sm:$0xff]
    %v609 = vld [vmem:[#allocation2 + $0x720] sm:$0xff]
    %v610 = vld [vmem:[#allocation2 + $0x728] sm:$0xff]
    %v611 = vld [vmem:[#allocation2 + $0x730] sm:$0xff]
    %v612 = vld [vmem:[#allocation2 + $0x738] sm:$0xff]
    %v613 = vld [vmem:[#allocation2 + $0x740] sm:$0xff]
    %v614 = vld [vmem:[#allocation2 + $0x748] sm:$0xff]
    %v615 = vld [vmem:[#allocation2 + $0x750] sm:$0xff]
    %v616 = vld [vmem:[#allocation2 + $0x758] sm:$0xff]
    %v617 = vld [vmem:[#allocation2 + $0x760] sm:$0xff]
    %v618 = vld [vmem:[#allocation2 + $0x768] sm:$0xff]
    %v619 = vld [vmem:[#allocation2 + $0x770] sm:$0xff]
    %v620 = vld [vmem:[#allocation2 + $0x778] sm:$0xff]
    %v621 = vld [vmem:[#allocation2 + $0x780] sm:$0xff]
    %v622 = vld [vmem:[#allocation2 + $0x788] sm:$0xff]
    %v623 = vld [vmem:[#allocation2 + $0x790] sm:$0xff]
    %v624 = vld [vmem:[#allocation2 + $0x798] sm:$0xff]
    %v625 = vld [vmem:[#allocation2 + $0x7a0] sm:$0xff]
    %v626 = vld [vmem:[#allocation2 + $0x7a8] sm:$0xff]
    %v627 = vld [vmem:[#allocation2 + $0x7b0] sm:$0xff]
    %v628 = vld [vmem:[#allocation2 + $0x7b8] sm:$0xff]
    %v629 = vld [vmem:[#allocation2 + $0x7c0] sm:$0xff]
    %v630 = vld [vmem:[#allocation2 + $0x7c8] sm:$0xff]
    %v631 = vld [vmem:[#allocation2 + $0x7d0] sm:$0xff]
    %v632 = vld [vmem:[#allocation2 + $0x7d8] sm:$0xff]
    %v633 = vld [vmem:[#allocation2 + $0x7e0] sm:$0xff]
    %v634 = vld [vmem:[#allocation2 + $0x7e8] sm:$0xff]
    %v635 = vld [vmem:[#allocation2 + $0x7f0] sm:$0xff]
    %v636 = vld [vmem:[#allocation2 + $0x7f8] sm:$0xff]
    %v637 = vld [vmem:[#allocation2 + $0x800] sm:$0xff]
    %v638 = vld [vmem:[#allocation2 + $0x808] sm:$0xff]
    %v639 = vld [vmem:[#allocation2 + $0x810] sm:$0xff]
    %v640 = vld [vmem:[#allocation2 + $0x818] sm:$0xff]
    %v641 = vld [vmem:[#allocation2 + $0x820] sm:$0xff]
    %v642 = vld [vmem:[#allocation2 + $0x828] sm:$0xff]
    %v643 = vld [vmem:[#allocation2 + $0x830] sm:$0xff]
    %v644 = vld [vmem:[#allocation2 + $0x838] sm:$0xff]
    %v645 = vld [vmem:[#allocation2 + $0x840] sm:$0xff]
    %v646 = vld [vmem:[#allocation2 + $0x848] sm:$0xff]
    %v647 = vld [vmem:[#allocation2 + $0x850] sm:$0xff]
    %v648 = vld [vmem:[#allocation2 + $0x858] sm:$0xff]
    %v649 = vld [vmem:[#allocation2 + $0x860] sm:$0xff]
    %v650 = vld [vmem:[#allocation2 + $0x868] sm:$0xff]
    %v651 = vld [vmem:[#allocation2 + $0x870] sm:$0xff]
    %v652 = vld [vmem:[#allocation2 + $0x878] sm:$0xff]
    %v653 = vld [vmem:[#allocation2 + $0x880] sm:$0xff]
    %v654 = vld [vmem:[#allocation2 + $0x888] sm:$0xff]
    %v655 = vld [vmem:[#allocation2 + $0x890] sm:$0xff]
    %v656 = vld [vmem:[#allocation2 + $0x898] sm:$0xff]
    %v657 = vld [vmem:[#allocation2 + $0x8a0] sm:$0xff]
    %v658 = vld [vmem:[#allocation2 + $0x8a8] sm:$0xff]
    %v659 = vld [vmem:[#allocation2 + $0x8b0] sm:$0xff]
    %v660 = vld [vmem:[#allocation2 + $0x8b8] sm:$0xff]
    %v661 = vld [vmem:[#allocation2 + $0x8c0] sm:$0xff]
    %v662 = vld [vmem:[#allocation2 + $0x8c8] sm:$0xff]
    %v663 = vld [vmem:[#allocation2 + $0x8d0] sm:$0xff]
    %v664 = vld [vmem:[#allocation2 + $0x8d8] sm:$0xff]
    %v665 = vld [vmem:[#allocation2 + $0x8e0] sm:$0xff]
    %v666 = vld [vmem:[#allocation2 + $0x8e8] sm:$0xff]
    %v667 = vld [vmem:[#allocation2 + $0x8f0] sm:$0xff]
    %v668 = vld [vmem:[#allocation2 + $0x8f8] sm:$0xff]
    %v669 = vld [vmem:[#allocation2 + $0x900] sm:$0xff]
    %v670 = vld [vmem:[#allocation2 + $0x908] sm:$0xff]
    %v671 = vld [vmem:[#allocation2 + $0x910] sm:$0xff]
    %v672 = vld [vmem:[#allocation2 + $0x918] sm:$0xff]
    %v673 = vld [vmem:[#allocation2 + $0x920] sm:$0xff]
    %v674 = vld [vmem:[#allocation2 + $0x928] sm:$0xff]
    %v675 = vld [vmem:[#allocation2 + $0x930] sm:$0xff]
    %v676 = vld [vmem:[#allocation2 + $0x938] sm:$0xff]
    %v677 = vld [vmem:[#allocation2 + $0x940] sm:$0xff]
    %v678 = vld [vmem:[#allocation2 + $0x948] sm:$0xff]
    %v679 = vld [vmem:[#allocation2 + $0x950] sm:$0xff]
    %v680 = vld [vmem:[#allocation2 + $0x958] sm:$0xff]
    %v681 = vld [vmem:[#allocation2 + $0x960] sm:$0xff]
    %v682 = vld [vmem:[#allocation2 + $0x968] sm:$0xff]
    %v683 = vld [vmem:[#allocation2 + $0x970] sm:$0xff]
    %v684 = vld [vmem:[#allocation2 + $0x978] sm:$0xff]
    %v685 = vld [vmem:[#allocation2 + $0x980] sm:$0xff]
    %v686 = vld [vmem:[#allocation2 + $0x988] sm:$0xff]
    %v687 = vld [vmem:[#allocation2 + $0x990] sm:$0xff]
    %v688 = vld [vmem:[#allocation2 + $0x998] sm:$0xff]
    %v689 = vld [vmem:[#allocation2 + $0x9a0] sm:$0xff]
    %v690 = vld [vmem:[#allocation2 + $0x9a8] sm:$0xff]
    %v691 = vld [vmem:[#allocation2 + $0x9b0] sm:$0xff]
    %v692 = vld [vmem:[#allocation2 + $0x9b8] sm:$0xff]
    %v693 = vld [vmem:[#allocation2 + $0x9c0] sm:$0xff]
    %v694 = vld [vmem:[#allocation2 + $0x9c8] sm:$0xff]
    %v695 = vld [vmem:[#allocation2 + $0x9d0] sm:$0xff]
    %v696 = vld [vmem:[#allocation2 + $0x9d8] sm:$0xff]
    %v697 = vld [vmem:[#allocation2 + $0x9e0] sm:$0xff]
    %v698 = vld [vmem:[#allocation2 + $0x9e8] sm:$0xff]
    %v699 = vld [vmem:[#allocation2 + $0x9f0] sm:$0xff]
    %v700 = vld [vmem:[#allocation2 + $0x9f8] sm:$0xff]
    %v701 = vld [vmem:[#allocation2 + $0xa00] sm:$0xff]
    %v702 = vld [vmem:[#allocation2 + $0xa08] sm:$0xff]
    %v703 = vld [vmem:[#allocation2 + $0xa10] sm:$0xff]
    %v704 = vld [vmem:[#allocation2 + $0xa18] sm:$0xff]
    %v705 = vld [vmem:[#allocation2 + $0xa20] sm:$0xff]
    %v706 = vld [vmem:[#allocation2 + $0xa28] sm:$0xff]
    %v707 = vld [vmem:[#allocation2 + $0xa30] sm:$0xff]
    %v708 = vld [vmem:[#allocation2 + $0xa38] sm:$0xff]
    %v709 = vld [vmem:[#allocation2 + $0xa40] sm:$0xff]
    %v710 = vld [vmem:[#allocation2 + $0xa48] sm:$0xff]
    %v711 = vld [vmem:[#allocation2 + $0xa50] sm:$0xff]
    %v712 = vld [vmem:[#allocation2 + $0xa58] sm:$0xff]
    %v713 = vld [vmem:[#allocation2 + $0xa60] sm:$0xff]
    %v714 = vld [vmem:[#allocation2 + $0xa68] sm:$0xff]
    %v715 = vld [vmem:[#allocation2 + $0xa70] sm:$0xff]
    %v716 = vld [vmem:[#allocation2 + $0xa78] sm:$0xff]
    %v717 = vld [vmem:[#allocation2 + $0xa80] sm:$0xff]
    %v718 = vld [vmem:[#allocation2 + $0xa88] sm:$0xff]
    %v719 = vld [vmem:[#allocation2 + $0xa90] sm:$0xff]
    %v720 = vld [vmem:[#allocation2 + $0xa98] sm:$0xff]
    %v721 = vld [vmem:[#allocation2 + $0xaa0] sm:$0xff]
    %v722 = vld [vmem:[#allocation2 + $0xaa8] sm:$0xff]
    %v723 = vld [vmem:[#allocation2 + $0xab0] sm:$0xff]
    %v724 = vld [vmem:[#allocation2 + $0xab8] sm:$0xff]
    %v725 = vld [vmem:[#allocation2 + $0xac0] sm:$0xff]
    %v726 = vld [vmem:[#allocation2 + $0xac8] sm:$0xff]
    %v727 = vld [vmem:[#allocation2 + $0xad0] sm:$0xff]
    %v728 = vld [vmem:[#allocation2 + $0xad8] sm:$0xff]
    %v729 = vld [vmem:[#allocation2 + $0xae0] sm:$0xff]
    %v730 = vld [vmem:[#allocation2 + $0xae8] sm:$0xff]
    %v731 = vld [vmem:[#allocation2 + $0xaf0] sm:$0xff]
    %v732 = vld [vmem:[#allocation2 + $0xaf8] sm:$0xff]
    %v733 = vld [vmem:[#allocation2 + $0xb00] sm:$0xff]
    %v734 = vld [vmem:[#allocation2 + $0xb08] sm:$0xff]
    %v735 = vld [vmem:[#allocation2 + $0xb10] sm:$0xff]
    %v736 = vld [vmem:[#allocation2 + $0xb18] sm:$0xff]
    %v737 = vld [vmem:[#allocation2 + $0xb20] sm:$0xff]
    %v738 = vld [vmem:[#allocation2 + $0xb28] sm:$0xff]
    %v739 = vld [vmem:[#allocation2 + $0xb30] sm:$0xff]
    %v740 = vld [vmem:[#allocation2 + $0xb38] sm:$0xff]
    %v741 = vld [vmem:[#allocation2 + $0xb40] sm:$0xff]
    %v742 = vld [vmem:[#allocation2 + $0xb48] sm:$0xff]
    %v743 = vld [vmem:[#allocation2 + $0xb50] sm:$0xff]
    %v744 = vld [vmem:[#allocation2 + $0xb58] sm:$0xff]
    %v745 = vld [vmem:[#allocation2 + $0xb60] sm:$0xff]
    %v746 = vld [vmem:[#allocation2 + $0xb68] sm:$0xff]
    %v747 = vld [vmem:[#allocation2 + $0xb70] sm:$0xff]
    %v748 = vld [vmem:[#allocation2 + $0xb78] sm:$0xff]
    %v749 = vld [vmem:[#allocation2 + $0xb80] sm:$0xff]
    %v750 = vld [vmem:[#allocation2 + $0xb88] sm:$0xff]
    %v751 = vld [vmem:[#allocation2 + $0xb90] sm:$0xff]
    %v752 = vld [vmem:[#allocation2 + $0xb98] sm:$0xff]
    %v753 = vld [vmem:[#allocation2 + $0xba0] sm:$0xff]
    %v754 = vld [vmem:[#allocation2 + $0xba8] sm:$0xff]
    %v755 = vld [vmem:[#allocation2 + $0xbb0] sm:$0xff]
    %v756 = vld [vmem:[#allocation2 + $0xbb8] sm:$0xff]
    %v757 = vld [vmem:[#allocation2 + $0xbc0] sm:$0xff]
    %v758 = vld [vmem:[#allocation2 + $0xbc8] sm:$0xff]
    %v759 = vld [vmem:[#allocation2 + $0xbd0] sm:$0xff]
    %v760 = vld [vmem:[#allocation2 + $0xbd8] sm:$0xff]
    %v761 = vld [vmem:[#allocation2 + $0xbe0] sm:$0xff]
    %v762 = vld [vmem:[#allocation2 + $0xbe8] sm:$0xff]
    %v763 = vld [vmem:[#allocation2 + $0xbf0] sm:$0xff]
    %v764 = vld [vmem:[#allocation2 + $0xbf8] sm:$0xff]
    %v765 = vld [vmem:[#allocation2 + $0xc00] sm:$0xff]
    %v766 = vld [vmem:[#allocation2 + $0xc08] sm:$0xff]
    %v767 = vld [vmem:[#allocation2 + $0xc10] sm:$0xff]
    %v768 = vld [vmem:[#allocation2 + $0xc18] sm:$0xff]
    %v769 = vld [vmem:[#allocation2 + $0xc20] sm:$0xff]
    %v770 = vld [vmem:[#allocation2 + $0xc28] sm:$0xff]
    %v771 = vld [vmem:[#allocation2 + $0xc30] sm:$0xff]
    %v772 = vld [vmem:[#allocation2 + $0xc38] sm:$0xff]
    %v773 = vld [vmem:[#allocation2 + $0xc40] sm:$0xff]
    %v774 = vld [vmem:[#allocation2 + $0xc48] sm:$0xff]
    %v775 = vld [vmem:[#allocation2 + $0xc50] sm:$0xff]
    %v776 = vld [vmem:[#allocation2 + $0xc58] sm:$0xff]
    %v777 = vld [vmem:[#allocation2 + $0xc60] sm:$0xff]
    %v778 = vld [vmem:[#allocation2 + $0xc68] sm:$0xff]
    %v779 = vld [vmem:[#allocation2 + $0xc70] sm:$0xff]
    %v780 = vld [vmem:[#allocation2 + $0xc78] sm:$0xff]
    %v781 = vld [vmem:[#allocation2 + $0xc80] sm:$0xff]
    %v782 = vld [vmem:[#allocation2 + $0xc88] sm:$0xff]
    %v783 = vld [vmem:[#allocation2 + $0xc90] sm:$0xff]
    %v784 = vld [vmem:[#allocation2 + $0xc98] sm:$0xff]
    %v785 = vld [vmem:[#allocation2 + $0xca0] sm:$0xff]
    %v786 = vld [vmem:[#allocation2 + $0xca8] sm:$0xff]
    %v787 = vld [vmem:[#allocation2 + $0xcb0] sm:$0xff]
    %v788 = vld [vmem:[#allocation2 + $0xcb8] sm:$0xff]
    %v789 = vld [vmem:[#allocation2 + $0xcc0] sm:$0xff]
    %v790 = vld [vmem:[#allocation2 + $0xcc8] sm:$0xff]
    %v791 = vld [vmem:[#allocation2 + $0xcd0] sm:$0xff]
    %v792 = vld [vmem:[#allocation2 + $0xcd8] sm:$0xff]
    %v793 = vld [vmem:[#allocation2 + $0xce0] sm:$0xff]
    %v794 = vld [vmem:[#allocation2 + $0xce8] sm:$0xff]
    %v795 = vld [vmem:[#allocation2 + $0xcf0] sm:$0xff]
    %v796 = vld [vmem:[#allocation2 + $0xcf8] sm:$0xff]
    %v797 = vld [vmem:[#allocation2 + $0xd00] sm:$0xff]
    %v798 = vld [vmem:[#allocation2 + $0xd08] sm:$0xff]
    %v799 = vld [vmem:[#allocation2 + $0xd10] sm:$0xff]
    %v800 = vld [vmem:[#allocation2 + $0xd18] sm:$0xff]
    %v801 = vld [vmem:[#allocation2 + $0xd20] sm:$0xff]
    %v802 = vld [vmem:[#allocation2 + $0xd28] sm:$0xff]
    %v803 = vld [vmem:[#allocation2 + $0xd30] sm:$0xff]
    %v804 = vld [vmem:[#allocation2 + $0xd38] sm:$0xff]
    %v805 = vld [vmem:[#allocation2 + $0xd40] sm:$0xff]
    %v806 = vld [vmem:[#allocation2 + $0xd48] sm:$0xff]
    %v807 = vld [vmem:[#allocation2 + $0xd50] sm:$0xff]
    %v808 = vld [vmem:[#allocation2 + $0xd58] sm:$0xff]
    %v809 = vld [vmem:[#allocation2 + $0xd60] sm:$0xff]
    %v810 = vld [vmem:[#allocation2 + $0xd68] sm:$0xff]
    %v811 = vld [vmem:[#allocation2 + $0xd70] sm:$0xff]
    %v812 = vld [vmem:[#allocation2 + $0xd78] sm:$0xff]
    %v813 = vld [vmem:[#allocation2 + $0xd80] sm:$0xff]
    %v814 = vld [vmem:[#allocation2 + $0xd88] sm:$0xff]
    %v815 = vld [vmem:[#allocation2 + $0xd90] sm:$0xff]
    %v816 = vld [vmem:[#allocation2 + $0xd98] sm:$0xff]
    %v817 = vld [vmem:[#allocation2 + $0xda0] sm:$0xff]
    %v818 = vld [vmem:[#allocation2 + $0xda8] sm:$0xff]
    %v819 = vld [vmem:[#allocation2 + $0xdb0] sm:$0xff]
    %v820 = vld [vmem:[#allocation2 + $0xdb8] sm:$0xff]
    %v821 = vld [vmem:[#allocation2 + $0xdc0] sm:$0xff]
    %v822 = vld [vmem:[#allocation2 + $0xdc8] sm:$0xff]
    %v823 = vld [vmem:[#allocation2 + $0xdd0] sm:$0xff]
    %v824 = vld [vmem:[#allocation2 + $0xdd8] sm:$0xff]
    %v825 = vld [vmem:[#allocation2 + $0xde0] sm:$0xff]
    %v826 = vld [vmem:[#allocation2 + $0xde8] sm:$0xff]
    %v827 = vld [vmem:[#allocation2 + $0xdf0] sm:$0xff]
    %v828 = vld [vmem:[#allocation2 + $0xdf8] sm:$0xff]
    %v829 = vld [vmem:[#allocation2 + $0xe00] sm:$0xff]
    %v830 = vld [vmem:[#allocation2 + $0xe08] sm:$0xff]
    %v831 = vld [vmem:[#allocation2 + $0xe10] sm:$0xff]
    %v832 = vld [vmem:[#allocation2 + $0xe18] sm:$0xff]
    %v833 = vld [vmem:[#allocation2 + $0xe20] sm:$0xff]
    %v834 = vld [vmem:[#allocation2 + $0xe28] sm:$0xff]
    %v835 = vld [vmem:[#allocation2 + $0xe30] sm:$0xff]
    %v836 = vld [vmem:[#allocation2 + $0xe38] sm:$0xff]
    %v837 = vld [vmem:[#allocation2 + $0xe40] sm:$0xff]
    %v838 = vld [vmem:[#allocation2 + $0xe48] sm:$0xff]
    %v839 = vld [vmem:[#allocation2 + $0xe50] sm:$0xff]
    %v840 = vld [vmem:[#allocation2 + $0xe58] sm:$0xff]
    %v841 = vld [vmem:[#allocation2 + $0xe60] sm:$0xff]
    %v842 = vld [vmem:[#allocation2 + $0xe68] sm:$0xff]
    %v843 = vld [vmem:[#allocation2 + $0xe70] sm:$0xff]
    %v844 = vld [vmem:[#allocation2 + $0xe78] sm:$0xff]
    %v845 = vld [vmem:[#allocation2 + $0xe80] sm:$0xff]
    %v846 = vld [vmem:[#allocation2 + $0xe88] sm:$0xff]
    %v847 = vld [vmem:[#allocation2 + $0xe90] sm:$0xff]
    %v848 = vld [vmem:[#allocation2 + $0xe98] sm:$0xff]
    %v849 = vld [vmem:[#allocation2 + $0xea0] sm:$0xff]
    %v850 = vld [vmem:[#allocation2 + $0xea8] sm:$0xff]
    %v851 = vld [vmem:[#allocation2 + $0xeb0] sm:$0xff]
    %v852 = vld [vmem:[#allocation2 + $0xeb8] sm:$0xff]
    %v853 = vld [vmem:[#allocation2 + $0xec0] sm:$0xff]
    %v854 = vld [vmem:[#allocation2 + $0xec8] sm:$0xff]
    %v855 = vld [vmem:[#allocation2 + $0xed0] sm:$0xff]
    %v856 = vld [vmem:[#allocation2 + $0xed8] sm:$0xff]
    %v857 = vld [vmem:[#allocation2 + $0xee0] sm:$0xff]
    %v858 = vld [vmem:[#allocation2 + $0xee8] sm:$0xff]
    %v859 = vld [vmem:[#allocation2 + $0xef0] sm:$0xff]
    %v860 = vld [vmem:[#allocation2 + $0xef8] sm:$0xff]
    %v861 = vld [vmem:[#allocation2 + $0xf00] sm:$0xff]
    %v862 = vld [vmem:[#allocation2 + $0xf08] sm:$0xff]
    %v863 = vld [vmem:[#allocation2 + $0xf10] sm:$0xff]
    %v864 = vld [vmem:[#allocation2 + $0xf18] sm:$0xff]
    %v865 = vld [vmem:[#allocation2 + $0xf20] sm:$0xff]
    %v866 = vld [vmem:[#allocation2 + $0xf28] sm:$0xff]
    %v867 = vld [vmem:[#allocation2 + $0xf30] sm:$0xff]
    %v868 = vld [vmem:[#allocation2 + $0xf38] sm:$0xff]
    %v869 = vld [vmem:[#allocation2 + $0xf40] sm:$0xff]
    %v870 = vld [vmem:[#allocation2 + $0xf48] sm:$0xff]
    %v871 = vld [vmem:[#allocation2 + $0xf50] sm:$0xff]
    %v872 = vld [vmem:[#allocation2 + $0xf58] sm:$0xff]
    %v873 = vld [vmem:[#allocation2 + $0xf60] sm:$0xff]
    %v874 = vld [vmem:[#allocation2 + $0xf68] sm:$0xff]
    %v875 = vld [vmem:[#allocation2 + $0xf70] sm:$0xff]
    %v876 = vld [vmem:[#allocation2 + $0xf78] sm:$0xff]
    %v877 = vld [vmem:[#allocation2 + $0xf80] sm:$0xff]
    %v878 = vld [vmem:[#allocation2 + $0xf88] sm:$0xff]
    %v879 = vld [vmem:[#allocation2 + $0xf90] sm:$0xff]
    %v880 = vld [vmem:[#allocation2 + $0xf98] sm:$0xff]
    %v881 = vld [vmem:[#allocation2 + $0xfa0] sm:$0xff]
    %v882 = vld [vmem:[#allocation2 + $0xfa8] sm:$0xff]
    %v883 = vld [vmem:[#allocation2 + $0xfb0] sm:$0xff]
    %v884 = vld [vmem:[#allocation2 + $0xfb8] sm:$0xff]
    %v885 = vld [vmem:[#allocation2 + $0xfc0] sm:$0xff]
    %v886 = vld [vmem:[#allocation2 + $0xfc8] sm:$0xff]
    %v887 = vld [vmem:[#allocation2 + $0xfd0] sm:$0xff]
    %v888 = vld [vmem:[#allocation2 + $0xfd8] sm:$0xff]
    %v889 = vld [vmem:[#allocation2 + $0xfe0] sm:$0xff]
    %v890 = vld [vmem:[#allocation2 + $0xfe8] sm:$0xff]
    %v891 = vld [vmem:[#allocation2 + $0xff0] sm:$0xff]
    %v892 = vld [vmem:[#allocation2 + $0xff8] sm:$0xff]
    %v893 = vld [vmem:[#allocation2 + $0x1000] sm:$0xff]
    %v894 = vld [vmem:[#allocation2 + $0x1008] sm:$0xff]
    %v895 = vld [vmem:[#allocation2 + $0x1010] sm:$0xff]
    %v896 = vld [vmem:[#allocation2 + $0x1018] sm:$0xff]
    %v897 = vld [vmem:[#allocation2 + $0x1020] sm:$0xff]
    %v898 = vld [vmem:[#allocation2 + $0x1028] sm:$0xff]
    %v899 = vld [vmem:[#allocation2 + $0x1030] sm:$0xff]
    %v900 = vld [vmem:[#allocation2 + $0x1038] sm:$0xff]
    %v901 = vld [vmem:[#allocation2 + $0x1040] sm:$0xff]
    %v902 = vld [vmem:[#allocation2 + $0x1048] sm:$0xff]
    %v903 = vld [vmem:[#allocation2 + $0x1050] sm:$0xff]
    %v904 = vld [vmem:[#allocation2 + $0x1058] sm:$0xff]
    %v905 = vld [vmem:[#allocation2 + $0x1060] sm:$0xff]
    %v906 = vld [vmem:[#allocation2 + $0x1068] sm:$0xff]
    %v907 = vld [vmem:[#allocation2 + $0x1070] sm:$0xff]
    %v908 = vld [vmem:[#allocation2 + $0x1078] sm:$0xff]
    %v909 = vld [vmem:[#allocation2 + $0x1080] sm:$0xff]
    %v910 = vld [vmem:[#allocation2 + $0x1088] sm:$0xff]
    %v911 = vld [vmem:[#allocation2 + $0x1090] sm:$0xff]
    %v912 = vld [vmem:[#allocation2 + $0x1098] sm:$0xff]
    %v913 = vld [vmem:[#allocation2 + $0x10a0] sm:$0xff]
    %v914 = vld [vmem:[#allocation2 + $0x10a8] sm:$0xff]
    %v915 = vld [vmem:[#allocation2 + $0x10b0] sm:$0xff]
    %v916 = vld [vmem:[#allocation2 + $0x10b8] sm:$0xff]
    %v917 = vld [vmem:[#allocation2 + $0x10c0] sm:$0xff]
    %v918 = vld [vmem:[#allocation2 + $0x10c8] sm:$0xff]
    %v919 = vld [vmem:[#allocation2 + $0x10d0] sm:$0xff]
    %v920 = vld [vmem:[#allocation2 + $0x10d8] sm:$0xff]
    %v921 = vld [vmem:[#allocation2 + $0x10e0] sm:$0xff]
    %v922 = vld [vmem:[#allocation2 + $0x10e8] sm:$0xff]
    %v923 = vld [vmem:[#allocation2 + $0x10f0] sm:$0xff]
    %v924 = vld [vmem:[#allocation2 + $0x10f8] sm:$0xff]
    %v925 = vld [vmem:[#allocation2 + $0x1100] sm:$0xff]
    %v926 = vld [vmem:[#allocation2 + $0x1108] sm:$0xff]
    %v927 = vld [vmem:[#allocation2 + $0x1110] sm:$0xff]
    %v928 = vld [vmem:[#allocation2 + $0x1118] sm:$0xff]
    %v929 = vld [vmem:[#allocation2 + $0x1120] sm:$0xff]
    %v930 = vld [vmem:[#allocation2 + $0x1128] sm:$0xff]
    %v931 = vld [vmem:[#allocation2 + $0x1130] sm:$0xff]
    %v932 = vld [vmem:[#allocation2 + $0x1138] sm:$0xff]
    %v933 = vld [vmem:[#allocation2 + $0x1140] sm:$0xff]
    %v934 = vld [vmem:[#allocation2 + $0x1148] sm:$0xff]
    %v935 = vld [vmem:[#allocation2 + $0x1150] sm:$0xff]
    %v936 = vld [vmem:[#allocation2 + $0x1158] sm:$0xff]
    %v937 = vld [vmem:[#allocation2 + $0x1160] sm:$0xff]
    %v938 = vld [vmem:[#allocation2 + $0x1168] sm:$0xff]
    %v939 = vld [vmem:[#allocation2 + $0x1170] sm:$0xff]
    %v940 = vld [vmem:[#allocation2 + $0x1178] sm:$0xff]
    %v941 = vld [vmem:[#allocation2 + $0x1180] sm:$0xff]
    %v942 = vld [vmem:[#allocation2 + $0x1188] sm:$0xff]
    %v943 = vld [vmem:[#allocation2 + $0x1190] sm:$0xff]
    %v944 = vld [vmem:[#allocation2 + $0x1198] sm:$0xff]
    %v945 = vld [vmem:[#allocation2 + $0x11a0] sm:$0xff]
    %v946 = vld [vmem:[#allocation2 + $0x11a8] sm:$0xff]
    %v947 = vld [vmem:[#allocation2 + $0x11b0] sm:$0xff]
    %v948 = vld [vmem:[#allocation2 + $0x11b8] sm:$0xff]
    %v949 = vld [vmem:[#allocation2 + $0x11c0] sm:$0xff]
    %v950 = vld [vmem:[#allocation2 + $0x11c8] sm:$0xff]
    %v951 = vld [vmem:[#allocation2 + $0x11d0] sm:$0xff]
    %v952 = vld [vmem:[#allocation2 + $0x11d8] sm:$0xff]
    %v953 = vld [vmem:[#allocation2 + $0x11e0] sm:$0xff]
    %v954 = vld [vmem:[#allocation2 + $0x11e8] sm:$0xff]
    %v955 = vld [vmem:[#allocation2 + $0x11f0] sm:$0xff]
    %v956 = vld [vmem:[#allocation2 + $0x11f8] sm:$0xff]
    %v957 = vld [vmem:[#allocation2 + $0x1200] sm:$0xff]
    %v958 = vld [vmem:[#allocation2 + $0x1208] sm:$0xff]
    %v959 = vld [vmem:[#allocation2 + $0x1210] sm:$0xff]
    %v960 = vld [vmem:[#allocation2 + $0x1218] sm:$0xff]
    %v961 = vld [vmem:[#allocation2 + $0x1220] sm:$0xff]
    %v962 = vld [vmem:[#allocation2 + $0x1228] sm:$0xff]
    %v963 = vld [vmem:[#allocation2 + $0x1230] sm:$0xff]
    %v964 = vld [vmem:[#allocation2 + $0x1238] sm:$0xff]
    %v965 = vld [vmem:[#allocation2 + $0x1240] sm:$0xff]
    %v966 = vld [vmem:[#allocation2 + $0x1248] sm:$0xff]
    %v967 = vld [vmem:[#allocation2 + $0x1250] sm:$0xff]
    %v968 = vld [vmem:[#allocation2 + $0x1258] sm:$0xff]
    %v969 = vld [vmem:[#allocation2 + $0x1260] sm:$0xff]
    %v970 = vld [vmem:[#allocation2 + $0x1268] sm:$0xff]
    %v971 = vld [vmem:[#allocation2 + $0x1270] sm:$0xff]
    %v972 = vld [vmem:[#allocation2 + $0x1278] sm:$0xff]
    %v973 = vld [vmem:[#allocation2 + $0x1280] sm:$0xff]
    %v974 = vld [vmem:[#allocation2 + $0x1288] sm:$0xff]
    %v975 = vld [vmem:[#allocation2 + $0x1290] sm:$0xff]
    %v976 = vld [vmem:[#allocation2 + $0x1298] sm:$0xff]
    %v977 = vld [vmem:[#allocation2 + $0x12a0] sm:$0xff]
    %v978 = vld [vmem:[#allocation2 + $0x12a8] sm:$0xff]
    %v979 = vld [vmem:[#allocation2 + $0x12b0] sm:$0xff]
    %v980 = vld [vmem:[#allocation2 + $0x12b8] sm:$0xff]
    %v981 = vld [vmem:[#allocation2 + $0x12c0] sm:$0xff]
    %v982 = vld [vmem:[#allocation2 + $0x12c8] sm:$0xff]
    %v983 = vld [vmem:[#allocation2 + $0x12d0] sm:$0xff]
    %v984 = vld [vmem:[#allocation2 + $0x12d8] sm:$0xff]
    %v985 = vld [vmem:[#allocation2 + $0x12e0] sm:$0xff]
    %v986 = vld [vmem:[#allocation2 + $0x12e8] sm:$0xff]
    %v987 = vld [vmem:[#allocation2 + $0x12f0] sm:$0xff]
    %v988 = vld [vmem:[#allocation2 + $0x12f8] sm:$0xff]
    %v989 = vld [vmem:[#allocation2 + $0x1300] sm:$0xff]
    %v990 = vld [vmem:[#allocation2 + $0x1308] sm:$0xff]
    %v991 = vld [vmem:[#allocation2 + $0x1310] sm:$0xff]
    %v992 = vld [vmem:[#allocation2 + $0x1318] sm:$0xff]
    %v993 = vld [vmem:[#allocation2 + $0x1320] sm:$0xff]
    %v994 = vld [vmem:[#allocation2 + $0x1328] sm:$0xff]
    %v995 = vld [vmem:[#allocation2 + $0x1330] sm:$0xff]
    %v996 = vld [vmem:[#allocation2 + $0x1338] sm:$0xff]
    %v997 = vld [vmem:[#allocation2 + $0x1340] sm:$0xff]
    %v998 = vld [vmem:[#allocation2 + $0x1348] sm:$0xff]
    %v999 = vld [vmem:[#allocation2 + $0x1350] sm:$0xff]
    %v1000 = vld [vmem:[#allocation2 + $0x1358] sm:$0xff]
    %v1001 = vld [vmem:[#allocation2 + $0x1360] sm:$0xff]
    %v1002 = vld [vmem:[#allocation2 + $0x1368] sm:$0xff]
    %v1003 = vld [vmem:[#allocation2 + $0x1370] sm:$0xff]
    %v1004 = vld [vmem:[#allocation2 + $0x1378] sm:$0xff]
    %v1005 = vld [vmem:[#allocation2 + $0x1380] sm:$0xff]
    %v1006 = vld [vmem:[#allocation2 + $0x1388] sm:$0xff]
    %v1007 = vld [vmem:[#allocation2 + $0x1390] sm:$0xff]
    %v1008 = vld [vmem:[#allocation2 + $0x1398] sm:$0xff]
    %v1009 = vld [vmem:[#allocation2 + $0x13a0] sm:$0xff]
    %v1010 = vld [vmem:[#allocation2 + $0x13a8] sm:$0xff]
    %v1011 = vld [vmem:[#allocation2 + $0x13b0] sm:$0xff]
    %v1012 = vld [vmem:[#allocation2 + $0x13b8] sm:$0xff]
    %v1013 = vld [vmem:[#allocation2 + $0x13c0] sm:$0xff]
    %v1014 = vld [vmem:[#allocation2 + $0x13c8] sm:$0xff]
    %v1015 = vld [vmem:[#allocation2 + $0x13d0] sm:$0xff]
    %v1016 = vld [vmem:[#allocation2 + $0x13d8] sm:$0xff]
    %v1017 = vld [vmem:[#allocation2 + $0x13e0] sm:$0xff]
    %v1018 = vld [vmem:[#allocation2 + $0x13e8] sm:$0xff]
    %v1019 = vld [vmem:[#allocation2 + $0x13f0] sm:$0xff]
    %v1020 = vld [vmem:[#allocation2 + $0x13f8] sm:$0xff]
    %v1021 = vld [vmem:[#allocation2 + $0x1400] sm:$0xff]
    %v1022 = vld [vmem:[#allocation2 + $0x1408] sm:$0xff]
    %v1023 = vld [vmem:[#allocation2 + $0x1410] sm:$0xff]
    %v1024 = vld [vmem:[#allocation2 + $0x1418] sm:$0xff]
    %v1025 = vld [vmem:[#allocation2 + $0x1420] sm:$0xff]
    %v1026 = vld [vmem:[#allocation2 + $0x1428] sm:$0xff]
    %v1027 = vld [vmem:[#allocation2 + $0x1430] sm:$0xff]
    %v1028 = vld [vmem:[#allocation2 + $0x1438] sm:$0xff]
    %v1029 = vld [vmem:[#allocation2 + $0x1440] sm:$0xff]
    %v1030 = vld [vmem:[#allocation2 + $0x1448] sm:$0xff]
    %v1031 = vld [vmem:[#allocation2 + $0x1450] sm:$0xff]
    %v1032 = vld [vmem:[#allocation2 + $0x1458] sm:$0xff]
    %v1033 = vld [vmem:[#allocation2 + $0x1460] sm:$0xff]
    %v1034 = vld [vmem:[#allocation2 + $0x1468] sm:$0xff]
    %v1035 = vld [vmem:[#allocation2 + $0x1470] sm:$0xff]
    %v1036 = vld [vmem:[#allocation2 + $0x1478] sm:$0xff]
    %v1037 = vld [vmem:[#allocation2 + $0x1480] sm:$0xff]
    %v1038 = vld [vmem:[#allocation2 + $0x1488] sm:$0xff]
    %v1039 = vld [vmem:[#allocation2 + $0x1490] sm:$0xff]
    %v1040 = vld [vmem:[#allocation2 + $0x1498] sm:$0xff]
    %v1041 = vld [vmem:[#allocation2 + $0x14a0] sm:$0xff]
    %v1042 = vld [vmem:[#allocation2 + $0x14a8] sm:$0xff]
    %v1043 = vld [vmem:[#allocation2 + $0x14b0] sm:$0xff]
    %v1044 = vld [vmem:[#allocation2 + $0x14b8] sm:$0xff]
    %v1045 = vld [vmem:[#allocation2 + $0x14c0] sm:$0xff]
    %v1046 = vld [vmem:[#allocation2 + $0x14c8] sm:$0xff]
    %v1047 = vld [vmem:[#allocation2 + $0x14d0] sm:$0xff]
    %v1048 = vld [vmem:[#allocation2 + $0x14d8] sm:$0xff]
    %v1049 = vld [vmem:[#allocation2 + $0x14e0] sm:$0xff]
    %v1050 = vld [vmem:[#allocation2 + $0x14e8] sm:$0xff]
    %v1051 = vld [vmem:[#allocation2 + $0x14f0] sm:$0xff]
    %v1052 = vld [vmem:[#allocation2 + $0x14f8] sm:$0xff]
    %v1053 = vld [vmem:[#allocation2 + $0x1500] sm:$0xff]
    %v1054 = vld [vmem:[#allocation2 + $0x1508] sm:$0xff]
    %v1055 = vld [vmem:[#allocation2 + $0x1510] sm:$0xff]
    %v1056 = vld [vmem:[#allocation2 + $0x1518] sm:$0xff]
    %v1057 = vld [vmem:[#allocation2 + $0x1520] sm:$0xff]
    %v1058 = vld [vmem:[#allocation2 + $0x1528] sm:$0xff]
    %v1059 = vld [vmem:[#allocation2 + $0x1530] sm:$0xff]
    %v1060 = vld [vmem:[#allocation2 + $0x1538] sm:$0xff]
    %v1061 = vld [vmem:[#allocation2 + $0x1540] sm:$0xff]
    %v1062 = vld [vmem:[#allocation2 + $0x1548] sm:$0xff]
    %v1063 = vld [vmem:[#allocation2 + $0x1550] sm:$0xff]
    %v1064 = vld [vmem:[#allocation2 + $0x1558] sm:$0xff]
    %v1065 = vld [vmem:[#allocation2 + $0x1560] sm:$0xff]
    %v1066 = vld [vmem:[#allocation2 + $0x1568] sm:$0xff]
    %v1067 = vld [vmem:[#allocation2 + $0x1570] sm:$0xff]
    %v1068 = vld [vmem:[#allocation2 + $0x1578] sm:$0xff]
    %v1069 = vld [vmem:[#allocation2 + $0x1580] sm:$0xff]
    %v1070 = vld [vmem:[#allocation2 + $0x1588] sm:$0xff]
    %v1071 = vld [vmem:[#allocation2 + $0x1590] sm:$0xff]
    %v1072 = vld [vmem:[#allocation2 + $0x1598] sm:$0xff]
    %v1073 = vld [vmem:[#allocation2 + $0x15a0] sm:$0xff]
    %v1074 = vld [vmem:[#allocation2 + $0x15a8] sm:$0xff]
    %v1075 = vld [vmem:[#allocation2 + $0x15b0] sm:$0xff]
    %v1076 = vld [vmem:[#allocation2 + $0x15b8] sm:$0xff]
    %v1077 = vld [vmem:[#allocation2 + $0x15c0] sm:$0xff]
    %v1078 = vld [vmem:[#allocation2 + $0x15c8] sm:$0xff]
    %v1079 = vld [vmem:[#allocation2 + $0x15d0] sm:$0xff]
    %v1080 = vld [vmem:[#allocation2 + $0x15d8] sm:$0xff]
    %v1081 = vld [vmem:[#allocation2 + $0x15e0] sm:$0xff]
    %v1082 = vld [vmem:[#allocation2 + $0x15e8] sm:$0xff]
    %v1083 = vld [vmem:[#allocation2 + $0x15f0] sm:$0xff]
    %v1084 = vld [vmem:[#allocation2 + $0x15f8] sm:$0xff]
    %v1085 = vld [vmem:[#allocation2 + $0x1600] sm:$0xff]
    %v1086 = vld [vmem:[#allocation2 + $0x1608] sm:$0xff]
    %v1087 = vld [vmem:[#allocation2 + $0x1610] sm:$0xff]
    %v1088 = vld [vmem:[#allocation2 + $0x1618] sm:$0xff]
    %v1089 = vld [vmem:[#allocation2 + $0x1620] sm:$0xff]
    %v1090 = vld [vmem:[#allocation2 + $0x1628] sm:$0xff]
    %v1091 = vld [vmem:[#allocation2 + $0x1630] sm:$0xff]
    %v1092 = vld [vmem:[#allocation2 + $0x1638] sm:$0xff]
    %v1093 = vld [vmem:[#allocation2 + $0x1640] sm:$0xff]
    %v1094 = vld [vmem:[#allocation2 + $0x1648] sm:$0xff]
    %v1095 = vld [vmem:[#allocation2 + $0x1650] sm:$0xff]
    %v1096 = vld [vmem:[#allocation2 + $0x1658] sm:$0xff]
    %v1097 = vld [vmem:[#allocation2 + $0x1660] sm:$0xff]
    %v1098 = vld [vmem:[#allocation2 + $0x1668] sm:$0xff]
    %v1099 = vld [vmem:[#allocation2 + $0x1670] sm:$0xff]
    %v1100 = vld [vmem:[#allocation2 + $0x1678] sm:$0xff]
    %v1101 = vld [vmem:[#allocation2 + $0x1680] sm:$0xff]
    %v1102 = vld [vmem:[#allocation2 + $0x1688] sm:$0xff]
    %v1103 = vld [vmem:[#allocation2 + $0x1690] sm:$0xff]
    %v1104 = vld [vmem:[#allocation2 + $0x1698] sm:$0xff]
    %v1105 = vld [vmem:[#allocation2 + $0x16a0] sm:$0xff]
    %v1106 = vld [vmem:[#allocation2 + $0x16a8] sm:$0xff]
    %v1107 = vld [vmem:[#allocation2 + $0x16b0] sm:$0xff]
    %v1108 = vld [vmem:[#allocation2 + $0x16b8] sm:$0xff]
    %v1109 = vld [vmem:[#allocation2 + $0x16c0] sm:$0xff]
    %v1110 = vld [vmem:[#allocation2 + $0x16c8] sm:$0xff]
    %v1111 = vld [vmem:[#allocation2 + $0x16d0] sm:$0xff]
    %v1112 = vld [vmem:[#allocation2 + $0x16d8] sm:$0xff]
    %v1113 = vld [vmem:[#allocation2 + $0x16e0] sm:$0xff]
    %v1114 = vld [vmem:[#allocation2 + $0x16e8] sm:$0xff]
    %v1115 = vld [vmem:[#allocation2 + $0x16f0] sm:$0xff]
    %v1116 = vld [vmem:[#allocation2 + $0x16f8] sm:$0xff]
    %v1117 = vld [vmem:[#allocation2 + $0x1700] sm:$0xff]
    %v1118 = vld [vmem:[#allocation2 + $0x1708] sm:$0xff]
    %v1119 = vld [vmem:[#allocation2 + $0x1710] sm:$0xff]
    %v1120 = vld [vmem:[#allocation2 + $0x1718] sm:$0xff]
    %v1121 = vld [vmem:[#allocation2 + $0x1720] sm:$0xff]
    %v1122 = vld [vmem:[#allocation2 + $0x1728] sm:$0xff]
    %v1123 = vld [vmem:[#allocation2 + $0x1730] sm:$0xff]
    %v1124 = vld [vmem:[#allocation2 + $0x1738] sm:$0xff]
    %v1125 = vld [vmem:[#allocation2 + $0x1740] sm:$0xff]
    %v1126 = vld [vmem:[#allocation2 + $0x1748] sm:$0xff]
    %v1127 = vld [vmem:[#allocation2 + $0x1750] sm:$0xff]
    %v1128 = vld [vmem:[#allocation2 + $0x1758] sm:$0xff]
    %v1129 = vld [vmem:[#allocation2 + $0x1760] sm:$0xff]
    %v1130 = vld [vmem:[#allocation2 + $0x1768] sm:$0xff]
    %v1131 = vld [vmem:[#allocation2 + $0x1770] sm:$0xff]
    %v1132 = vld [vmem:[#allocation2 + $0x1778] sm:$0xff]
    %v1133 = vld [vmem:[#allocation2 + $0x1780] sm:$0xff]
    %v1134 = vld [vmem:[#allocation2 + $0x1788] sm:$0xff]
    %v1135 = vld [vmem:[#allocation2 + $0x1790] sm:$0xff]
    %v1136 = vld [vmem:[#allocation2 + $0x1798] sm:$0xff]
    %v1137 = vld [vmem:[#allocation2 + $0x17a0] sm:$0xff]
    %v1138 = vld [vmem:[#allocation2 + $0x17a8] sm:$0xff]
    %v1139 = vld [vmem:[#allocation2 + $0x17b0] sm:$0xff]
    %v1140 = vld [vmem:[#allocation2 + $0x17b8] sm:$0xff]
    %v1141 = vld [vmem:[#allocation2 + $0x17c0] sm:$0xff]
    %v1142 = vld [vmem:[#allocation2 + $0x17c8] sm:$0xff]
    %v1143 = vld [vmem:[#allocation2 + $0x17d0] sm:$0xff]
    %v1144 = vld [vmem:[#allocation2 + $0x17d8] sm:$0xff]
    %v1145 = vld [vmem:[#allocation2 + $0x17e0] sm:$0xff]
    %v1146 = vld [vmem:[#allocation2 + $0x17e8] sm:$0xff]
    %v1147 = vld [vmem:[#allocation2 + $0x17f0] sm:$0xff]
    %v1148 = vld [vmem:[#allocation2 + $0x17f8] sm:$0xff]
    %v1149 = vld [vmem:[#allocation2 + $0x1800] sm:$0xff]
    %v1150 = vld [vmem:[#allocation2 + $0x1808] sm:$0xff]
    %v1151 = vld [vmem:[#allocation2 + $0x1810] sm:$0xff]
    %v1152 = vld [vmem:[#allocation2 + $0x1818] sm:$0xff]
    %v1153 = vld [vmem:[#allocation2 + $0x1820] sm:$0xff]
    %v1154 = vld [vmem:[#allocation2 + $0x1828] sm:$0xff]
    %v1155 = vld [vmem:[#allocation2 + $0x1830] sm:$0xff]
    %v1156 = vld [vmem:[#allocation2 + $0x1838] sm:$0xff]
    %v1157 = vld [vmem:[#allocation2 + $0x1840] sm:$0xff]
    %v1158 = vld [vmem:[#allocation2 + $0x1848] sm:$0xff]
    %v1159 = vld [vmem:[#allocation2 + $0x1850] sm:$0xff]
    %v1160 = vld [vmem:[#allocation2 + $0x1858] sm:$0xff]
    %v1161 = vld [vmem:[#allocation2 + $0x1860] sm:$0xff]
    %v1162 = vld [vmem:[#allocation2 + $0x1868] sm:$0xff]
    %v1163 = vld [vmem:[#allocation2 + $0x1870] sm:$0xff]
    %v1164 = vld [vmem:[#allocation2 + $0x1878] sm:$0xff]
    %v1165 = vld [vmem:[#allocation2 + $0x1880] sm:$0xff]
    %v1166 = vld [vmem:[#allocation2 + $0x1888] sm:$0xff]
    %v1167 = vld [vmem:[#allocation2 + $0x1890] sm:$0xff]
    %v1168 = vld [vmem:[#allocation2 + $0x1898] sm:$0xff]
    %v1169 = vld [vmem:[#allocation2 + $0x18a0] sm:$0xff]
    %v1170 = vld [vmem:[#allocation2 + $0x18a8] sm:$0xff]
    %v1171 = vld [vmem:[#allocation2 + $0x18b0] sm:$0xff]
    %v1172 = vld [vmem:[#allocation2 + $0x18b8] sm:$0xff]
    %v1173 = vld [vmem:[#allocation2 + $0x18c0] sm:$0xff]
    %v1174 = vld [vmem:[#allocation2 + $0x18c8] sm:$0xff]
    %v1175 = vld [vmem:[#allocation2 + $0x18d0] sm:$0xff]
    %v1176 = vld [vmem:[#allocation2 + $0x18d8] sm:$0xff]
    %v1177 = vld [vmem:[#allocation2 + $0x18e0] sm:$0xff]
    %v1178 = vld [vmem:[#allocation2 + $0x18e8] sm:$0xff]
    %v1179 = vld [vmem:[#allocation2 + $0x18f0] sm:$0xff]
    %v1180 = vld [vmem:[#allocation2 + $0x18f8] sm:$0xff]
    %v1181 = vld [vmem:[#allocation2 + $0x1900] sm:$0xff]
    %v1182 = vld [vmem:[#allocation2 + $0x1908] sm:$0xff]
    %v1183 = vld [vmem:[#allocation2 + $0x1910] sm:$0xff]
    %v1184 = vld [vmem:[#allocation2 + $0x1918] sm:$0xff]
    %v1185 = vld [vmem:[#allocation2 + $0x1920] sm:$0xff]
    %v1186 = vld [vmem:[#allocation2 + $0x1928] sm:$0xff]
    %v1187 = vld [vmem:[#allocation2 + $0x1930] sm:$0xff]
    %v1188 = vld [vmem:[#allocation2 + $0x1938] sm:$0xff]
    %v1189 = vld [vmem:[#allocation2 + $0x1940] sm:$0xff]
    %v1190 = vld [vmem:[#allocation2 + $0x1948] sm:$0xff]
    %v1191 = vld [vmem:[#allocation2 + $0x1950] sm:$0xff]
    %v1192 = vld [vmem:[#allocation2 + $0x1958] sm:$0xff]
    %v1193 = vld [vmem:[#allocation2 + $0x1960] sm:$0xff]
    %v1194 = vld [vmem:[#allocation2 + $0x1968] sm:$0xff]
    %v1195 = vld [vmem:[#allocation2 + $0x1970] sm:$0xff]
    %v1196 = vld [vmem:[#allocation2 + $0x1978] sm:$0xff]
    %v1197 = vld [vmem:[#allocation2 + $0x1980] sm:$0xff]
    %v1198 = vld [vmem:[#allocation2 + $0x1988] sm:$0xff]
    %v1199 = vld [vmem:[#allocation2 + $0x1990] sm:$0xff]
    %v1200 = vld [vmem:[#allocation2 + $0x1998] sm:$0xff]
    %v1201 = vld [vmem:[#allocation2 + $0x19a0] sm:$0xff]
    %v1202 = vld [vmem:[#allocation2 + $0x19a8] sm:$0xff]
    %v1203 = vld [vmem:[#allocation2 + $0x19b0] sm:$0xff]
    %v1204 = vld [vmem:[#allocation2 + $0x19b8] sm:$0xff]
    %v1205 = vld [vmem:[#allocation2 + $0x19c0] sm:$0xff]
    %v1206 = vld [vmem:[#allocation2 + $0x19c8] sm:$0xff]
    %v1207 = vld [vmem:[#allocation2 + $0x19d0] sm:$0xff]
    %v1208 = vld [vmem:[#allocation2 + $0x19d8] sm:$0xff]
    %v1209 = vld [vmem:[#allocation2 + $0x19e0] sm:$0xff]
    %v1210 = vld [vmem:[#allocation2 + $0x19e8] sm:$0xff]
    %v1211 = vld [vmem:[#allocation2 + $0x19f0] sm:$0xff]
    %v1212 = vld [vmem:[#allocation2 + $0x19f8] sm:$0xff]
    %v1213 = vld [vmem:[#allocation2 + $0x1a00] sm:$0xff]
    %v1214 = vld [vmem:[#allocation2 + $0x1a08] sm:$0xff]
    %v1215 = vld [vmem:[#allocation2 + $0x1a10] sm:$0xff]
    %v1216 = vld [vmem:[#allocation2 + $0x1a18] sm:$0xff]
    %v1217 = vld [vmem:[#allocation2 + $0x1a20] sm:$0xff]
    %v1218 = vld [vmem:[#allocation2 + $0x1a28] sm:$0xff]
    %v1219 = vld [vmem:[#allocation2 + $0x1a30] sm:$0xff]
    %v1220 = vld [vmem:[#allocation2 + $0x1a38] sm:$0xff]
    %v1221 = vld [vmem:[#allocation2 + $0x1a40] sm:$0xff]
    %v1222 = vld [vmem:[#allocation2 + $0x1a48] sm:$0xff]
    %v1223 = vld [vmem:[#allocation2 + $0x1a50] sm:$0xff]
    %v1224 = vld [vmem:[#allocation2 + $0x1a58] sm:$0xff]
    %v1225 = vld [vmem:[#allocation2 + $0x1a60] sm:$0xff]
    %v1226 = vld [vmem:[#allocation2 + $0x1a68] sm:$0xff]
    %v1227 = vld [vmem:[#allocation2 + $0x1a70] sm:$0xff]
    %v1228 = vld [vmem:[#allocation2 + $0x1a78] sm:$0xff]
    %v1229 = vld [vmem:[#allocation2 + $0x1a80] sm:$0xff]
    %v1230 = vld [vmem:[#allocation2 + $0x1a88] sm:$0xff]
    %v1231 = vld [vmem:[#allocation2 + $0x1a90] sm:$0xff]
    %v1232 = vld [vmem:[#allocation2 + $0x1a98] sm:$0xff]
    %v1233 = vld [vmem:[#allocation2 + $0x1aa0] sm:$0xff]
    %v1234 = vld [vmem:[#allocation2 + $0x1aa8] sm:$0xff]
    %v1235 = vld [vmem:[#allocation2 + $0x1ab0] sm:$0xff]
    %v1236 = vld [vmem:[#allocation2 + $0x1ab8] sm:$0xff]
    %v1237 = vld [vmem:[#allocation2 + $0x1ac0] sm:$0xff]
    %v1238 = vld [vmem:[#allocation2 + $0x1ac8] sm:$0xff]
    %v1239 = vld [vmem:[#allocation2 + $0x1ad0] sm:$0xff]
    %v1240 = vld [vmem:[#allocation2 + $0x1ad8] sm:$0xff]
    %v1241 = vld [vmem:[#allocation2 + $0x1ae0] sm:$0xff]
    %v1242 = vld [vmem:[#allocation2 + $0x1ae8] sm:$0xff]
    %v1243 = vld [vmem:[#allocation2 + $0x1af0] sm:$0xff]
    %v1244 = vld [vmem:[#allocation2 + $0x1af8] sm:$0xff]
    %v1245 = vld [vmem:[#allocation2 + $0x1b00] sm:$0xff]
    %v1246 = vld [vmem:[#allocation2 + $0x1b08] sm:$0xff]
    %v1247 = vld [vmem:[#allocation2 + $0x1b10] sm:$0xff]
    %v1248 = vld [vmem:[#allocation2 + $0x1b18] sm:$0xff]
    %v1249 = vld [vmem:[#allocation2 + $0x1b20] sm:$0xff]
    %v1250 = vld [vmem:[#allocation2 + $0x1b28] sm:$0xff]
    %v1251 = vld [vmem:[#allocation2 + $0x1b30] sm:$0xff]
    %v1252 = vld [vmem:[#allocation2 + $0x1b38] sm:$0xff]
    %v1253 = vld [vmem:[#allocation2 + $0x1b40] sm:$0xff]
    %v1254 = vld [vmem:[#allocation2 + $0x1b48] sm:$0xff]
    %v1255 = vld [vmem:[#allocation2 + $0x1b50] sm:$0xff]
    %v1256 = vld [vmem:[#allocation2 + $0x1b58] sm:$0xff]
    %v1257 = vld [vmem:[#allocation2 + $0x1b60] sm:$0xff]
    %v1258 = vld [vmem:[#allocation2 + $0x1b68] sm:$0xff]
    %v1259 = vld [vmem:[#allocation2 + $0x1b70] sm:$0xff]
    %v1260 = vld [vmem:[#allocation2 + $0x1b78] sm:$0xff]
    %v1261 = vld [vmem:[#allocation2 + $0x1b80] sm:$0xff]
    %v1262 = vld [vmem:[#allocation2 + $0x1b88] sm:$0xff]
    %v1263 = vld [vmem:[#allocation2 + $0x1b90] sm:$0xff]
    %v1264 = vld [vmem:[#allocation2 + $0x1b98] sm:$0xff]
    %v1265 = vld [vmem:[#allocation2 + $0x1ba0] sm:$0xff]
    %v1266 = vld [vmem:[#allocation2 + $0x1ba8] sm:$0xff]
    %v1267 = vld [vmem:[#allocation2 + $0x1bb0] sm:$0xff]
    %v1268 = vld [vmem:[#allocation2 + $0x1bb8] sm:$0xff]
    %v1269 = vld [vmem:[#allocation2 + $0x1bc0] sm:$0xff]
    %v1270 = vld [vmem:[#allocation2 + $0x1bc8] sm:$0xff]
    %v1271 = vld [vmem:[#allocation2 + $0x1bd0] sm:$0xff]
    %v1272 = vld [vmem:[#allocation2 + $0x1bd8] sm:$0xff]
    %v1273 = vld [vmem:[#allocation2 + $0x1be0] sm:$0xff]
    %v1274 = vld [vmem:[#allocation2 + $0x1be8] sm:$0xff]
    %v1275 = vld [vmem:[#allocation2 + $0x1bf0] sm:$0xff]
    %v1276 = vld [vmem:[#allocation2 + $0x1bf8] sm:$0xff]
    %v1277 = vld [vmem:[#allocation5] sm:$0xff]
    %v1279 = vlaneseq
    %v1280 = vshrl.u32 %v1279, 7
    %v1281 = vsub.s32 0, %v1280
    %v1282 = vrot.slane %v1277, %v1281
    %v1283 = vlaneseq
    %v1284 = vshrl.u32 %v1283, 7
    %v1285 = vsub.s32 1, %v1284
    %v1286 = vrot.slane %v1277, %v1285
    %v1287 = vlaneseq
    %v1288 = vshrl.u32 %v1287, 7
    %v1289 = vsub.s32 2, %v1288
    %v1290 = vrot.slane %v1277, %v1289
    %v1291 = vlaneseq
    %v1292 = vshrl.u32 %v1291, 7
    %v1293 = vsub.s32 3, %v1292
    %v1294 = vrot.slane %v1277, %v1293
    %v1295 = vlaneseq
    %v1296 = vshrl.u32 %v1295, 7
    %v1297 = vsub.s32 4, %v1296
    %v1298 = vrot.slane %v1277, %v1297
    %v1299 = vlaneseq
    %v1300 = vshrl.u32 %v1299, 7
    %v1301 = vsub.s32 5, %v1300
    %v1302 = vrot.slane %v1277, %v1301
    %v1303 = vlaneseq
    %v1304 = vshrl.u32 %v1303, 7
    %v1305 = vsub.s32 6, %v1304
    %v1306 = vrot.slane %v1277, %v1305
    %v1307 = vlaneseq
    %v1308 = vshrl.u32 %v1307, 7
    %v1309 = vsub.s32 7, %v1308
    %v1310 = vrot.slane %v1277, %v1309
    %v1347 = vunpack.c.l.b16 %v353
    %v1348 = vunpack.c.l.b16 %v354
    %v1349 = vunpack.c.l.b16 %v355
    %v1350 = vunpack.c.l.b16 %v356
    %v1351 = vunpack.c.l.b16 %v357
    %v1352 = vunpack.c.l.b16 %v358
    %v1353 = vunpack.c.l.b16 %v359
    %v1354 = vunpack.c.l.b16 %v360
    %v1355 = vunpack.c.l.b16 %v361
    %v1356 = vunpack.c.l.b16 %v362
    %v1357 = vunpack.c.l.b16 %v363
    %v1358 = vunpack.c.l.b16 %v364
    %v1359 = vunpack.c.l.b16 %v365
    %v1360 = vunpack.c.l.b16 %v366
    %v1361 = vunpack.c.l.b16 %v367
    %v1362 = vunpack.c.l.b16 %v368
    %v1363 = vunpack.c.l.b16 %v369
    %v1364 = vunpack.c.l.b16 %v370
    %v1365 = vunpack.c.l.b16 %v371
    %v1366 = vunpack.c.l.b16 %v372
    %v1367 = vunpack.c.l.b16 %v373
    %v1368 = vunpack.c.l.b16 %v374
    %v1369 = vunpack.c.l.b16 %v375
    %v1370 = vunpack.c.l.b16 %v376
    %v1371 = vunpack.c.l.b16 %v377
    %v1372 = vunpack.c.l.b16 %v378
    %v1373 = vunpack.c.l.b16 %v379
    %v1374 = vunpack.c.l.b16 %v380
    %vm1375 = vcmask 1041409
    %v1376 = vsel %vm1375, %v1361, %v1347
    %v1377 = vsel %vm1375, %v1362, %v1348
    %v1378 = vsel %vm1375, %v1363, %v1349
    %v1379 = vsel %vm1375, %v1364, %v1350
    %v1380 = vsel %vm1375, %v1365, %v1351
    %v1381 = vsel %vm1375, %v1366, %v1352
    %v1382 = vsel %vm1375, %v1367, %v1353
    %v1383 = vsel %vm1375, %v1368, %v1354
    %v1384 = vsel %vm1375, %v1369, %v1355
    %v1385 = vsel %vm1375, %v1370, %v1356
    %v1386 = vsel %vm1375, %v1371, %v1357
    %v1387 = vsel %vm1375, %v1372, %v1358
    %v1388 = vsel %vm1375, %v1373, %v1359
    %v1389 = vsel %vm1375, %v1374, %v1360
    %v1390 = vpack.c.b16 %v1376, %v1376
    %v1391 = vpack.c.b16 %v1377, %v1377
    %v1392 = vpack.c.b16 %v1378, %v1378
    %v1393 = vpack.c.b16 %v1379, %v1379
    %v1394 = vpack.c.b16 %v1380, %v1380
    %v1395 = vpack.c.b16 %v1381, %v1381
    %v1396 = vpack.c.b16 %v1382, %v1382
    %v1397 = vpack.c.b16 %v1383, %v1383
    %v1398 = vpack.c.b16 %v1384, %v1384
    %v1399 = vpack.c.b16 %v1385, %v1385
    %v1400 = vpack.c.b16 %v1386, %v1386
    %v1401 = vpack.c.b16 %v1387, %v1387
    %v1402 = vpack.c.b16 %v1388, %v1388
    %v1403 = vpack.c.b16 %v1389, %v1389
    %v2314 = vunpack.c.l.b16 %v381
    %v2315 = vunpack.c.h.b16 %v381
    %v2316 = vunpack.c.l.b16 %v382
    %v2317 = vunpack.c.h.b16 %v382
    %v2318 = vunpack.c.l.b16 %v383
    %v2319 = vunpack.c.h.b16 %v383
    %v2320 = vunpack.c.l.b16 %v384
    %v2321 = vunpack.c.h.b16 %v384
    %v2322 = vunpack.c.l.b16 %v385
    %v2323 = vunpack.c.h.b16 %v385
    %v2324 = vunpack.c.l.b16 %v386
    %v2325 = vunpack.c.h.b16 %v386
    %v2326 = vunpack.c.l.b16 %v387
    %v2327 = vunpack.c.h.b16 %v387
    %v2328 = vunpack.c.l.b16 %v388
    %v2329 = vunpack.c.h.b16 %v388
    %v2330 = vunpack.c.l.b16 %v389
    %v2331 = vunpack.c.h.b16 %v389
    %v2332 = vunpack.c.l.b16 %v390
    %v2333 = vunpack.c.h.b16 %v390
    %v2334 = vunpack.c.l.b16 %v391
    %v2335 = vunpack.c.h.b16 %v391
    %v2336 = vunpack.c.l.b16 %v392
    %v2337 = vunpack.c.h.b16 %v392
    %v2338 = vunpack.c.l.b16 %v393
    %v2339 = vunpack.c.h.b16 %v393
    %v2340 = vunpack.c.l.b16 %v394
    %v2341 = vunpack.c.h.b16 %v394
    %v2342 = vunpack.c.l.b16 %v395
    %v2343 = vunpack.c.h.b16 %v395
    %v2344 = vunpack.c.l.b16 %v396
    %v2345 = vunpack.c.h.b16 %v396
    %v2346 = vunpack.c.l.b16 %v397
    %v2347 = vunpack.c.h.b16 %v397
    %v2348 = vunpack.c.l.b16 %v398
    %v2349 = vunpack.c.h.b16 %v398
    %v2350 = vunpack.c.l.b16 %v399
    %v2351 = vunpack.c.h.b16 %v399
    %v2352 = vunpack.c.l.b16 %v400
    %v2353 = vunpack.c.h.b16 %v400
    %v2354 = vunpack.c.l.b16 %v401
    %v2355 = vunpack.c.h.b16 %v401
    %v2356 = vunpack.c.l.b16 %v402
    %v2357 = vunpack.c.h.b16 %v402
    %v2358 = vunpack.c.l.b16 %v403
    %v2359 = vunpack.c.h.b16 %v403
    %v2360 = vunpack.c.l.b16 %v404
    %v2361 = vunpack.c.h.b16 %v404
    %v2362 = vunpack.c.l.b16 %v405
    %v2363 = vunpack.c.h.b16 %v405
    %v2364 = vunpack.c.l.b16 %v406
    %v2365 = vunpack.c.h.b16 %v406
    %v2366 = vunpack.c.l.b16 %v407
    %v2367 = vunpack.c.h.b16 %v407
    %v2368 = vunpack.c.l.b16 %v408
    %v2369 = vunpack.c.h.b16 %v408
    %v2370 = vunpack.c.l.b16 %v409
    %v2371 = vunpack.c.h.b16 %v409
    %v2372 = vunpack.c.l.b16 %v410
    %v2373 = vunpack.c.h.b16 %v410
    %v2374 = vunpack.c.l.b16 %v411
    %v2375 = vunpack.c.h.b16 %v411
    %v2376 = vunpack.c.l.b16 %v412
    %v2377 = vunpack.c.h.b16 %v412
    %v2378 = vunpack.c.l.b16 %v413
    %v2379 = vunpack.c.h.b16 %v413
    %v2380 = vunpack.c.l.b16 %v414
    %v2381 = vunpack.c.h.b16 %v414
    %v2382 = vunpack.c.l.b16 %v415
    %v2383 = vunpack.c.h.b16 %v415
    %v2384 = vunpack.c.l.b16 %v416
    %v2385 = vunpack.c.h.b16 %v416
    %v2386 = vunpack.c.l.b16 %v417
    %v2387 = vunpack.c.h.b16 %v417
    %v2388 = vunpack.c.l.b16 %v418
    %v2389 = vunpack.c.h.b16 %v418
    %v2390 = vunpack.c.l.b16 %v419
    %v2391 = vunpack.c.h.b16 %v419
    %v2392 = vunpack.c.l.b16 %v420
    %v2393 = vunpack.c.h.b16 %v420
    %v2394 = vunpack.c.l.b16 %v421
    %v2395 = vunpack.c.h.b16 %v421
    %v2396 = vunpack.c.l.b16 %v422
    %v2397 = vunpack.c.h.b16 %v422
    %v2398 = vunpack.c.l.b16 %v423
    %v2399 = vunpack.c.h.b16 %v423
    %v2400 = vunpack.c.l.b16 %v424
    %v2401 = vunpack.c.h.b16 %v424
    %v2402 = vunpack.c.l.b16 %v425
    %v2403 = vunpack.c.h.b16 %v425
    %v2404 = vunpack.c.l.b16 %v426
    %v2405 = vunpack.c.h.b16 %v426
    %v2406 = vunpack.c.l.b16 %v427
    %v2407 = vunpack.c.h.b16 %v427
    %v2408 = vunpack.c.l.b16 %v428
    %v2409 = vunpack.c.h.b16 %v428
    %v2410 = vunpack.c.l.b16 %v429
    %v2411 = vunpack.c.h.b16 %v429
    %v2412 = vunpack.c.l.b16 %v430
    %v2413 = vunpack.c.h.b16 %v430
    %v2414 = vunpack.c.l.b16 %v431
    %v2415 = vunpack.c.h.b16 %v431
    %v2416 = vunpack.c.l.b16 %v432
    %v2417 = vunpack.c.h.b16 %v432
    %v2418 = vunpack.c.l.b16 %v433
    %v2419 = vunpack.c.h.b16 %v433
    %v2420 = vunpack.c.l.b16 %v434
    %v2421 = vunpack.c.h.b16 %v434
    %v2422 = vunpack.c.l.b16 %v435
    %v2423 = vunpack.c.h.b16 %v435
    %v2424 = vunpack.c.l.b16 %v436
    %v2425 = vunpack.c.h.b16 %v436
    %v2426 = vunpack.c.l.b16 %v437
    %v2427 = vunpack.c.h.b16 %v437
    %v2428 = vunpack.c.l.b16 %v438
    %v2429 = vunpack.c.h.b16 %v438
    %v2430 = vunpack.c.l.b16 %v439
    %v2431 = vunpack.c.h.b16 %v439
    %v2432 = vunpack.c.l.b16 %v440
    %v2433 = vunpack.c.h.b16 %v440
    %v2434 = vunpack.c.l.b16 %v441
    %v2435 = vunpack.c.h.b16 %v441
    %v2436 = vunpack.c.l.b16 %v442
    %v2437 = vunpack.c.h.b16 %v442
    %v2438 = vunpack.c.l.b16 %v443
    %v2439 = vunpack.c.h.b16 %v443
    %v2440 = vunpack.c.l.b16 %v444
    %v2441 = vunpack.c.h.b16 %v444
    %v2442 = vunpack.c.l.b16 %v445
    %v2443 = vunpack.c.h.b16 %v445
    %v2444 = vunpack.c.l.b16 %v446
    %v2445 = vunpack.c.h.b16 %v446
    %v2446 = vunpack.c.l.b16 %v447
    %v2447 = vunpack.c.h.b16 %v447
    %v2448 = vunpack.c.l.b16 %v448
    %v2449 = vunpack.c.h.b16 %v448
    %v2450 = vunpack.c.l.b16 %v449
    %v2451 = vunpack.c.h.b16 %v449
    %v2452 = vunpack.c.l.b16 %v450
    %v2453 = vunpack.c.h.b16 %v450
    %v2454 = vunpack.c.l.b16 %v451
    %v2455 = vunpack.c.h.b16 %v451
    %v2456 = vunpack.c.l.b16 %v452
    %v2457 = vunpack.c.h.b16 %v452
    %v2458 = vunpack.c.l.b16 %v453
    %v2459 = vunpack.c.h.b16 %v453
    %v2460 = vunpack.c.l.b16 %v454
    %v2461 = vunpack.c.h.b16 %v454
    %v2462 = vunpack.c.l.b16 %v455
    %v2463 = vunpack.c.h.b16 %v455
    %v2464 = vunpack.c.l.b16 %v456
    %v2465 = vunpack.c.h.b16 %v456
    %v2466 = vunpack.c.l.b16 %v457
    %v2467 = vunpack.c.h.b16 %v457
    %v2468 = vunpack.c.l.b16 %v458
    %v2469 = vunpack.c.h.b16 %v458
    %v2470 = vunpack.c.l.b16 %v459
    %v2471 = vunpack.c.h.b16 %v459
    %v2472 = vunpack.c.l.b16 %v460
    %v2473 = vunpack.c.h.b16 %v460
    %v2474 = vunpack.c.l.b16 %v461
    %v2475 = vunpack.c.h.b16 %v461
    %v2476 = vunpack.c.l.b16 %v462
    %v2477 = vunpack.c.h.b16 %v462
    %v2478 = vunpack.c.l.b16 %v463
    %v2479 = vunpack.c.h.b16 %v463
    %v2480 = vunpack.c.l.b16 %v464
    %v2481 = vunpack.c.h.b16 %v464
    %v2482 = vunpack.c.l.b16 %v465
    %v2483 = vunpack.c.h.b16 %v465
    %v2484 = vunpack.c.l.b16 %v466
    %v2485 = vunpack.c.h.b16 %v466
    %v2486 = vunpack.c.l.b16 %v467
    %v2487 = vunpack.c.h.b16 %v467
    %v2488 = vunpack.c.l.b16 %v468
    %v2489 = vunpack.c.h.b16 %v468
    %v2490 = vunpack.c.l.b16 %v469
    %v2491 = vunpack.c.h.b16 %v469
    %v2492 = vunpack.c.l.b16 %v470
    %v2493 = vunpack.c.h.b16 %v470
    %v2494 = vunpack.c.l.b16 %v471
    %v2495 = vunpack.c.h.b16 %v471
    %v2496 = vunpack.c.l.b16 %v472
    %v2497 = vunpack.c.h.b16 %v472
    %v2498 = vunpack.c.l.b16 %v473
    %v2499 = vunpack.c.h.b16 %v473
    %v2500 = vunpack.c.l.b16 %v474
    %v2501 = vunpack.c.h.b16 %v474
    %v2502 = vunpack.c.l.b16 %v475
    %v2503 = vunpack.c.h.b16 %v475
    %v2504 = vunpack.c.l.b16 %v476
    %v2505 = vunpack.c.h.b16 %v476
    %v2506 = vunpack.c.l.b16 %v477
    %v2507 = vunpack.c.h.b16 %v477
    %v2508 = vunpack.c.l.b16 %v478
    %v2509 = vunpack.c.h.b16 %v478
    %v2510 = vunpack.c.l.b16 %v479
    %v2511 = vunpack.c.h.b16 %v479
    %v2512 = vunpack.c.l.b16 %v480
    %v2513 = vunpack.c.h.b16 %v480
    %v2514 = vunpack.c.l.b16 %v481
    %v2515 = vunpack.c.h.b16 %v481
    %v2516 = vunpack.c.l.b16 %v482
    %v2517 = vunpack.c.h.b16 %v482
    %v2518 = vunpack.c.l.b16 %v483
    %v2519 = vunpack.c.h.b16 %v483
    %v2520 = vunpack.c.l.b16 %v484
    %v2521 = vunpack.c.h.b16 %v484
    %v2522 = vunpack.c.l.b16 %v485
    %v2523 = vunpack.c.h.b16 %v485
    %v2524 = vunpack.c.l.b16 %v486
    %v2525 = vunpack.c.h.b16 %v486
    %v2526 = vunpack.c.l.b16 %v487
    %v2527 = vunpack.c.h.b16 %v487
    %v2528 = vunpack.c.l.b16 %v488
    %v2529 = vunpack.c.h.b16 %v488
    %v2530 = vunpack.c.l.b16 %v489
    %v2531 = vunpack.c.h.b16 %v489
    %v2532 = vunpack.c.l.b16 %v490
    %v2533 = vunpack.c.h.b16 %v490
    %v2534 = vunpack.c.l.b16 %v491
    %v2535 = vunpack.c.h.b16 %v491
    %v2536 = vunpack.c.l.b16 %v492
    %v2537 = vunpack.c.h.b16 %v492
    %v2538 = vunpack.c.l.b16 %v493
    %v2539 = vunpack.c.h.b16 %v493
    %v2540 = vunpack.c.l.b16 %v494
    %v2541 = vunpack.c.h.b16 %v494
    %v2542 = vunpack.c.l.b16 %v495
    %v2543 = vunpack.c.h.b16 %v495
    %v2544 = vunpack.c.l.b16 %v496
    %v2545 = vunpack.c.h.b16 %v496
    %v2546 = vunpack.c.l.b16 %v497
    %v2547 = vunpack.c.h.b16 %v497
    %v2548 = vunpack.c.l.b16 %v498
    %v2549 = vunpack.c.h.b16 %v498
    %v2550 = vunpack.c.l.b16 %v499
    %v2551 = vunpack.c.h.b16 %v499
    %v2552 = vunpack.c.l.b16 %v500
    %v2553 = vunpack.c.h.b16 %v500
    %v2554 = vunpack.c.l.b16 %v501
    %v2555 = vunpack.c.h.b16 %v501
    %v2556 = vunpack.c.l.b16 %v502
    %v2557 = vunpack.c.h.b16 %v502
    %v2558 = vunpack.c.l.b16 %v503
    %v2559 = vunpack.c.h.b16 %v503
    %v2560 = vunpack.c.l.b16 %v504
    %v2561 = vunpack.c.h.b16 %v504
    %v2562 = vunpack.c.l.b16 %v505
    %v2563 = vunpack.c.h.b16 %v505
    %v2564 = vunpack.c.l.b16 %v506
    %v2565 = vunpack.c.h.b16 %v506
    %v2566 = vunpack.c.l.b16 %v507
    %v2567 = vunpack.c.h.b16 %v507
    %v2568 = vunpack.c.l.b16 %v508
    %v2569 = vunpack.c.h.b16 %v508
    %v2570 = vunpack.c.l.b16 %v509
    %v2571 = vunpack.c.h.b16 %v509
    %v2572 = vunpack.c.l.b16 %v510
    %v2573 = vunpack.c.h.b16 %v510
    %v2574 = vunpack.c.l.b16 %v511
    %v2575 = vunpack.c.h.b16 %v511
    %v2576 = vunpack.c.l.b16 %v512
    %v2577 = vunpack.c.h.b16 %v512
    %v2578 = vunpack.c.l.b16 %v513
    %v2579 = vunpack.c.h.b16 %v513
    %v2580 = vunpack.c.l.b16 %v514
    %v2581 = vunpack.c.h.b16 %v514
    %v2582 = vunpack.c.l.b16 %v515
    %v2583 = vunpack.c.h.b16 %v515
    %v2584 = vunpack.c.l.b16 %v516
    %v2585 = vunpack.c.h.b16 %v516
    %v2586 = vunpack.c.l.b16 %v517
    %v2587 = vunpack.c.h.b16 %v517
    %v2588 = vunpack.c.l.b16 %v518
    %v2589 = vunpack.c.h.b16 %v518
    %v2590 = vunpack.c.l.b16 %v519
    %v2591 = vunpack.c.h.b16 %v519
    %v2592 = vunpack.c.l.b16 %v520
    %v2593 = vunpack.c.h.b16 %v520
    %v2594 = vunpack.c.l.b16 %v521
    %v2595 = vunpack.c.h.b16 %v521
    %v2596 = vunpack.c.l.b16 %v522
    %v2597 = vunpack.c.h.b16 %v522
    %v2598 = vunpack.c.l.b16 %v523
    %v2599 = vunpack.c.h.b16 %v523
    %v2600 = vunpack.c.l.b16 %v524
    %v2601 = vunpack.c.h.b16 %v524
    %v2602 = vunpack.c.l.b16 %v525
    %v2603 = vunpack.c.h.b16 %v525
    %v2604 = vunpack.c.l.b16 %v526
    %v2605 = vunpack.c.h.b16 %v526
    %v2606 = vunpack.c.l.b16 %v527
    %v2607 = vunpack.c.h.b16 %v527
    %v2608 = vunpack.c.l.b16 %v528
    %v2609 = vunpack.c.h.b16 %v528
    %v2610 = vunpack.c.l.b16 %v529
    %v2611 = vunpack.c.h.b16 %v529
    %v2612 = vunpack.c.l.b16 %v530
    %v2613 = vunpack.c.h.b16 %v530
    %v2614 = vunpack.c.l.b16 %v531
    %v2615 = vunpack.c.h.b16 %v531
    %v2616 = vunpack.c.l.b16 %v532
    %v2617 = vunpack.c.h.b16 %v532
    %v2618 = vunpack.c.l.b16 %v533
    %v2619 = vunpack.c.h.b16 %v533
    %v2620 = vunpack.c.l.b16 %v534
    %v2621 = vunpack.c.h.b16 %v534
    %v2622 = vunpack.c.l.b16 %v535
    %v2623 = vunpack.c.h.b16 %v535
    %v2624 = vunpack.c.l.b16 %v536
    %v2625 = vunpack.c.h.b16 %v536
    %v2626 = vunpack.c.l.b16 %v537
    %v2627 = vunpack.c.h.b16 %v537
    %v2628 = vunpack.c.l.b16 %v538
    %v2629 = vunpack.c.h.b16 %v538
    %v2630 = vunpack.c.l.b16 %v539
    %v2631 = vunpack.c.h.b16 %v539
    %v2632 = vunpack.c.l.b16 %v540
    %v2633 = vunpack.c.h.b16 %v540
    %v2634 = vunpack.c.l.b16 %v541
    %v2635 = vunpack.c.h.b16 %v541
    %v2636 = vunpack.c.l.b16 %v542
    %v2637 = vunpack.c.h.b16 %v542
    %v2638 = vunpack.c.l.b16 %v543
    %v2639 = vunpack.c.h.b16 %v543
    %v2640 = vunpack.c.l.b16 %v544
    %v2641 = vunpack.c.h.b16 %v544
    %v2642 = vunpack.c.l.b16 %v545
    %v2643 = vunpack.c.h.b16 %v545
    %v2644 = vunpack.c.l.b16 %v546
    %v2645 = vunpack.c.h.b16 %v546
    %v2646 = vunpack.c.l.b16 %v547
    %v2647 = vunpack.c.h.b16 %v547
    %v2648 = vunpack.c.l.b16 %v548
    %v2649 = vunpack.c.h.b16 %v548
    %v2650 = vunpack.c.l.b16 %v549
    %v2651 = vunpack.c.h.b16 %v549
    %v2652 = vunpack.c.l.b16 %v550
    %v2653 = vunpack.c.h.b16 %v550
    %v2654 = vunpack.c.l.b16 %v551
    %v2655 = vunpack.c.h.b16 %v551
    %v2656 = vunpack.c.l.b16 %v552
    %v2657 = vunpack.c.h.b16 %v552
    %v2658 = vunpack.c.l.b16 %v553
    %v2659 = vunpack.c.h.b16 %v553
    %v2660 = vunpack.c.l.b16 %v554
    %v2661 = vunpack.c.h.b16 %v554
    %v2662 = vunpack.c.l.b16 %v555
    %v2663 = vunpack.c.h.b16 %v555
    %v2664 = vunpack.c.l.b16 %v556
    %v2665 = vunpack.c.h.b16 %v556
    %v2666 = vunpack.c.l.b16 %v557
    %v2667 = vunpack.c.h.b16 %v557
    %v2668 = vunpack.c.l.b16 %v558
    %v2669 = vunpack.c.h.b16 %v558
    %v2670 = vunpack.c.l.b16 %v559
    %v2671 = vunpack.c.h.b16 %v559
    %v2672 = vunpack.c.l.b16 %v560
    %v2673 = vunpack.c.h.b16 %v560
    %v2674 = vunpack.c.l.b16 %v561
    %v2675 = vunpack.c.h.b16 %v561
    %v2676 = vunpack.c.l.b16 %v562
    %v2677 = vunpack.c.h.b16 %v562
    %v2678 = vunpack.c.l.b16 %v563
    %v2679 = vunpack.c.h.b16 %v563
    %v2680 = vunpack.c.l.b16 %v564
    %v2681 = vunpack.c.h.b16 %v564
    %v2682 = vunpack.c.l.b16 %v565
    %v2683 = vunpack.c.h.b16 %v565
    %v2684 = vunpack.c.l.b16 %v566
    %v2685 = vunpack.c.h.b16 %v566
    %v2686 = vunpack.c.l.b16 %v567
    %v2687 = vunpack.c.h.b16 %v567
    %v2688 = vunpack.c.l.b16 %v568
    %v2689 = vunpack.c.h.b16 %v568
    %v2690 = vunpack.c.l.b16 %v569
    %v2691 = vunpack.c.h.b16 %v569
    %v2692 = vunpack.c.l.b16 %v570
    %v2693 = vunpack.c.h.b16 %v570
    %v2694 = vunpack.c.l.b16 %v571
    %v2695 = vunpack.c.h.b16 %v571
    %v2696 = vunpack.c.l.b16 %v572
    %v2697 = vunpack.c.h.b16 %v572
    %v2698 = vunpack.c.l.b16 %v573
    %v2699 = vunpack.c.h.b16 %v573
    %v2700 = vunpack.c.l.b16 %v574
    %v2701 = vunpack.c.h.b16 %v574
    %v2702 = vunpack.c.l.b16 %v575
    %v2703 = vunpack.c.h.b16 %v575
    %v2704 = vunpack.c.l.b16 %v576
    %v2705 = vunpack.c.h.b16 %v576
    %v2706 = vunpack.c.l.b16 %v577
    %v2707 = vunpack.c.h.b16 %v577
    %v2708 = vunpack.c.l.b16 %v578
    %v2709 = vunpack.c.h.b16 %v578
    %v2710 = vunpack.c.l.b16 %v579
    %v2711 = vunpack.c.h.b16 %v579
    %v2712 = vunpack.c.l.b16 %v580
    %v2713 = vunpack.c.h.b16 %v580
    %v2714 = vunpack.c.l.b16 %v581
    %v2715 = vunpack.c.h.b16 %v581
    %v2716 = vunpack.c.l.b16 %v582
    %v2717 = vunpack.c.h.b16 %v582
    %v2718 = vunpack.c.l.b16 %v583
    %v2719 = vunpack.c.h.b16 %v583
    %v2720 = vunpack.c.l.b16 %v584
    %v2721 = vunpack.c.h.b16 %v584
    %v2722 = vunpack.c.l.b16 %v585
    %v2723 = vunpack.c.h.b16 %v585
    %v2724 = vunpack.c.l.b16 %v586
    %v2725 = vunpack.c.h.b16 %v586
    %v2726 = vunpack.c.l.b16 %v587
    %v2727 = vunpack.c.h.b16 %v587
    %v2728 = vunpack.c.l.b16 %v588
    %v2729 = vunpack.c.h.b16 %v588
    %v2730 = vunpack.c.l.b16 %v589
    %v2731 = vunpack.c.h.b16 %v589
    %v2732 = vunpack.c.l.b16 %v590
    %v2733 = vunpack.c.h.b16 %v590
    %v2734 = vunpack.c.l.b16 %v591
    %v2735 = vunpack.c.h.b16 %v591
    %v2736 = vunpack.c.l.b16 %v592
    %v2737 = vunpack.c.h.b16 %v592
    %v2738 = vunpack.c.l.b16 %v593
    %v2739 = vunpack.c.h.b16 %v593
    %v2740 = vunpack.c.l.b16 %v594
    %v2741 = vunpack.c.h.b16 %v594
    %v2742 = vunpack.c.l.b16 %v595
    %v2743 = vunpack.c.h.b16 %v595
    %v2744 = vunpack.c.l.b16 %v596
    %v2745 = vunpack.c.h.b16 %v596
    %v2746 = vunpack.c.l.b16 %v597
    %v2747 = vunpack.c.h.b16 %v597
    %v2748 = vunpack.c.l.b16 %v598
    %v2749 = vunpack.c.h.b16 %v598
    %v2750 = vunpack.c.l.b16 %v599
    %v2751 = vunpack.c.h.b16 %v599
    %v2752 = vunpack.c.l.b16 %v600
    %v2753 = vunpack.c.h.b16 %v600
    %v2754 = vunpack.c.l.b16 %v601
    %v2755 = vunpack.c.h.b16 %v601
    %v2756 = vunpack.c.l.b16 %v602
    %v2757 = vunpack.c.h.b16 %v602
    %v2758 = vunpack.c.l.b16 %v603
    %v2759 = vunpack.c.h.b16 %v603
    %v2760 = vunpack.c.l.b16 %v604
    %v2761 = vunpack.c.h.b16 %v604
    %v2762 = vunpack.c.l.b16 %v605
    %v2763 = vunpack.c.h.b16 %v605
    %v2764 = vunpack.c.l.b16 %v606
    %v2765 = vunpack.c.h.b16 %v606
    %v2766 = vunpack.c.l.b16 %v607
    %v2767 = vunpack.c.h.b16 %v607
    %v2768 = vunpack.c.l.b16 %v608
    %v2769 = vunpack.c.h.b16 %v608
    %v2770 = vunpack.c.l.b16 %v609
    %v2771 = vunpack.c.h.b16 %v609
    %v2772 = vunpack.c.l.b16 %v610
    %v2773 = vunpack.c.h.b16 %v610
    %v2774 = vunpack.c.l.b16 %v611
    %v2775 = vunpack.c.h.b16 %v611
    %v2776 = vunpack.c.l.b16 %v612
    %v2777 = vunpack.c.h.b16 %v612
    %v2778 = vunpack.c.l.b16 %v613
    %v2779 = vunpack.c.h.b16 %v613
    %v2780 = vunpack.c.l.b16 %v614
    %v2781 = vunpack.c.h.b16 %v614
    %v2782 = vunpack.c.l.b16 %v615
    %v2783 = vunpack.c.h.b16 %v615
    %v2784 = vunpack.c.l.b16 %v616
    %v2785 = vunpack.c.h.b16 %v616
    %v2786 = vunpack.c.l.b16 %v617
    %v2787 = vunpack.c.h.b16 %v617
    %v2788 = vunpack.c.l.b16 %v618
    %v2789 = vunpack.c.h.b16 %v618
    %v2790 = vunpack.c.l.b16 %v619
    %v2791 = vunpack.c.h.b16 %v619
    %v2792 = vunpack.c.l.b16 %v620
    %v2793 = vunpack.c.h.b16 %v620
    %v2794 = vunpack.c.l.b16 %v621
    %v2795 = vunpack.c.h.b16 %v621
    %v2796 = vunpack.c.l.b16 %v622
    %v2797 = vunpack.c.h.b16 %v622
    %v2798 = vunpack.c.l.b16 %v623
    %v2799 = vunpack.c.h.b16 %v623
    %v2800 = vunpack.c.l.b16 %v624
    %v2801 = vunpack.c.h.b16 %v624
    %v2802 = vunpack.c.l.b16 %v625
    %v2803 = vunpack.c.h.b16 %v625
    %v2804 = vunpack.c.l.b16 %v626
    %v2805 = vunpack.c.h.b16 %v626
    %v2806 = vunpack.c.l.b16 %v627
    %v2807 = vunpack.c.h.b16 %v627
    %v2808 = vunpack.c.l.b16 %v628
    %v2809 = vunpack.c.h.b16 %v628
    %v2810 = vunpack.c.l.b16 %v629
    %v2811 = vunpack.c.h.b16 %v629
    %v2812 = vunpack.c.l.b16 %v630
    %v2813 = vunpack.c.h.b16 %v630
    %v2814 = vunpack.c.l.b16 %v631
    %v2815 = vunpack.c.h.b16 %v631
    %v2816 = vunpack.c.l.b16 %v632
    %v2817 = vunpack.c.h.b16 %v632
    %v2818 = vunpack.c.l.b16 %v633
    %v2819 = vunpack.c.h.b16 %v633
    %v2820 = vunpack.c.l.b16 %v634
    %v2821 = vunpack.c.h.b16 %v634
    %v2822 = vunpack.c.l.b16 %v635
    %v2823 = vunpack.c.h.b16 %v635
    %v2824 = vunpack.c.l.b16 %v636
    %v2825 = vunpack.c.h.b16 %v636
    %v2826 = vunpack.c.l.b16 %v637
    %v2827 = vunpack.c.h.b16 %v637
    %v2828 = vunpack.c.l.b16 %v638
    %v2829 = vunpack.c.h.b16 %v638
    %v2830 = vunpack.c.l.b16 %v639
    %v2831 = vunpack.c.h.b16 %v639
    %v2832 = vunpack.c.l.b16 %v640
    %v2833 = vunpack.c.h.b16 %v640
    %v2834 = vunpack.c.l.b16 %v641
    %v2835 = vunpack.c.h.b16 %v641
    %v2836 = vunpack.c.l.b16 %v642
    %v2837 = vunpack.c.h.b16 %v642
    %v2838 = vunpack.c.l.b16 %v643
    %v2839 = vunpack.c.h.b16 %v643
    %v2840 = vunpack.c.l.b16 %v644
    %v2841 = vunpack.c.h.b16 %v644
    %v2842 = vunpack.c.l.b16 %v645
    %v2843 = vunpack.c.h.b16 %v645
    %v2844 = vunpack.c.l.b16 %v646
    %v2845 = vunpack.c.h.b16 %v646
    %v2846 = vunpack.c.l.b16 %v647
    %v2847 = vunpack.c.h.b16 %v647
    %v2848 = vunpack.c.l.b16 %v648
    %v2849 = vunpack.c.h.b16 %v648
    %v2850 = vunpack.c.l.b16 %v649
    %v2851 = vunpack.c.h.b16 %v649
    %v2852 = vunpack.c.l.b16 %v650
    %v2853 = vunpack.c.h.b16 %v650
    %v2854 = vunpack.c.l.b16 %v651
    %v2855 = vunpack.c.h.b16 %v651
    %v2856 = vunpack.c.l.b16 %v652
    %v2857 = vunpack.c.h.b16 %v652
    %v2858 = vunpack.c.l.b16 %v653
    %v2859 = vunpack.c.h.b16 %v653
    %v2860 = vunpack.c.l.b16 %v654
    %v2861 = vunpack.c.h.b16 %v654
    %v2862 = vunpack.c.l.b16 %v655
    %v2863 = vunpack.c.h.b16 %v655
    %v2864 = vunpack.c.l.b16 %v656
    %v2865 = vunpack.c.h.b16 %v656
    %v2866 = vunpack.c.l.b16 %v657
    %v2867 = vunpack.c.h.b16 %v657
    %v2868 = vunpack.c.l.b16 %v658
    %v2869 = vunpack.c.h.b16 %v658
    %v2870 = vunpack.c.l.b16 %v659
    %v2871 = vunpack.c.h.b16 %v659
    %v2872 = vunpack.c.l.b16 %v660
    %v2873 = vunpack.c.h.b16 %v660
    %v2874 = vunpack.c.l.b16 %v661
    %v2875 = vunpack.c.h.b16 %v661
    %v2876 = vunpack.c.l.b16 %v662
    %v2877 = vunpack.c.h.b16 %v662
    %v2878 = vunpack.c.l.b16 %v663
    %v2879 = vunpack.c.h.b16 %v663
    %v2880 = vunpack.c.l.b16 %v664
    %v2881 = vunpack.c.h.b16 %v664
    %v2882 = vunpack.c.l.b16 %v665
    %v2883 = vunpack.c.h.b16 %v665
    %v2884 = vunpack.c.l.b16 %v666
    %v2885 = vunpack.c.h.b16 %v666
    %v2886 = vunpack.c.l.b16 %v667
    %v2887 = vunpack.c.h.b16 %v667
    %v2888 = vunpack.c.l.b16 %v668
    %v2889 = vunpack.c.h.b16 %v668
    %v2890 = vunpack.c.l.b16 %v669
    %v2891 = vunpack.c.h.b16 %v669
    %v2892 = vunpack.c.l.b16 %v670
    %v2893 = vunpack.c.h.b16 %v670
    %v2894 = vunpack.c.l.b16 %v671
    %v2895 = vunpack.c.h.b16 %v671
    %v2896 = vunpack.c.l.b16 %v672
    %v2897 = vunpack.c.h.b16 %v672
    %v2898 = vunpack.c.l.b16 %v673
    %v2899 = vunpack.c.h.b16 %v673
    %v2900 = vunpack.c.l.b16 %v674
    %v2901 = vunpack.c.h.b16 %v674
    %v2902 = vunpack.c.l.b16 %v675
    %v2903 = vunpack.c.h.b16 %v675
    %v2904 = vunpack.c.l.b16 %v676
    %v2905 = vunpack.c.h.b16 %v676
    %v2906 = vunpack.c.l.b16 %v677
    %v2907 = vunpack.c.h.b16 %v677
    %v2908 = vunpack.c.l.b16 %v678
    %v2909 = vunpack.c.h.b16 %v678
    %v2910 = vunpack.c.l.b16 %v679
    %v2911 = vunpack.c.h.b16 %v679
    %v2912 = vunpack.c.l.b16 %v680
    %v2913 = vunpack.c.h.b16 %v680
    %v2914 = vunpack.c.l.b16 %v681
    %v2915 = vunpack.c.h.b16 %v681
    %v2916 = vunpack.c.l.b16 %v682
    %v2917 = vunpack.c.h.b16 %v682
    %v2918 = vunpack.c.l.b16 %v683
    %v2919 = vunpack.c.h.b16 %v683
    %v2920 = vunpack.c.l.b16 %v684
    %v2921 = vunpack.c.h.b16 %v684
    %v2922 = vunpack.c.l.b16 %v685
    %v2923 = vunpack.c.h.b16 %v685
    %v2924 = vunpack.c.l.b16 %v686
    %v2925 = vunpack.c.h.b16 %v686
    %v2926 = vunpack.c.l.b16 %v687
    %v2927 = vunpack.c.h.b16 %v687
    %v2928 = vunpack.c.l.b16 %v688
    %v2929 = vunpack.c.h.b16 %v688
    %v2930 = vunpack.c.l.b16 %v689
    %v2931 = vunpack.c.h.b16 %v689
    %v2932 = vunpack.c.l.b16 %v690
    %v2933 = vunpack.c.h.b16 %v690
    %v2934 = vunpack.c.l.b16 %v691
    %v2935 = vunpack.c.h.b16 %v691
    %v2936 = vunpack.c.l.b16 %v692
    %v2937 = vunpack.c.h.b16 %v692
    %v2938 = vunpack.c.l.b16 %v693
    %v2939 = vunpack.c.h.b16 %v693
    %v2940 = vunpack.c.l.b16 %v694
    %v2941 = vunpack.c.h.b16 %v694
    %v2942 = vunpack.c.l.b16 %v695
    %v2943 = vunpack.c.h.b16 %v695
    %v2944 = vunpack.c.l.b16 %v696
    %v2945 = vunpack.c.h.b16 %v696
    %v2946 = vunpack.c.l.b16 %v697
    %v2947 = vunpack.c.h.b16 %v697
    %v2948 = vunpack.c.l.b16 %v698
    %v2949 = vunpack.c.h.b16 %v698
    %v2950 = vunpack.c.l.b16 %v699
    %v2951 = vunpack.c.h.b16 %v699
    %v2952 = vunpack.c.l.b16 %v700
    %v2953 = vunpack.c.h.b16 %v700
    %v2954 = vunpack.c.l.b16 %v701
    %v2955 = vunpack.c.h.b16 %v701
    %v2956 = vunpack.c.l.b16 %v702
    %v2957 = vunpack.c.h.b16 %v702
    %v2958 = vunpack.c.l.b16 %v703
    %v2959 = vunpack.c.h.b16 %v703
    %v2960 = vunpack.c.l.b16 %v704
    %v2961 = vunpack.c.h.b16 %v704
    %v2962 = vunpack.c.l.b16 %v705
    %v2963 = vunpack.c.h.b16 %v705
    %v2964 = vunpack.c.l.b16 %v706
    %v2965 = vunpack.c.h.b16 %v706
    %v2966 = vunpack.c.l.b16 %v707
    %v2967 = vunpack.c.h.b16 %v707
    %v2968 = vunpack.c.l.b16 %v708
    %v2969 = vunpack.c.h.b16 %v708
    %v2970 = vunpack.c.l.b16 %v709
    %v2971 = vunpack.c.h.b16 %v709
    %v2972 = vunpack.c.l.b16 %v710
    %v2973 = vunpack.c.h.b16 %v710
    %v2974 = vunpack.c.l.b16 %v711
    %v2975 = vunpack.c.h.b16 %v711
    %v2976 = vunpack.c.l.b16 %v712
    %v2977 = vunpack.c.h.b16 %v712
    %v2978 = vunpack.c.l.b16 %v713
    %v2979 = vunpack.c.h.b16 %v713
    %v2980 = vunpack.c.l.b16 %v714
    %v2981 = vunpack.c.h.b16 %v714
    %v2982 = vunpack.c.l.b16 %v715
    %v2983 = vunpack.c.h.b16 %v715
    %v2984 = vunpack.c.l.b16 %v716
    %v2985 = vunpack.c.h.b16 %v716
    %v2986 = vunpack.c.l.b16 %v717
    %v2987 = vunpack.c.h.b16 %v717
    %v2988 = vunpack.c.l.b16 %v718
    %v2989 = vunpack.c.h.b16 %v718
    %v2990 = vunpack.c.l.b16 %v719
    %v2991 = vunpack.c.h.b16 %v719
    %v2992 = vunpack.c.l.b16 %v720
    %v2993 = vunpack.c.h.b16 %v720
    %v2994 = vunpack.c.l.b16 %v721
    %v2995 = vunpack.c.h.b16 %v721
    %v2996 = vunpack.c.l.b16 %v722
    %v2997 = vunpack.c.h.b16 %v722
    %v2998 = vunpack.c.l.b16 %v723
    %v2999 = vunpack.c.h.b16 %v723
    %v3000 = vunpack.c.l.b16 %v724
    %v3001 = vunpack.c.h.b16 %v724
    %v3002 = vunpack.c.l.b16 %v725
    %v3003 = vunpack.c.h.b16 %v725
    %v3004 = vunpack.c.l.b16 %v726
    %v3005 = vunpack.c.h.b16 %v726
    %v3006 = vunpack.c.l.b16 %v727
    %v3007 = vunpack.c.h.b16 %v727
    %v3008 = vunpack.c.l.b16 %v728
    %v3009 = vunpack.c.h.b16 %v728
    %v3010 = vunpack.c.l.b16 %v729
    %v3011 = vunpack.c.h.b16 %v729
    %v3012 = vunpack.c.l.b16 %v730
    %v3013 = vunpack.c.h.b16 %v730
    %v3014 = vunpack.c.l.b16 %v731
    %v3015 = vunpack.c.h.b16 %v731
    %v3016 = vunpack.c.l.b16 %v732
    %v3017 = vunpack.c.h.b16 %v732
    %v3018 = vunpack.c.l.b16 %v733
    %v3019 = vunpack.c.h.b16 %v733
    %v3020 = vunpack.c.l.b16 %v734
    %v3021 = vunpack.c.h.b16 %v734
    %v3022 = vunpack.c.l.b16 %v735
    %v3023 = vunpack.c.h.b16 %v735
    %v3024 = vunpack.c.l.b16 %v736
    %v3025 = vunpack.c.h.b16 %v736
    %v3026 = vunpack.c.l.b16 %v737
    %v3027 = vunpack.c.h.b16 %v737
    %v3028 = vunpack.c.l.b16 %v738
    %v3029 = vunpack.c.h.b16 %v738
    %v3030 = vunpack.c.l.b16 %v739
    %v3031 = vunpack.c.h.b16 %v739
    %v3032 = vunpack.c.l.b16 %v740
    %v3033 = vunpack.c.h.b16 %v740
    %v3034 = vunpack.c.l.b16 %v741
    %v3035 = vunpack.c.h.b16 %v741
    %v3036 = vunpack.c.l.b16 %v742
    %v3037 = vunpack.c.h.b16 %v742
    %v3038 = vunpack.c.l.b16 %v743
    %v3039 = vunpack.c.h.b16 %v743
    %v3040 = vunpack.c.l.b16 %v744
    %v3041 = vunpack.c.h.b16 %v744
    %v3042 = vunpack.c.l.b16 %v745
    %v3043 = vunpack.c.h.b16 %v745
    %v3044 = vunpack.c.l.b16 %v746
    %v3045 = vunpack.c.h.b16 %v746
    %v3046 = vunpack.c.l.b16 %v747
    %v3047 = vunpack.c.h.b16 %v747
    %v3048 = vunpack.c.l.b16 %v748
    %v3049 = vunpack.c.h.b16 %v748
    %v3050 = vunpack.c.l.b16 %v749
    %v3051 = vunpack.c.h.b16 %v749
    %v3052 = vunpack.c.l.b16 %v750
    %v3053 = vunpack.c.h.b16 %v750
    %v3054 = vunpack.c.l.b16 %v751
    %v3055 = vunpack.c.h.b16 %v751
    %v3056 = vunpack.c.l.b16 %v752
    %v3057 = vunpack.c.h.b16 %v752
    %v3058 = vunpack.c.l.b16 %v753
    %v3059 = vunpack.c.h.b16 %v753
    %v3060 = vunpack.c.l.b16 %v754
    %v3061 = vunpack.c.h.b16 %v754
    %v3062 = vunpack.c.l.b16 %v755
    %v3063 = vunpack.c.h.b16 %v755
    %v3064 = vunpack.c.l.b16 %v756
    %v3065 = vunpack.c.h.b16 %v756
    %v3066 = vunpack.c.l.b16 %v757
    %v3067 = vunpack.c.h.b16 %v757
    %v3068 = vunpack.c.l.b16 %v758
    %v3069 = vunpack.c.h.b16 %v758
    %v3070 = vunpack.c.l.b16 %v759
    %v3071 = vunpack.c.h.b16 %v759
    %v3072 = vunpack.c.l.b16 %v760
    %v3073 = vunpack.c.h.b16 %v760
    %v3074 = vunpack.c.l.b16 %v761
    %v3075 = vunpack.c.h.b16 %v761
    %v3076 = vunpack.c.l.b16 %v762
    %v3077 = vunpack.c.h.b16 %v762
    %v3078 = vunpack.c.l.b16 %v763
    %v3079 = vunpack.c.h.b16 %v763
    %v3080 = vunpack.c.l.b16 %v764
    %v3081 = vunpack.c.h.b16 %v764
    %v3082 = vunpack.c.l.b16 %v765
    %v3083 = vunpack.c.h.b16 %v765
    %v3084 = vunpack.c.l.b16 %v766
    %v3085 = vunpack.c.h.b16 %v766
    %v3086 = vunpack.c.l.b16 %v767
    %v3087 = vunpack.c.h.b16 %v767
    %v3088 = vunpack.c.l.b16 %v768
    %v3089 = vunpack.c.h.b16 %v768
    %v3090 = vunpack.c.l.b16 %v769
    %v3091 = vunpack.c.h.b16 %v769
    %v3092 = vunpack.c.l.b16 %v770
    %v3093 = vunpack.c.h.b16 %v770
    %v3094 = vunpack.c.l.b16 %v771
    %v3095 = vunpack.c.h.b16 %v771
    %v3096 = vunpack.c.l.b16 %v772
    %v3097 = vunpack.c.h.b16 %v772
    %v3098 = vunpack.c.l.b16 %v773
    %v3099 = vunpack.c.h.b16 %v773
    %v3100 = vunpack.c.l.b16 %v774
    %v3101 = vunpack.c.h.b16 %v774
    %v3102 = vunpack.c.l.b16 %v775
    %v3103 = vunpack.c.h.b16 %v775
    %v3104 = vunpack.c.l.b16 %v776
    %v3105 = vunpack.c.h.b16 %v776
    %v3106 = vunpack.c.l.b16 %v777
    %v3107 = vunpack.c.h.b16 %v777
    %v3108 = vunpack.c.l.b16 %v778
    %v3109 = vunpack.c.h.b16 %v778
    %v3110 = vunpack.c.l.b16 %v779
    %v3111 = vunpack.c.h.b16 %v779
    %v3112 = vunpack.c.l.b16 %v780
    %v3113 = vunpack.c.h.b16 %v780
    %v3114 = vunpack.c.l.b16 %v781
    %v3115 = vunpack.c.h.b16 %v781
    %v3116 = vunpack.c.l.b16 %v782
    %v3117 = vunpack.c.h.b16 %v782
    %v3118 = vunpack.c.l.b16 %v783
    %v3119 = vunpack.c.h.b16 %v783
    %v3120 = vunpack.c.l.b16 %v784
    %v3121 = vunpack.c.h.b16 %v784
    %v3122 = vunpack.c.l.b16 %v785
    %v3123 = vunpack.c.h.b16 %v785
    %v3124 = vunpack.c.l.b16 %v786
    %v3125 = vunpack.c.h.b16 %v786
    %v3126 = vunpack.c.l.b16 %v787
    %v3127 = vunpack.c.h.b16 %v787
    %v3128 = vunpack.c.l.b16 %v788
    %v3129 = vunpack.c.h.b16 %v788
    %v3130 = vunpack.c.l.b16 %v789
    %v3131 = vunpack.c.h.b16 %v789
    %v3132 = vunpack.c.l.b16 %v790
    %v3133 = vunpack.c.h.b16 %v790
    %v3134 = vunpack.c.l.b16 %v791
    %v3135 = vunpack.c.h.b16 %v791
    %v3136 = vunpack.c.l.b16 %v792
    %v3137 = vunpack.c.h.b16 %v792
    %v3138 = vunpack.c.l.b16 %v793
    %v3139 = vunpack.c.h.b16 %v793
    %v3140 = vunpack.c.l.b16 %v794
    %v3141 = vunpack.c.h.b16 %v794
    %v3142 = vunpack.c.l.b16 %v795
    %v3143 = vunpack.c.h.b16 %v795
    %v3144 = vunpack.c.l.b16 %v796
    %v3145 = vunpack.c.h.b16 %v796
    %v3146 = vunpack.c.l.b16 %v797
    %v3147 = vunpack.c.h.b16 %v797
    %v3148 = vunpack.c.l.b16 %v798
    %v3149 = vunpack.c.h.b16 %v798
    %v3150 = vunpack.c.l.b16 %v799
    %v3151 = vunpack.c.h.b16 %v799
    %v3152 = vunpack.c.l.b16 %v800
    %v3153 = vunpack.c.h.b16 %v800
    %v3154 = vunpack.c.l.b16 %v801
    %v3155 = vunpack.c.h.b16 %v801
    %v3156 = vunpack.c.l.b16 %v802
    %v3157 = vunpack.c.h.b16 %v802
    %v3158 = vunpack.c.l.b16 %v803
    %v3159 = vunpack.c.h.b16 %v803
    %v3160 = vunpack.c.l.b16 %v804
    %v3161 = vunpack.c.h.b16 %v804
    %v3162 = vunpack.c.l.b16 %v805
    %v3163 = vunpack.c.h.b16 %v805
    %v3164 = vunpack.c.l.b16 %v806
    %v3165 = vunpack.c.h.b16 %v806
    %v3166 = vunpack.c.l.b16 %v807
    %v3167 = vunpack.c.h.b16 %v807
    %v3168 = vunpack.c.l.b16 %v808
    %v3169 = vunpack.c.h.b16 %v808
    %v3170 = vunpack.c.l.b16 %v809
    %v3171 = vunpack.c.h.b16 %v809
    %v3172 = vunpack.c.l.b16 %v810
    %v3173 = vunpack.c.h.b16 %v810
    %v3174 = vunpack.c.l.b16 %v811
    %v3175 = vunpack.c.h.b16 %v811
    %v3176 = vunpack.c.l.b16 %v812
    %v3177 = vunpack.c.h.b16 %v812
    %v3178 = vunpack.c.l.b16 %v813
    %v3179 = vunpack.c.h.b16 %v813
    %v3180 = vunpack.c.l.b16 %v814
    %v3181 = vunpack.c.h.b16 %v814
    %v3182 = vunpack.c.l.b16 %v815
    %v3183 = vunpack.c.h.b16 %v815
    %v3184 = vunpack.c.l.b16 %v816
    %v3185 = vunpack.c.h.b16 %v816
    %v3186 = vunpack.c.l.b16 %v817
    %v3187 = vunpack.c.h.b16 %v817
    %v3188 = vunpack.c.l.b16 %v818
    %v3189 = vunpack.c.h.b16 %v818
    %v3190 = vunpack.c.l.b16 %v819
    %v3191 = vunpack.c.h.b16 %v819
    %v3192 = vunpack.c.l.b16 %v820
    %v3193 = vunpack.c.h.b16 %v820
    %v3194 = vunpack.c.l.b16 %v821
    %v3195 = vunpack.c.h.b16 %v821
    %v3196 = vunpack.c.l.b16 %v822
    %v3197 = vunpack.c.h.b16 %v822
    %v3198 = vunpack.c.l.b16 %v823
    %v3199 = vunpack.c.h.b16 %v823
    %v3200 = vunpack.c.l.b16 %v824
    %v3201 = vunpack.c.h.b16 %v824
    %v3202 = vunpack.c.l.b16 %v825
    %v3203 = vunpack.c.h.b16 %v825
    %v3204 = vunpack.c.l.b16 %v826
    %v3205 = vunpack.c.h.b16 %v826
    %v3206 = vunpack.c.l.b16 %v827
    %v3207 = vunpack.c.h.b16 %v827
    %v3208 = vunpack.c.l.b16 %v828
    %v3209 = vunpack.c.h.b16 %v828
    %v3210 = vunpack.c.l.b16 %v829
    %v3211 = vunpack.c.h.b16 %v829
    %v3212 = vunpack.c.l.b16 %v830
    %v3213 = vunpack.c.h.b16 %v830
    %v3214 = vunpack.c.l.b16 %v831
    %v3215 = vunpack.c.h.b16 %v831
    %v3216 = vunpack.c.l.b16 %v832
    %v3217 = vunpack.c.h.b16 %v832
    %v3218 = vunpack.c.l.b16 %v833
    %v3219 = vunpack.c.h.b16 %v833
    %v3220 = vunpack.c.l.b16 %v834
    %v3221 = vunpack.c.h.b16 %v834
    %v3222 = vunpack.c.l.b16 %v835
    %v3223 = vunpack.c.h.b16 %v835
    %v3224 = vunpack.c.l.b16 %v836
    %v3225 = vunpack.c.h.b16 %v836
    %v3226 = vunpack.c.l.b16 %v837
    %v3227 = vunpack.c.h.b16 %v837
    %v3228 = vunpack.c.l.b16 %v838
    %v3229 = vunpack.c.h.b16 %v838
    %v3230 = vunpack.c.l.b16 %v839
    %v3231 = vunpack.c.h.b16 %v839
    %v3232 = vunpack.c.l.b16 %v840
    %v3233 = vunpack.c.h.b16 %v840
    %v3234 = vunpack.c.l.b16 %v841
    %v3235 = vunpack.c.h.b16 %v841
    %v3236 = vunpack.c.l.b16 %v842
    %v3237 = vunpack.c.h.b16 %v842
    %v3238 = vunpack.c.l.b16 %v843
    %v3239 = vunpack.c.h.b16 %v843
    %v3240 = vunpack.c.l.b16 %v844
    %v3241 = vunpack.c.h.b16 %v844
    %v3242 = vunpack.c.l.b16 %v845
    %v3243 = vunpack.c.h.b16 %v845
    %v3244 = vunpack.c.l.b16 %v846
    %v3245 = vunpack.c.h.b16 %v846
    %v3246 = vunpack.c.l.b16 %v847
    %v3247 = vunpack.c.h.b16 %v847
    %v3248 = vunpack.c.l.b16 %v848
    %v3249 = vunpack.c.h.b16 %v848
    %v3250 = vunpack.c.l.b16 %v849
    %v3251 = vunpack.c.h.b16 %v849
    %v3252 = vunpack.c.l.b16 %v850
    %v3253 = vunpack.c.h.b16 %v850
    %v3254 = vunpack.c.l.b16 %v851
    %v3255 = vunpack.c.h.b16 %v851
    %v3256 = vunpack.c.l.b16 %v852
    %v3257 = vunpack.c.h.b16 %v852
    %v3258 = vunpack.c.l.b16 %v853
    %v3259 = vunpack.c.h.b16 %v853
    %v3260 = vunpack.c.l.b16 %v854
    %v3261 = vunpack.c.h.b16 %v854
    %v3262 = vunpack.c.l.b16 %v855
    %v3263 = vunpack.c.h.b16 %v855
    %v3264 = vunpack.c.l.b16 %v856
    %v3265 = vunpack.c.h.b16 %v856
    %v3266 = vunpack.c.l.b16 %v857
    %v3267 = vunpack.c.h.b16 %v857
    %v3268 = vunpack.c.l.b16 %v858
    %v3269 = vunpack.c.h.b16 %v858
    %v3270 = vunpack.c.l.b16 %v859
    %v3271 = vunpack.c.h.b16 %v859
    %v3272 = vunpack.c.l.b16 %v860
    %v3273 = vunpack.c.h.b16 %v860
    %v3274 = vunpack.c.l.b16 %v861
    %v3275 = vunpack.c.h.b16 %v861
    %v3276 = vunpack.c.l.b16 %v862
    %v3277 = vunpack.c.h.b16 %v862
    %v3278 = vunpack.c.l.b16 %v863
    %v3279 = vunpack.c.h.b16 %v863
    %v3280 = vunpack.c.l.b16 %v864
    %v3281 = vunpack.c.h.b16 %v864
    %v3282 = vunpack.c.l.b16 %v865
    %v3283 = vunpack.c.h.b16 %v865
    %v3284 = vunpack.c.l.b16 %v866
    %v3285 = vunpack.c.h.b16 %v866
    %v3286 = vunpack.c.l.b16 %v867
    %v3287 = vunpack.c.h.b16 %v867
    %v3288 = vunpack.c.l.b16 %v868
    %v3289 = vunpack.c.h.b16 %v868
    %v3290 = vunpack.c.l.b16 %v869
    %v3291 = vunpack.c.h.b16 %v869
    %v3292 = vunpack.c.l.b16 %v870
    %v3293 = vunpack.c.h.b16 %v870
    %v3294 = vunpack.c.l.b16 %v871
    %v3295 = vunpack.c.h.b16 %v871
    %v3296 = vunpack.c.l.b16 %v872
    %v3297 = vunpack.c.h.b16 %v872
    %v3298 = vunpack.c.l.b16 %v873
    %v3299 = vunpack.c.h.b16 %v873
    %v3300 = vunpack.c.l.b16 %v874
    %v3301 = vunpack.c.h.b16 %v874
    %v3302 = vunpack.c.l.b16 %v875
    %v3303 = vunpack.c.h.b16 %v875
    %v3304 = vunpack.c.l.b16 %v876
    %v3305 = vunpack.c.h.b16 %v876
    %v3306 = vunpack.c.l.b16 %v877
    %v3307 = vunpack.c.h.b16 %v877
    %v3308 = vunpack.c.l.b16 %v878
    %v3309 = vunpack.c.h.b16 %v878
    %v3310 = vunpack.c.l.b16 %v879
    %v3311 = vunpack.c.h.b16 %v879
    %v3312 = vunpack.c.l.b16 %v880
    %v3313 = vunpack.c.h.b16 %v880
    %v3314 = vunpack.c.l.b16 %v881
    %v3315 = vunpack.c.h.b16 %v881
    %v3316 = vunpack.c.l.b16 %v882
    %v3317 = vunpack.c.h.b16 %v882
    %v3318 = vunpack.c.l.b16 %v883
    %v3319 = vunpack.c.h.b16 %v883
    %v3320 = vunpack.c.l.b16 %v884
    %v3321 = vunpack.c.h.b16 %v884
    %v3322 = vunpack.c.l.b16 %v885
    %v3323 = vunpack.c.h.b16 %v885
    %v3324 = vunpack.c.l.b16 %v886
    %v3325 = vunpack.c.h.b16 %v886
    %v3326 = vunpack.c.l.b16 %v887
    %v3327 = vunpack.c.h.b16 %v887
    %v3328 = vunpack.c.l.b16 %v888
    %v3329 = vunpack.c.h.b16 %v888
    %v3330 = vunpack.c.l.b16 %v889
    %v3331 = vunpack.c.h.b16 %v889
    %v3332 = vunpack.c.l.b16 %v890
    %v3333 = vunpack.c.h.b16 %v890
    %v3334 = vunpack.c.l.b16 %v891
    %v3335 = vunpack.c.h.b16 %v891
    %v3336 = vunpack.c.l.b16 %v892
    %v3337 = vunpack.c.h.b16 %v892
    %v3338 = vunpack.c.l.b16 %v893
    %v3339 = vunpack.c.h.b16 %v893
    %v3340 = vunpack.c.l.b16 %v894
    %v3341 = vunpack.c.h.b16 %v894
    %v3342 = vunpack.c.l.b16 %v895
    %v3343 = vunpack.c.h.b16 %v895
    %v3344 = vunpack.c.l.b16 %v896
    %v3345 = vunpack.c.h.b16 %v896
    %v3346 = vunpack.c.l.b16 %v897
    %v3347 = vunpack.c.h.b16 %v897
    %v3348 = vunpack.c.l.b16 %v898
    %v3349 = vunpack.c.h.b16 %v898
    %v3350 = vunpack.c.l.b16 %v899
    %v3351 = vunpack.c.h.b16 %v899
    %v3352 = vunpack.c.l.b16 %v900
    %v3353 = vunpack.c.h.b16 %v900
    %v3354 = vunpack.c.l.b16 %v901
    %v3355 = vunpack.c.h.b16 %v901
    %v3356 = vunpack.c.l.b16 %v902
    %v3357 = vunpack.c.h.b16 %v902
    %v3358 = vunpack.c.l.b16 %v903
    %v3359 = vunpack.c.h.b16 %v903
    %v3360 = vunpack.c.l.b16 %v904
    %v3361 = vunpack.c.h.b16 %v904
    %v3362 = vunpack.c.l.b16 %v905
    %v3363 = vunpack.c.h.b16 %v905
    %v3364 = vunpack.c.l.b16 %v906
    %v3365 = vunpack.c.h.b16 %v906
    %v3366 = vunpack.c.l.b16 %v907
    %v3367 = vunpack.c.h.b16 %v907
    %v3368 = vunpack.c.l.b16 %v908
    %v3369 = vunpack.c.h.b16 %v908
    %v3370 = vunpack.c.l.b16 %v909
    %v3371 = vunpack.c.h.b16 %v909
    %v3372 = vunpack.c.l.b16 %v910
    %v3373 = vunpack.c.h.b16 %v910
    %v3374 = vunpack.c.l.b16 %v911
    %v3375 = vunpack.c.h.b16 %v911
    %v3376 = vunpack.c.l.b16 %v912
    %v3377 = vunpack.c.h.b16 %v912
    %v3378 = vunpack.c.l.b16 %v913
    %v3379 = vunpack.c.h.b16 %v913
    %v3380 = vunpack.c.l.b16 %v914
    %v3381 = vunpack.c.h.b16 %v914
    %v3382 = vunpack.c.l.b16 %v915
    %v3383 = vunpack.c.h.b16 %v915
    %v3384 = vunpack.c.l.b16 %v916
    %v3385 = vunpack.c.h.b16 %v916
    %v3386 = vunpack.c.l.b16 %v917
    %v3387 = vunpack.c.h.b16 %v917
    %v3388 = vunpack.c.l.b16 %v918
    %v3389 = vunpack.c.h.b16 %v918
    %v3390 = vunpack.c.l.b16 %v919
    %v3391 = vunpack.c.h.b16 %v919
    %v3392 = vunpack.c.l.b16 %v920
    %v3393 = vunpack.c.h.b16 %v920
    %v3394 = vunpack.c.l.b16 %v921
    %v3395 = vunpack.c.h.b16 %v921
    %v3396 = vunpack.c.l.b16 %v922
    %v3397 = vunpack.c.h.b16 %v922
    %v3398 = vunpack.c.l.b16 %v923
    %v3399 = vunpack.c.h.b16 %v923
    %v3400 = vunpack.c.l.b16 %v924
    %v3401 = vunpack.c.h.b16 %v924
    %v3402 = vunpack.c.l.b16 %v925
    %v3403 = vunpack.c.h.b16 %v925
    %v3404 = vunpack.c.l.b16 %v926
    %v3405 = vunpack.c.h.b16 %v926
    %v3406 = vunpack.c.l.b16 %v927
    %v3407 = vunpack.c.h.b16 %v927
    %v3408 = vunpack.c.l.b16 %v928
    %v3409 = vunpack.c.h.b16 %v928
    %v3410 = vunpack.c.l.b16 %v929
    %v3411 = vunpack.c.h.b16 %v929
    %v3412 = vunpack.c.l.b16 %v930
    %v3413 = vunpack.c.h.b16 %v930
    %v3414 = vunpack.c.l.b16 %v931
    %v3415 = vunpack.c.h.b16 %v931
    %v3416 = vunpack.c.l.b16 %v932
    %v3417 = vunpack.c.h.b16 %v932
    %v3418 = vunpack.c.l.b16 %v933
    %v3419 = vunpack.c.h.b16 %v933
    %v3420 = vunpack.c.l.b16 %v934
    %v3421 = vunpack.c.h.b16 %v934
    %v3422 = vunpack.c.l.b16 %v935
    %v3423 = vunpack.c.h.b16 %v935
    %v3424 = vunpack.c.l.b16 %v936
    %v3425 = vunpack.c.h.b16 %v936
    %v3426 = vunpack.c.l.b16 %v937
    %v3427 = vunpack.c.h.b16 %v937
    %v3428 = vunpack.c.l.b16 %v938
    %v3429 = vunpack.c.h.b16 %v938
    %v3430 = vunpack.c.l.b16 %v939
    %v3431 = vunpack.c.h.b16 %v939
    %v3432 = vunpack.c.l.b16 %v940
    %v3433 = vunpack.c.h.b16 %v940
    %v3434 = vunpack.c.l.b16 %v941
    %v3435 = vunpack.c.h.b16 %v941
    %v3436 = vunpack.c.l.b16 %v942
    %v3437 = vunpack.c.h.b16 %v942
    %v3438 = vunpack.c.l.b16 %v943
    %v3439 = vunpack.c.h.b16 %v943
    %v3440 = vunpack.c.l.b16 %v944
    %v3441 = vunpack.c.h.b16 %v944
    %v3442 = vunpack.c.l.b16 %v945
    %v3443 = vunpack.c.h.b16 %v945
    %v3444 = vunpack.c.l.b16 %v946
    %v3445 = vunpack.c.h.b16 %v946
    %v3446 = vunpack.c.l.b16 %v947
    %v3447 = vunpack.c.h.b16 %v947
    %v3448 = vunpack.c.l.b16 %v948
    %v3449 = vunpack.c.h.b16 %v948
    %v3450 = vunpack.c.l.b16 %v949
    %v3451 = vunpack.c.h.b16 %v949
    %v3452 = vunpack.c.l.b16 %v950
    %v3453 = vunpack.c.h.b16 %v950
    %v3454 = vunpack.c.l.b16 %v951
    %v3455 = vunpack.c.h.b16 %v951
    %v3456 = vunpack.c.l.b16 %v952
    %v3457 = vunpack.c.h.b16 %v952
    %v3458 = vunpack.c.l.b16 %v953
    %v3459 = vunpack.c.h.b16 %v953
    %v3460 = vunpack.c.l.b16 %v954
    %v3461 = vunpack.c.h.b16 %v954
    %v3462 = vunpack.c.l.b16 %v955
    %v3463 = vunpack.c.h.b16 %v955
    %v3464 = vunpack.c.l.b16 %v956
    %v3465 = vunpack.c.h.b16 %v956
    %v3466 = vunpack.c.l.b16 %v957
    %v3467 = vunpack.c.h.b16 %v957
    %v3468 = vunpack.c.l.b16 %v958
    %v3469 = vunpack.c.h.b16 %v958
    %v3470 = vunpack.c.l.b16 %v959
    %v3471 = vunpack.c.h.b16 %v959
    %v3472 = vunpack.c.l.b16 %v960
    %v3473 = vunpack.c.h.b16 %v960
    %v3474 = vunpack.c.l.b16 %v961
    %v3475 = vunpack.c.h.b16 %v961
    %v3476 = vunpack.c.l.b16 %v962
    %v3477 = vunpack.c.h.b16 %v962
    %v3478 = vunpack.c.l.b16 %v963
    %v3479 = vunpack.c.h.b16 %v963
    %v3480 = vunpack.c.l.b16 %v964
    %v3481 = vunpack.c.h.b16 %v964
    %v3482 = vunpack.c.l.b16 %v965
    %v3483 = vunpack.c.h.b16 %v965
    %v3484 = vunpack.c.l.b16 %v966
    %v3485 = vunpack.c.h.b16 %v966
    %v3486 = vunpack.c.l.b16 %v967
    %v3487 = vunpack.c.h.b16 %v967
    %v3488 = vunpack.c.l.b16 %v968
    %v3489 = vunpack.c.h.b16 %v968
    %v3490 = vunpack.c.l.b16 %v969
    %v3491 = vunpack.c.h.b16 %v969
    %v3492 = vunpack.c.l.b16 %v970
    %v3493 = vunpack.c.h.b16 %v970
    %v3494 = vunpack.c.l.b16 %v971
    %v3495 = vunpack.c.h.b16 %v971
    %v3496 = vunpack.c.l.b16 %v972
    %v3497 = vunpack.c.h.b16 %v972
    %v3498 = vunpack.c.l.b16 %v973
    %v3499 = vunpack.c.h.b16 %v973
    %v3500 = vunpack.c.l.b16 %v974
    %v3501 = vunpack.c.h.b16 %v974
    %v3502 = vunpack.c.l.b16 %v975
    %v3503 = vunpack.c.h.b16 %v975
    %v3504 = vunpack.c.l.b16 %v976
    %v3505 = vunpack.c.h.b16 %v976
    %v3506 = vunpack.c.l.b16 %v977
    %v3507 = vunpack.c.h.b16 %v977
    %v3508 = vunpack.c.l.b16 %v978
    %v3509 = vunpack.c.h.b16 %v978
    %v3510 = vunpack.c.l.b16 %v979
    %v3511 = vunpack.c.h.b16 %v979
    %v3512 = vunpack.c.l.b16 %v980
    %v3513 = vunpack.c.h.b16 %v980
    %v3514 = vunpack.c.l.b16 %v981
    %v3515 = vunpack.c.h.b16 %v981
    %v3516 = vunpack.c.l.b16 %v982
    %v3517 = vunpack.c.h.b16 %v982
    %v3518 = vunpack.c.l.b16 %v983
    %v3519 = vunpack.c.h.b16 %v983
    %v3520 = vunpack.c.l.b16 %v984
    %v3521 = vunpack.c.h.b16 %v984
    %v3522 = vunpack.c.l.b16 %v985
    %v3523 = vunpack.c.h.b16 %v985
    %v3524 = vunpack.c.l.b16 %v986
    %v3525 = vunpack.c.h.b16 %v986
    %v3526 = vunpack.c.l.b16 %v987
    %v3527 = vunpack.c.h.b16 %v987
    %v3528 = vunpack.c.l.b16 %v988
    %v3529 = vunpack.c.h.b16 %v988
    %v3530 = vunpack.c.l.b16 %v989
    %v3531 = vunpack.c.h.b16 %v989
    %v3532 = vunpack.c.l.b16 %v990
    %v3533 = vunpack.c.h.b16 %v990
    %v3534 = vunpack.c.l.b16 %v991
    %v3535 = vunpack.c.h.b16 %v991
    %v3536 = vunpack.c.l.b16 %v992
    %v3537 = vunpack.c.h.b16 %v992
    %v3538 = vunpack.c.l.b16 %v993
    %v3539 = vunpack.c.h.b16 %v993
    %v3540 = vunpack.c.l.b16 %v994
    %v3541 = vunpack.c.h.b16 %v994
    %v3542 = vunpack.c.l.b16 %v995
    %v3543 = vunpack.c.h.b16 %v995
    %v3544 = vunpack.c.l.b16 %v996
    %v3545 = vunpack.c.h.b16 %v996
    %v3546 = vunpack.c.l.b16 %v997
    %v3547 = vunpack.c.h.b16 %v997
    %v3548 = vunpack.c.l.b16 %v998
    %v3549 = vunpack.c.h.b16 %v998
    %v3550 = vunpack.c.l.b16 %v999
    %v3551 = vunpack.c.h.b16 %v999
    %v3552 = vunpack.c.l.b16 %v1000
    %v3553 = vunpack.c.h.b16 %v1000
    %v3554 = vunpack.c.l.b16 %v1001
    %v3555 = vunpack.c.h.b16 %v1001
    %v3556 = vunpack.c.l.b16 %v1002
    %v3557 = vunpack.c.h.b16 %v1002
    %v3558 = vunpack.c.l.b16 %v1003
    %v3559 = vunpack.c.h.b16 %v1003
    %v3560 = vunpack.c.l.b16 %v1004
    %v3561 = vunpack.c.h.b16 %v1004
    %v3562 = vunpack.c.l.b16 %v1005
    %v3563 = vunpack.c.h.b16 %v1005
    %v3564 = vunpack.c.l.b16 %v1006
    %v3565 = vunpack.c.h.b16 %v1006
    %v3566 = vunpack.c.l.b16 %v1007
    %v3567 = vunpack.c.h.b16 %v1007
    %v3568 = vunpack.c.l.b16 %v1008
    %v3569 = vunpack.c.h.b16 %v1008
    %v3570 = vunpack.c.l.b16 %v1009
    %v3571 = vunpack.c.h.b16 %v1009
    %v3572 = vunpack.c.l.b16 %v1010
    %v3573 = vunpack.c.h.b16 %v1010
    %v3574 = vunpack.c.l.b16 %v1011
    %v3575 = vunpack.c.h.b16 %v1011
    %v3576 = vunpack.c.l.b16 %v1012
    %v3577 = vunpack.c.h.b16 %v1012
    %v3578 = vunpack.c.l.b16 %v1013
    %v3579 = vunpack.c.h.b16 %v1013
    %v3580 = vunpack.c.l.b16 %v1014
    %v3581 = vunpack.c.h.b16 %v1014
    %v3582 = vunpack.c.l.b16 %v1015
    %v3583 = vunpack.c.h.b16 %v1015
    %v3584 = vunpack.c.l.b16 %v1016
    %v3585 = vunpack.c.h.b16 %v1016
    %v3586 = vunpack.c.l.b16 %v1017
    %v3587 = vunpack.c.h.b16 %v1017
    %v3588 = vunpack.c.l.b16 %v1018
    %v3589 = vunpack.c.h.b16 %v1018
    %v3590 = vunpack.c.l.b16 %v1019
    %v3591 = vunpack.c.h.b16 %v1019
    %v3592 = vunpack.c.l.b16 %v1020
    %v3593 = vunpack.c.h.b16 %v1020
    %v3594 = vunpack.c.l.b16 %v1021
    %v3595 = vunpack.c.h.b16 %v1021
    %v3596 = vunpack.c.l.b16 %v1022
    %v3597 = vunpack.c.h.b16 %v1022
    %v3598 = vunpack.c.l.b16 %v1023
    %v3599 = vunpack.c.h.b16 %v1023
    %v3600 = vunpack.c.l.b16 %v1024
    %v3601 = vunpack.c.h.b16 %v1024
    %v3602 = vunpack.c.l.b16 %v1025
    %v3603 = vunpack.c.h.b16 %v1025
    %v3604 = vunpack.c.l.b16 %v1026
    %v3605 = vunpack.c.h.b16 %v1026
    %v3606 = vunpack.c.l.b16 %v1027
    %v3607 = vunpack.c.h.b16 %v1027
    %v3608 = vunpack.c.l.b16 %v1028
    %v3609 = vunpack.c.h.b16 %v1028
    %v3610 = vunpack.c.l.b16 %v1029
    %v3611 = vunpack.c.h.b16 %v1029
    %v3612 = vunpack.c.l.b16 %v1030
    %v3613 = vunpack.c.h.b16 %v1030
    %v3614 = vunpack.c.l.b16 %v1031
    %v3615 = vunpack.c.h.b16 %v1031
    %v3616 = vunpack.c.l.b16 %v1032
    %v3617 = vunpack.c.h.b16 %v1032
    %v3618 = vunpack.c.l.b16 %v1033
    %v3619 = vunpack.c.h.b16 %v1033
    %v3620 = vunpack.c.l.b16 %v1034
    %v3621 = vunpack.c.h.b16 %v1034
    %v3622 = vunpack.c.l.b16 %v1035
    %v3623 = vunpack.c.h.b16 %v1035
    %v3624 = vunpack.c.l.b16 %v1036
    %v3625 = vunpack.c.h.b16 %v1036
    %v3626 = vunpack.c.l.b16 %v1037
    %v3627 = vunpack.c.h.b16 %v1037
    %v3628 = vunpack.c.l.b16 %v1038
    %v3629 = vunpack.c.h.b16 %v1038
    %v3630 = vunpack.c.l.b16 %v1039
    %v3631 = vunpack.c.h.b16 %v1039
    %v3632 = vunpack.c.l.b16 %v1040
    %v3633 = vunpack.c.h.b16 %v1040
    %v3634 = vunpack.c.l.b16 %v1041
    %v3635 = vunpack.c.h.b16 %v1041
    %v3636 = vunpack.c.l.b16 %v1042
    %v3637 = vunpack.c.h.b16 %v1042
    %v3638 = vunpack.c.l.b16 %v1043
    %v3639 = vunpack.c.h.b16 %v1043
    %v3640 = vunpack.c.l.b16 %v1044
    %v3641 = vunpack.c.h.b16 %v1044
    %v3642 = vunpack.c.l.b16 %v1045
    %v3643 = vunpack.c.h.b16 %v1045
    %v3644 = vunpack.c.l.b16 %v1046
    %v3645 = vunpack.c.h.b16 %v1046
    %v3646 = vunpack.c.l.b16 %v1047
    %v3647 = vunpack.c.h.b16 %v1047
    %v3648 = vunpack.c.l.b16 %v1048
    %v3649 = vunpack.c.h.b16 %v1048
    %v3650 = vunpack.c.l.b16 %v1049
    %v3651 = vunpack.c.h.b16 %v1049
    %v3652 = vunpack.c.l.b16 %v1050
    %v3653 = vunpack.c.h.b16 %v1050
    %v3654 = vunpack.c.l.b16 %v1051
    %v3655 = vunpack.c.h.b16 %v1051
    %v3656 = vunpack.c.l.b16 %v1052
    %v3657 = vunpack.c.h.b16 %v1052
    %v3658 = vunpack.c.l.b16 %v1053
    %v3659 = vunpack.c.h.b16 %v1053
    %v3660 = vunpack.c.l.b16 %v1054
    %v3661 = vunpack.c.h.b16 %v1054
    %v3662 = vunpack.c.l.b16 %v1055
    %v3663 = vunpack.c.h.b16 %v1055
    %v3664 = vunpack.c.l.b16 %v1056
    %v3665 = vunpack.c.h.b16 %v1056
    %v3666 = vunpack.c.l.b16 %v1057
    %v3667 = vunpack.c.h.b16 %v1057
    %v3668 = vunpack.c.l.b16 %v1058
    %v3669 = vunpack.c.h.b16 %v1058
    %v3670 = vunpack.c.l.b16 %v1059
    %v3671 = vunpack.c.h.b16 %v1059
    %v3672 = vunpack.c.l.b16 %v1060
    %v3673 = vunpack.c.h.b16 %v1060
    %v3674 = vunpack.c.l.b16 %v1061
    %v3675 = vunpack.c.h.b16 %v1061
    %v3676 = vunpack.c.l.b16 %v1062
    %v3677 = vunpack.c.h.b16 %v1062
    %v3678 = vunpack.c.l.b16 %v1063
    %v3679 = vunpack.c.h.b16 %v1063
    %v3680 = vunpack.c.l.b16 %v1064
    %v3681 = vunpack.c.h.b16 %v1064
    %v3682 = vunpack.c.l.b16 %v1065
    %v3683 = vunpack.c.h.b16 %v1065
    %v3684 = vunpack.c.l.b16 %v1066
    %v3685 = vunpack.c.h.b16 %v1066
    %v3686 = vunpack.c.l.b16 %v1067
    %v3687 = vunpack.c.h.b16 %v1067
    %v3688 = vunpack.c.l.b16 %v1068
    %v3689 = vunpack.c.h.b16 %v1068
    %v3690 = vunpack.c.l.b16 %v1069
    %v3691 = vunpack.c.h.b16 %v1069
    %v3692 = vunpack.c.l.b16 %v1070
    %v3693 = vunpack.c.h.b16 %v1070
    %v3694 = vunpack.c.l.b16 %v1071
    %v3695 = vunpack.c.h.b16 %v1071
    %v3696 = vunpack.c.l.b16 %v1072
    %v3697 = vunpack.c.h.b16 %v1072
    %v3698 = vunpack.c.l.b16 %v1073
    %v3699 = vunpack.c.h.b16 %v1073
    %v3700 = vunpack.c.l.b16 %v1074
    %v3701 = vunpack.c.h.b16 %v1074
    %v3702 = vunpack.c.l.b16 %v1075
    %v3703 = vunpack.c.h.b16 %v1075
    %v3704 = vunpack.c.l.b16 %v1076
    %v3705 = vunpack.c.h.b16 %v1076
    %v3706 = vunpack.c.l.b16 %v1077
    %v3707 = vunpack.c.h.b16 %v1077
    %v3708 = vunpack.c.l.b16 %v1078
    %v3709 = vunpack.c.h.b16 %v1078
    %v3710 = vunpack.c.l.b16 %v1079
    %v3711 = vunpack.c.h.b16 %v1079
    %v3712 = vunpack.c.l.b16 %v1080
    %v3713 = vunpack.c.h.b16 %v1080
    %v3714 = vunpack.c.l.b16 %v1081
    %v3715 = vunpack.c.h.b16 %v1081
    %v3716 = vunpack.c.l.b16 %v1082
    %v3717 = vunpack.c.h.b16 %v1082
    %v3718 = vunpack.c.l.b16 %v1083
    %v3719 = vunpack.c.h.b16 %v1083
    %v3720 = vunpack.c.l.b16 %v1084
    %v3721 = vunpack.c.h.b16 %v1084
    %v3722 = vunpack.c.l.b16 %v1085
    %v3723 = vunpack.c.h.b16 %v1085
    %v3724 = vunpack.c.l.b16 %v1086
    %v3725 = vunpack.c.h.b16 %v1086
    %v3726 = vunpack.c.l.b16 %v1087
    %v3727 = vunpack.c.h.b16 %v1087
    %v3728 = vunpack.c.l.b16 %v1088
    %v3729 = vunpack.c.h.b16 %v1088
    %v3730 = vunpack.c.l.b16 %v1089
    %v3731 = vunpack.c.h.b16 %v1089
    %v3732 = vunpack.c.l.b16 %v1090
    %v3733 = vunpack.c.h.b16 %v1090
    %v3734 = vunpack.c.l.b16 %v1091
    %v3735 = vunpack.c.h.b16 %v1091
    %v3736 = vunpack.c.l.b16 %v1092
    %v3737 = vunpack.c.h.b16 %v1092
    %v3738 = vunpack.c.l.b16 %v1093
    %v3739 = vunpack.c.h.b16 %v1093
    %v3740 = vunpack.c.l.b16 %v1094
    %v3741 = vunpack.c.h.b16 %v1094
    %v3742 = vunpack.c.l.b16 %v1095
    %v3743 = vunpack.c.h.b16 %v1095
    %v3744 = vunpack.c.l.b16 %v1096
    %v3745 = vunpack.c.h.b16 %v1096
    %v3746 = vunpack.c.l.b16 %v1097
    %v3747 = vunpack.c.h.b16 %v1097
    %v3748 = vunpack.c.l.b16 %v1098
    %v3749 = vunpack.c.h.b16 %v1098
    %v3750 = vunpack.c.l.b16 %v1099
    %v3751 = vunpack.c.h.b16 %v1099
    %v3752 = vunpack.c.l.b16 %v1100
    %v3753 = vunpack.c.h.b16 %v1100
    %v3754 = vunpack.c.l.b16 %v1101
    %v3755 = vunpack.c.h.b16 %v1101
    %v3756 = vunpack.c.l.b16 %v1102
    %v3757 = vunpack.c.h.b16 %v1102
    %v3758 = vunpack.c.l.b16 %v1103
    %v3759 = vunpack.c.h.b16 %v1103
    %v3760 = vunpack.c.l.b16 %v1104
    %v3761 = vunpack.c.h.b16 %v1104
    %v3762 = vunpack.c.l.b16 %v1105
    %v3763 = vunpack.c.h.b16 %v1105
    %v3764 = vunpack.c.l.b16 %v1106
    %v3765 = vunpack.c.h.b16 %v1106
    %v3766 = vunpack.c.l.b16 %v1107
    %v3767 = vunpack.c.h.b16 %v1107
    %v3768 = vunpack.c.l.b16 %v1108
    %v3769 = vunpack.c.h.b16 %v1108
    %v3770 = vunpack.c.l.b16 %v1109
    %v3771 = vunpack.c.h.b16 %v1109
    %v3772 = vunpack.c.l.b16 %v1110
    %v3773 = vunpack.c.h.b16 %v1110
    %v3774 = vunpack.c.l.b16 %v1111
    %v3775 = vunpack.c.h.b16 %v1111
    %v3776 = vunpack.c.l.b16 %v1112
    %v3777 = vunpack.c.h.b16 %v1112
    %v3778 = vunpack.c.l.b16 %v1113
    %v3779 = vunpack.c.h.b16 %v1113
    %v3780 = vunpack.c.l.b16 %v1114
    %v3781 = vunpack.c.h.b16 %v1114
    %v3782 = vunpack.c.l.b16 %v1115
    %v3783 = vunpack.c.h.b16 %v1115
    %v3784 = vunpack.c.l.b16 %v1116
    %v3785 = vunpack.c.h.b16 %v1116
    %v3786 = vunpack.c.l.b16 %v1117
    %v3787 = vunpack.c.h.b16 %v1117
    %v3788 = vunpack.c.l.b16 %v1118
    %v3789 = vunpack.c.h.b16 %v1118
    %v3790 = vunpack.c.l.b16 %v1119
    %v3791 = vunpack.c.h.b16 %v1119
    %v3792 = vunpack.c.l.b16 %v1120
    %v3793 = vunpack.c.h.b16 %v1120
    %v3794 = vunpack.c.l.b16 %v1121
    %v3795 = vunpack.c.h.b16 %v1121
    %v3796 = vunpack.c.l.b16 %v1122
    %v3797 = vunpack.c.h.b16 %v1122
    %v3798 = vunpack.c.l.b16 %v1123
    %v3799 = vunpack.c.h.b16 %v1123
    %v3800 = vunpack.c.l.b16 %v1124
    %v3801 = vunpack.c.h.b16 %v1124
    %v3802 = vunpack.c.l.b16 %v1125
    %v3803 = vunpack.c.h.b16 %v1125
    %v3804 = vunpack.c.l.b16 %v1126
    %v3805 = vunpack.c.h.b16 %v1126
    %v3806 = vunpack.c.l.b16 %v1127
    %v3807 = vunpack.c.h.b16 %v1127
    %v3808 = vunpack.c.l.b16 %v1128
    %v3809 = vunpack.c.h.b16 %v1128
    %v3810 = vunpack.c.l.b16 %v1129
    %v3811 = vunpack.c.h.b16 %v1129
    %v3812 = vunpack.c.l.b16 %v1130
    %v3813 = vunpack.c.h.b16 %v1130
    %v3814 = vunpack.c.l.b16 %v1131
    %v3815 = vunpack.c.h.b16 %v1131
    %v3816 = vunpack.c.l.b16 %v1132
    %v3817 = vunpack.c.h.b16 %v1132
    %v3818 = vunpack.c.l.b16 %v1133
    %v3819 = vunpack.c.h.b16 %v1133
    %v3820 = vunpack.c.l.b16 %v1134
    %v3821 = vunpack.c.h.b16 %v1134
    %v3822 = vunpack.c.l.b16 %v1135
    %v3823 = vunpack.c.h.b16 %v1135
    %v3824 = vunpack.c.l.b16 %v1136
    %v3825 = vunpack.c.h.b16 %v1136
    %v3826 = vunpack.c.l.b16 %v1137
    %v3827 = vunpack.c.h.b16 %v1137
    %v3828 = vunpack.c.l.b16 %v1138
    %v3829 = vunpack.c.h.b16 %v1138
    %v3830 = vunpack.c.l.b16 %v1139
    %v3831 = vunpack.c.h.b16 %v1139
    %v3832 = vunpack.c.l.b16 %v1140
    %v3833 = vunpack.c.h.b16 %v1140
    %v3834 = vunpack.c.l.b16 %v1141
    %v3835 = vunpack.c.h.b16 %v1141
    %v3836 = vunpack.c.l.b16 %v1142
    %v3837 = vunpack.c.h.b16 %v1142
    %v3838 = vunpack.c.l.b16 %v1143
    %v3839 = vunpack.c.h.b16 %v1143
    %v3840 = vunpack.c.l.b16 %v1144
    %v3841 = vunpack.c.h.b16 %v1144
    %v3842 = vunpack.c.l.b16 %v1145
    %v3843 = vunpack.c.h.b16 %v1145
    %v3844 = vunpack.c.l.b16 %v1146
    %v3845 = vunpack.c.h.b16 %v1146
    %v3846 = vunpack.c.l.b16 %v1147
    %v3847 = vunpack.c.h.b16 %v1147
    %v3848 = vunpack.c.l.b16 %v1148
    %v3849 = vunpack.c.h.b16 %v1148
    %v3850 = vunpack.c.l.b16 %v1149
    %v3851 = vunpack.c.h.b16 %v1149
    %v3852 = vunpack.c.l.b16 %v1150
    %v3853 = vunpack.c.h.b16 %v1150
    %v3854 = vunpack.c.l.b16 %v1151
    %v3855 = vunpack.c.h.b16 %v1151
    %v3856 = vunpack.c.l.b16 %v1152
    %v3857 = vunpack.c.h.b16 %v1152
    %v3858 = vunpack.c.l.b16 %v1153
    %v3859 = vunpack.c.h.b16 %v1153
    %v3860 = vunpack.c.l.b16 %v1154
    %v3861 = vunpack.c.h.b16 %v1154
    %v3862 = vunpack.c.l.b16 %v1155
    %v3863 = vunpack.c.h.b16 %v1155
    %v3864 = vunpack.c.l.b16 %v1156
    %v3865 = vunpack.c.h.b16 %v1156
    %v3866 = vunpack.c.l.b16 %v1157
    %v3867 = vunpack.c.h.b16 %v1157
    %v3868 = vunpack.c.l.b16 %v1158
    %v3869 = vunpack.c.h.b16 %v1158
    %v3870 = vunpack.c.l.b16 %v1159
    %v3871 = vunpack.c.h.b16 %v1159
    %v3872 = vunpack.c.l.b16 %v1160
    %v3873 = vunpack.c.h.b16 %v1160
    %v3874 = vunpack.c.l.b16 %v1161
    %v3875 = vunpack.c.h.b16 %v1161
    %v3876 = vunpack.c.l.b16 %v1162
    %v3877 = vunpack.c.h.b16 %v1162
    %v3878 = vunpack.c.l.b16 %v1163
    %v3879 = vunpack.c.h.b16 %v1163
    %v3880 = vunpack.c.l.b16 %v1164
    %v3881 = vunpack.c.h.b16 %v1164
    %v3882 = vunpack.c.l.b16 %v1165
    %v3883 = vunpack.c.h.b16 %v1165
    %v3884 = vunpack.c.l.b16 %v1166
    %v3885 = vunpack.c.h.b16 %v1166
    %v3886 = vunpack.c.l.b16 %v1167
    %v3887 = vunpack.c.h.b16 %v1167
    %v3888 = vunpack.c.l.b16 %v1168
    %v3889 = vunpack.c.h.b16 %v1168
    %v3890 = vunpack.c.l.b16 %v1169
    %v3891 = vunpack.c.h.b16 %v1169
    %v3892 = vunpack.c.l.b16 %v1170
    %v3893 = vunpack.c.h.b16 %v1170
    %v3894 = vunpack.c.l.b16 %v1171
    %v3895 = vunpack.c.h.b16 %v1171
    %v3896 = vunpack.c.l.b16 %v1172
    %v3897 = vunpack.c.h.b16 %v1172
    %v3898 = vunpack.c.l.b16 %v1173
    %v3899 = vunpack.c.h.b16 %v1173
    %v3900 = vunpack.c.l.b16 %v1174
    %v3901 = vunpack.c.h.b16 %v1174
    %v3902 = vunpack.c.l.b16 %v1175
    %v3903 = vunpack.c.h.b16 %v1175
    %v3904 = vunpack.c.l.b16 %v1176
    %v3905 = vunpack.c.h.b16 %v1176
    %v3906 = vunpack.c.l.b16 %v1177
    %v3907 = vunpack.c.h.b16 %v1177
    %v3908 = vunpack.c.l.b16 %v1178
    %v3909 = vunpack.c.h.b16 %v1178
    %v3910 = vunpack.c.l.b16 %v1179
    %v3911 = vunpack.c.h.b16 %v1179
    %v3912 = vunpack.c.l.b16 %v1180
    %v3913 = vunpack.c.h.b16 %v1180
    %v3914 = vunpack.c.l.b16 %v1181
    %v3915 = vunpack.c.h.b16 %v1181
    %v3916 = vunpack.c.l.b16 %v1182
    %v3917 = vunpack.c.h.b16 %v1182
    %v3918 = vunpack.c.l.b16 %v1183
    %v3919 = vunpack.c.h.b16 %v1183
    %v3920 = vunpack.c.l.b16 %v1184
    %v3921 = vunpack.c.h.b16 %v1184
    %v3922 = vunpack.c.l.b16 %v1185
    %v3923 = vunpack.c.h.b16 %v1185
    %v3924 = vunpack.c.l.b16 %v1186
    %v3925 = vunpack.c.h.b16 %v1186
    %v3926 = vunpack.c.l.b16 %v1187
    %v3927 = vunpack.c.h.b16 %v1187
    %v3928 = vunpack.c.l.b16 %v1188
    %v3929 = vunpack.c.h.b16 %v1188
    %v3930 = vunpack.c.l.b16 %v1189
    %v3931 = vunpack.c.h.b16 %v1189
    %v3932 = vunpack.c.l.b16 %v1190
    %v3933 = vunpack.c.h.b16 %v1190
    %v3934 = vunpack.c.l.b16 %v1191
    %v3935 = vunpack.c.h.b16 %v1191
    %v3936 = vunpack.c.l.b16 %v1192
    %v3937 = vunpack.c.h.b16 %v1192
    %v3938 = vunpack.c.l.b16 %v1193
    %v3939 = vunpack.c.h.b16 %v1193
    %v3940 = vunpack.c.l.b16 %v1194
    %v3941 = vunpack.c.h.b16 %v1194
    %v3942 = vunpack.c.l.b16 %v1195
    %v3943 = vunpack.c.h.b16 %v1195
    %v3944 = vunpack.c.l.b16 %v1196
    %v3945 = vunpack.c.h.b16 %v1196
    %v3946 = vunpack.c.l.b16 %v1197
    %v3947 = vunpack.c.h.b16 %v1197
    %v3948 = vunpack.c.l.b16 %v1198
    %v3949 = vunpack.c.h.b16 %v1198
    %v3950 = vunpack.c.l.b16 %v1199
    %v3951 = vunpack.c.h.b16 %v1199
    %v3952 = vunpack.c.l.b16 %v1200
    %v3953 = vunpack.c.h.b16 %v1200
    %v3954 = vunpack.c.l.b16 %v1201
    %v3955 = vunpack.c.h.b16 %v1201
    %v3956 = vunpack.c.l.b16 %v1202
    %v3957 = vunpack.c.h.b16 %v1202
    %v3958 = vunpack.c.l.b16 %v1203
    %v3959 = vunpack.c.h.b16 %v1203
    %v3960 = vunpack.c.l.b16 %v1204
    %v3961 = vunpack.c.h.b16 %v1204
    %v3962 = vunpack.c.l.b16 %v1205
    %v3963 = vunpack.c.h.b16 %v1205
    %v3964 = vunpack.c.l.b16 %v1206
    %v3965 = vunpack.c.h.b16 %v1206
    %v3966 = vunpack.c.l.b16 %v1207
    %v3967 = vunpack.c.h.b16 %v1207
    %v3968 = vunpack.c.l.b16 %v1208
    %v3969 = vunpack.c.h.b16 %v1208
    %v3970 = vunpack.c.l.b16 %v1209
    %v3971 = vunpack.c.h.b16 %v1209
    %v3972 = vunpack.c.l.b16 %v1210
    %v3973 = vunpack.c.h.b16 %v1210
    %v3974 = vunpack.c.l.b16 %v1211
    %v3975 = vunpack.c.h.b16 %v1211
    %v3976 = vunpack.c.l.b16 %v1212
    %v3977 = vunpack.c.h.b16 %v1212
    %v3978 = vunpack.c.l.b16 %v1213
    %v3979 = vunpack.c.h.b16 %v1213
    %v3980 = vunpack.c.l.b16 %v1214
    %v3981 = vunpack.c.h.b16 %v1214
    %v3982 = vunpack.c.l.b16 %v1215
    %v3983 = vunpack.c.h.b16 %v1215
    %v3984 = vunpack.c.l.b16 %v1216
    %v3985 = vunpack.c.h.b16 %v1216
    %v3986 = vunpack.c.l.b16 %v1217
    %v3987 = vunpack.c.h.b16 %v1217
    %v3988 = vunpack.c.l.b16 %v1218
    %v3989 = vunpack.c.h.b16 %v1218
    %v3990 = vunpack.c.l.b16 %v1219
    %v3991 = vunpack.c.h.b16 %v1219
    %v3992 = vunpack.c.l.b16 %v1220
    %v3993 = vunpack.c.h.b16 %v1220
    %v3994 = vunpack.c.l.b16 %v1221
    %v3995 = vunpack.c.h.b16 %v1221
    %v3996 = vunpack.c.l.b16 %v1222
    %v3997 = vunpack.c.h.b16 %v1222
    %v3998 = vunpack.c.l.b16 %v1223
    %v3999 = vunpack.c.h.b16 %v1223
    %v4000 = vunpack.c.l.b16 %v1224
    %v4001 = vunpack.c.h.b16 %v1224
    %v4002 = vunpack.c.l.b16 %v1225
    %v4003 = vunpack.c.h.b16 %v1225
    %v4004 = vunpack.c.l.b16 %v1226
    %v4005 = vunpack.c.h.b16 %v1226
    %v4006 = vunpack.c.l.b16 %v1227
    %v4007 = vunpack.c.h.b16 %v1227
    %v4008 = vunpack.c.l.b16 %v1228
    %v4009 = vunpack.c.h.b16 %v1228
    %v4010 = vunpack.c.l.b16 %v1229
    %v4011 = vunpack.c.h.b16 %v1229
    %v4012 = vunpack.c.l.b16 %v1230
    %v4013 = vunpack.c.h.b16 %v1230
    %v4014 = vunpack.c.l.b16 %v1231
    %v4015 = vunpack.c.h.b16 %v1231
    %v4016 = vunpack.c.l.b16 %v1232
    %v4017 = vunpack.c.h.b16 %v1232
    %v4018 = vunpack.c.l.b16 %v1233
    %v4019 = vunpack.c.h.b16 %v1233
    %v4020 = vunpack.c.l.b16 %v1234
    %v4021 = vunpack.c.h.b16 %v1234
    %v4022 = vunpack.c.l.b16 %v1235
    %v4023 = vunpack.c.h.b16 %v1235
    %v4024 = vunpack.c.l.b16 %v1236
    %v4025 = vunpack.c.h.b16 %v1236
    %v4026 = vunpack.c.l.b16 %v1237
    %v4027 = vunpack.c.h.b16 %v1237
    %v4028 = vunpack.c.l.b16 %v1238
    %v4029 = vunpack.c.h.b16 %v1238
    %v4030 = vunpack.c.l.b16 %v1239
    %v4031 = vunpack.c.h.b16 %v1239
    %v4032 = vunpack.c.l.b16 %v1240
    %v4033 = vunpack.c.h.b16 %v1240
    %v4034 = vunpack.c.l.b16 %v1241
    %v4035 = vunpack.c.h.b16 %v1241
    %v4036 = vunpack.c.l.b16 %v1242
    %v4037 = vunpack.c.h.b16 %v1242
    %v4038 = vunpack.c.l.b16 %v1243
    %v4039 = vunpack.c.h.b16 %v1243
    %v4040 = vunpack.c.l.b16 %v1244
    %v4041 = vunpack.c.h.b16 %v1244
    %v4042 = vunpack.c.l.b16 %v1245
    %v4043 = vunpack.c.h.b16 %v1245
    %v4044 = vunpack.c.l.b16 %v1246
    %v4045 = vunpack.c.h.b16 %v1246
    %v4046 = vunpack.c.l.b16 %v1247
    %v4047 = vunpack.c.h.b16 %v1247
    %v4048 = vunpack.c.l.b16 %v1248
    %v4049 = vunpack.c.h.b16 %v1248
    %v4050 = vunpack.c.l.b16 %v1249
    %v4051 = vunpack.c.h.b16 %v1249
    %v4052 = vunpack.c.l.b16 %v1250
    %v4053 = vunpack.c.h.b16 %v1250
    %v4054 = vunpack.c.l.b16 %v1251
    %v4055 = vunpack.c.h.b16 %v1251
    %v4056 = vunpack.c.l.b16 %v1252
    %v4057 = vunpack.c.h.b16 %v1252
    %v4058 = vunpack.c.l.b16 %v1253
    %v4059 = vunpack.c.h.b16 %v1253
    %v4060 = vunpack.c.l.b16 %v1254
    %v4061 = vunpack.c.h.b16 %v1254
    %v4062 = vunpack.c.l.b16 %v1255
    %v4063 = vunpack.c.h.b16 %v1255
    %v4064 = vunpack.c.l.b16 %v1256
    %v4065 = vunpack.c.h.b16 %v1256
    %v4066 = vunpack.c.l.b16 %v1257
    %v4067 = vunpack.c.h.b16 %v1257
    %v4068 = vunpack.c.l.b16 %v1258
    %v4069 = vunpack.c.h.b16 %v1258
    %v4070 = vunpack.c.l.b16 %v1259
    %v4071 = vunpack.c.h.b16 %v1259
    %v4072 = vunpack.c.l.b16 %v1260
    %v4073 = vunpack.c.h.b16 %v1260
    %v4074 = vunpack.c.l.b16 %v1261
    %v4075 = vunpack.c.h.b16 %v1261
    %v4076 = vunpack.c.l.b16 %v1262
    %v4077 = vunpack.c.h.b16 %v1262
    %v4078 = vunpack.c.l.b16 %v1263
    %v4079 = vunpack.c.h.b16 %v1263
    %v4080 = vunpack.c.l.b16 %v1264
    %v4081 = vunpack.c.h.b16 %v1264
    %v4082 = vunpack.c.l.b16 %v1265
    %v4083 = vunpack.c.h.b16 %v1265
    %v4084 = vunpack.c.l.b16 %v1266
    %v4085 = vunpack.c.h.b16 %v1266
    %v4086 = vunpack.c.l.b16 %v1267
    %v4087 = vunpack.c.h.b16 %v1267
    %v4088 = vunpack.c.l.b16 %v1268
    %v4089 = vunpack.c.h.b16 %v1268
    %v4090 = vunpack.c.l.b16 %v1269
    %v4091 = vunpack.c.h.b16 %v1269
    %v4092 = vunpack.c.l.b16 %v1270
    %v4093 = vunpack.c.h.b16 %v1270
    %v4094 = vunpack.c.l.b16 %v1271
    %v4095 = vunpack.c.h.b16 %v1271
    %v4096 = vunpack.c.l.b16 %v1272
    %v4097 = vunpack.c.h.b16 %v1272
    %v4098 = vunpack.c.l.b16 %v1273
    %v4099 = vunpack.c.h.b16 %v1273
    %v4100 = vunpack.c.l.b16 %v1274
    %v4101 = vunpack.c.h.b16 %v1274
    %v4102 = vunpack.c.l.b16 %v1275
    %v4103 = vunpack.c.h.b16 %v1275
    %v4104 = vunpack.c.l.b16 %v1276
    %v4105 = vunpack.c.h.b16 %v1276
    %v4106 = vpack.c.b16 %v2322, %v2314
    %v4107 = vpack.c.b16 %v2323, %v2315
    %v4108 = vpack.c.b16 %v2324, %v2316
    %v4109 = vpack.c.b16 %v2325, %v2317
    %v4110 = vpack.c.b16 %v2326, %v2318
    %v4111 = vpack.c.b16 %v2327, %v2319
    %v4112 = vpack.c.b16 %v2328, %v2320
    %v4113 = vpack.c.b16 %v2329, %v2321
    %v4114 = vpack.c.b16 %v2338, %v2330
    %v4115 = vpack.c.b16 %v2339, %v2331
    %v4116 = vpack.c.b16 %v2340, %v2332
    %v4117 = vpack.c.b16 %v2341, %v2333
    %v4118 = vpack.c.b16 %v2342, %v2334
    %v4119 = vpack.c.b16 %v2343, %v2335
    %v4120 = vpack.c.b16 %v2344, %v2336
    %v4121 = vpack.c.b16 %v2345, %v2337
    %v4122 = vpack.c.b16 %v2354, %v2346
    %v4123 = vpack.c.b16 %v2355, %v2347
    %v4124 = vpack.c.b16 %v2356, %v2348
    %v4125 = vpack.c.b16 %v2357, %v2349
    %v4126 = vpack.c.b16 %v2358, %v2350
    %v4127 = vpack.c.b16 %v2359, %v2351
    %v4128 = vpack.c.b16 %v2360, %v2352
    %v4129 = vpack.c.b16 %v2361, %v2353
    %v4130 = vpack.c.b16 %v2370, %v2362
    %v4131 = vpack.c.b16 %v2371, %v2363
    %v4132 = vpack.c.b16 %v2372, %v2364
    %v4133 = vpack.c.b16 %v2373, %v2365
    %v4134 = vpack.c.b16 %v2374, %v2366
    %v4135 = vpack.c.b16 %v2375, %v2367
    %v4136 = vpack.c.b16 %v2376, %v2368
    %v4137 = vpack.c.b16 %v2377, %v2369
    %v4138 = vpack.c.b16 %v2386, %v2378
    %v4139 = vpack.c.b16 %v2387, %v2379
    %v4140 = vpack.c.b16 %v2388, %v2380
    %v4141 = vpack.c.b16 %v2389, %v2381
    %v4142 = vpack.c.b16 %v2390, %v2382
    %v4143 = vpack.c.b16 %v2391, %v2383
    %v4144 = vpack.c.b16 %v2392, %v2384
    %v4145 = vpack.c.b16 %v2393, %v2385
    %v4146 = vpack.c.b16 %v2402, %v2394
    %v4147 = vpack.c.b16 %v2403, %v2395
    %v4148 = vpack.c.b16 %v2404, %v2396
    %v4149 = vpack.c.b16 %v2405, %v2397
    %v4150 = vpack.c.b16 %v2406, %v2398
    %v4151 = vpack.c.b16 %v2407, %v2399
    %v4152 = vpack.c.b16 %v2408, %v2400
    %v4153 = vpack.c.b16 %v2409, %v2401
    %v4154 = vpack.c.b16 %v2418, %v2410
    %v4155 = vpack.c.b16 %v2419, %v2411
    %v4156 = vpack.c.b16 %v2420, %v2412
    %v4157 = vpack.c.b16 %v2421, %v2413
    %v4158 = vpack.c.b16 %v2422, %v2414
    %v4159 = vpack.c.b16 %v2423, %v2415
    %v4160 = vpack.c.b16 %v2424, %v2416
    %v4161 = vpack.c.b16 %v2425, %v2417
    %v4162 = vpack.c.b16 %v2434, %v2426
    %v4163 = vpack.c.b16 %v2435, %v2427
    %v4164 = vpack.c.b16 %v2436, %v2428
    %v4165 = vpack.c.b16 %v2437, %v2429
    %v4166 = vpack.c.b16 %v2438, %v2430
    %v4167 = vpack.c.b16 %v2439, %v2431
    %v4168 = vpack.c.b16 %v2440, %v2432
    %v4169 = vpack.c.b16 %v2441, %v2433
    %v4170 = vpack.c.b16 %v2450, %v2442
    %v4171 = vpack.c.b16 %v2451, %v2443
    %v4172 = vpack.c.b16 %v2452, %v2444
    %v4173 = vpack.c.b16 %v2453, %v2445
    %v4174 = vpack.c.b16 %v2454, %v2446
    %v4175 = vpack.c.b16 %v2455, %v2447
    %v4176 = vpack.c.b16 %v2456, %v2448
    %v4177 = vpack.c.b16 %v2457, %v2449
    %v4178 = vpack.c.b16 %v2466, %v2458
    %v4179 = vpack.c.b16 %v2467, %v2459
    %v4180 = vpack.c.b16 %v2468, %v2460
    %v4181 = vpack.c.b16 %v2469, %v2461
    %v4182 = vpack.c.b16 %v2470, %v2462
    %v4183 = vpack.c.b16 %v2471, %v2463
    %v4184 = vpack.c.b16 %v2472, %v2464
    %v4185 = vpack.c.b16 %v2473, %v2465
    %v4186 = vpack.c.b16 %v2482, %v2474
    %v4187 = vpack.c.b16 %v2483, %v2475
    %v4188 = vpack.c.b16 %v2484, %v2476
    %v4189 = vpack.c.b16 %v2485, %v2477
    %v4190 = vpack.c.b16 %v2486, %v2478
    %v4191 = vpack.c.b16 %v2487, %v2479
    %v4192 = vpack.c.b16 %v2488, %v2480
    %v4193 = vpack.c.b16 %v2489, %v2481
    %v4194 = vpack.c.b16 %v2498, %v2490
    %v4195 = vpack.c.b16 %v2499, %v2491
    %v4196 = vpack.c.b16 %v2500, %v2492
    %v4197 = vpack.c.b16 %v2501, %v2493
    %v4198 = vpack.c.b16 %v2502, %v2494
    %v4199 = vpack.c.b16 %v2503, %v2495
    %v4200 = vpack.c.b16 %v2504, %v2496
    %v4201 = vpack.c.b16 %v2505, %v2497
    %v4202 = vpack.c.b16 %v2514, %v2506
    %v4203 = vpack.c.b16 %v2515, %v2507
    %v4204 = vpack.c.b16 %v2516, %v2508
    %v4205 = vpack.c.b16 %v2517, %v2509
    %v4206 = vpack.c.b16 %v2518, %v2510
    %v4207 = vpack.c.b16 %v2519, %v2511
    %v4208 = vpack.c.b16 %v2520, %v2512
    %v4209 = vpack.c.b16 %v2521, %v2513
    %v4210 = vpack.c.b16 %v2530, %v2522
    %v4211 = vpack.c.b16 %v2531, %v2523
    %v4212 = vpack.c.b16 %v2532, %v2524
    %v4213 = vpack.c.b16 %v2533, %v2525
    %v4214 = vpack.c.b16 %v2534, %v2526
    %v4215 = vpack.c.b16 %v2535, %v2527
    %v4216 = vpack.c.b16 %v2536, %v2528
    %v4217 = vpack.c.b16 %v2537, %v2529
    %v4218 = vpack.c.b16 %v2546, %v2538
    %v4219 = vpack.c.b16 %v2547, %v2539
    %v4220 = vpack.c.b16 %v2548, %v2540
    %v4221 = vpack.c.b16 %v2549, %v2541
    %v4222 = vpack.c.b16 %v2550, %v2542
    %v4223 = vpack.c.b16 %v2551, %v2543
    %v4224 = vpack.c.b16 %v2552, %v2544
    %v4225 = vpack.c.b16 %v2553, %v2545
    %v4226 = vpack.c.b16 %v2562, %v2554
    %v4227 = vpack.c.b16 %v2563, %v2555
    %v4228 = vpack.c.b16 %v2564, %v2556
    %v4229 = vpack.c.b16 %v2565, %v2557
    %v4230 = vpack.c.b16 %v2566, %v2558
    %v4231 = vpack.c.b16 %v2567, %v2559
    %v4232 = vpack.c.b16 %v2568, %v2560
    %v4233 = vpack.c.b16 %v2569, %v2561
    %v4234 = vpack.c.b16 %v2578, %v2570
    %v4235 = vpack.c.b16 %v2579, %v2571
    %v4236 = vpack.c.b16 %v2580, %v2572
    %v4237 = vpack.c.b16 %v2581, %v2573
    %v4238 = vpack.c.b16 %v2582, %v2574
    %v4239 = vpack.c.b16 %v2583, %v2575
    %v4240 = vpack.c.b16 %v2584, %v2576
    %v4241 = vpack.c.b16 %v2585, %v2577
    %v4242 = vpack.c.b16 %v2594, %v2586
    %v4243 = vpack.c.b16 %v2595, %v2587
    %v4244 = vpack.c.b16 %v2596, %v2588
    %v4245 = vpack.c.b16 %v2597, %v2589
    %v4246 = vpack.c.b16 %v2598, %v2590
    %v4247 = vpack.c.b16 %v2599, %v2591
    %v4248 = vpack.c.b16 %v2600, %v2592
    %v4249 = vpack.c.b16 %v2601, %v2593
    %v4250 = vpack.c.b16 %v2610, %v2602
    %v4251 = vpack.c.b16 %v2611, %v2603
    %v4252 = vpack.c.b16 %v2612, %v2604
    %v4253 = vpack.c.b16 %v2613, %v2605
    %v4254 = vpack.c.b16 %v2614, %v2606
    %v4255 = vpack.c.b16 %v2615, %v2607
    %v4256 = vpack.c.b16 %v2616, %v2608
    %v4257 = vpack.c.b16 %v2617, %v2609
    %v4258 = vpack.c.b16 %v2626, %v2618
    %v4259 = vpack.c.b16 %v2627, %v2619
    %v4260 = vpack.c.b16 %v2628, %v2620
    %v4261 = vpack.c.b16 %v2629, %v2621
    %v4262 = vpack.c.b16 %v2630, %v2622
    %v4263 = vpack.c.b16 %v2631, %v2623
    %v4264 = vpack.c.b16 %v2632, %v2624
    %v4265 = vpack.c.b16 %v2633, %v2625
    %v4266 = vpack.c.b16 %v2642, %v2634
    %v4267 = vpack.c.b16 %v2643, %v2635
    %v4268 = vpack.c.b16 %v2644, %v2636
    %v4269 = vpack.c.b16 %v2645, %v2637
    %v4270 = vpack.c.b16 %v2646, %v2638
    %v4271 = vpack.c.b16 %v2647, %v2639
    %v4272 = vpack.c.b16 %v2648, %v2640
    %v4273 = vpack.c.b16 %v2649, %v2641
    %v4274 = vpack.c.b16 %v2658, %v2650
    %v4275 = vpack.c.b16 %v2659, %v2651
    %v4276 = vpack.c.b16 %v2660, %v2652
    %v4277 = vpack.c.b16 %v2661, %v2653
    %v4278 = vpack.c.b16 %v2662, %v2654
    %v4279 = vpack.c.b16 %v2663, %v2655
    %v4280 = vpack.c.b16 %v2664, %v2656
    %v4281 = vpack.c.b16 %v2665, %v2657
    %v4282 = vpack.c.b16 %v2674, %v2666
    %v4283 = vpack.c.b16 %v2675, %v2667
    %v4284 = vpack.c.b16 %v2676, %v2668
    %v4285 = vpack.c.b16 %v2677, %v2669
    %v4286 = vpack.c.b16 %v2678, %v2670
    %v4287 = vpack.c.b16 %v2679, %v2671
    %v4288 = vpack.c.b16 %v2680, %v2672
    %v4289 = vpack.c.b16 %v2681, %v2673
    %v4290 = vpack.c.b16 %v2690, %v2682
    %v4291 = vpack.c.b16 %v2691, %v2683
    %v4292 = vpack.c.b16 %v2692, %v2684
    %v4293 = vpack.c.b16 %v2693, %v2685
    %v4294 = vpack.c.b16 %v2694, %v2686
    %v4295 = vpack.c.b16 %v2695, %v2687
    %v4296 = vpack.c.b16 %v2696, %v2688
    %v4297 = vpack.c.b16 %v2697, %v2689
    %v4298 = vpack.c.b16 %v2706, %v2698
    %v4299 = vpack.c.b16 %v2707, %v2699
    %v4300 = vpack.c.b16 %v2708, %v2700
    %v4301 = vpack.c.b16 %v2709, %v2701
    %v4302 = vpack.c.b16 %v2710, %v2702
    %v4303 = vpack.c.b16 %v2711, %v2703
    %v4304 = vpack.c.b16 %v2712, %v2704
    %v4305 = vpack.c.b16 %v2713, %v2705
    %v4306 = vpack.c.b16 %v2722, %v2714
    %v4307 = vpack.c.b16 %v2723, %v2715
    %v4308 = vpack.c.b16 %v2724, %v2716
    %v4309 = vpack.c.b16 %v2725, %v2717
    %v4310 = vpack.c.b16 %v2726, %v2718
    %v4311 = vpack.c.b16 %v2727, %v2719
    %v4312 = vpack.c.b16 %v2728, %v2720
    %v4313 = vpack.c.b16 %v2729, %v2721
    %v4314 = vpack.c.b16 %v2738, %v2730
    %v4315 = vpack.c.b16 %v2739, %v2731
    %v4316 = vpack.c.b16 %v2740, %v2732
    %v4317 = vpack.c.b16 %v2741, %v2733
    %v4318 = vpack.c.b16 %v2742, %v2734
    %v4319 = vpack.c.b16 %v2743, %v2735
    %v4320 = vpack.c.b16 %v2744, %v2736
    %v4321 = vpack.c.b16 %v2745, %v2737
    %v4322 = vpack.c.b16 %v2754, %v2746
    %v4323 = vpack.c.b16 %v2755, %v2747
    %v4324 = vpack.c.b16 %v2756, %v2748
    %v4325 = vpack.c.b16 %v2757, %v2749
    %v4326 = vpack.c.b16 %v2758, %v2750
    %v4327 = vpack.c.b16 %v2759, %v2751
    %v4328 = vpack.c.b16 %v2760, %v2752
    %v4329 = vpack.c.b16 %v2761, %v2753
    %v4330 = vpack.c.b16 %v2770, %v2762
    %v4331 = vpack.c.b16 %v2771, %v2763
    %v4332 = vpack.c.b16 %v2772, %v2764
    %v4333 = vpack.c.b16 %v2773, %v2765
    %v4334 = vpack.c.b16 %v2774, %v2766
    %v4335 = vpack.c.b16 %v2775, %v2767
    %v4336 = vpack.c.b16 %v2776, %v2768
    %v4337 = vpack.c.b16 %v2777, %v2769
    %v4338 = vpack.c.b16 %v2786, %v2778
    %v4339 = vpack.c.b16 %v2787, %v2779
    %v4340 = vpack.c.b16 %v2788, %v2780
    %v4341 = vpack.c.b16 %v2789, %v2781
    %v4342 = vpack.c.b16 %v2790, %v2782
    %v4343 = vpack.c.b16 %v2791, %v2783
    %v4344 = vpack.c.b16 %v2792, %v2784
    %v4345 = vpack.c.b16 %v2793, %v2785
    %v4346 = vpack.c.b16 %v2802, %v2794
    %v4347 = vpack.c.b16 %v2803, %v2795
    %v4348 = vpack.c.b16 %v2804, %v2796
    %v4349 = vpack.c.b16 %v2805, %v2797
    %v4350 = vpack.c.b16 %v2806, %v2798
    %v4351 = vpack.c.b16 %v2807, %v2799
    %v4352 = vpack.c.b16 %v2808, %v2800
    %v4353 = vpack.c.b16 %v2809, %v2801
    %v4354 = vpack.c.b16 %v2818, %v2810
    %v4355 = vpack.c.b16 %v2819, %v2811
    %v4356 = vpack.c.b16 %v2820, %v2812
    %v4357 = vpack.c.b16 %v2821, %v2813
    %v4358 = vpack.c.b16 %v2822, %v2814
    %v4359 = vpack.c.b16 %v2823, %v2815
    %v4360 = vpack.c.b16 %v2824, %v2816
    %v4361 = vpack.c.b16 %v2825, %v2817
    %v4362 = vpack.c.b16 %v2834, %v2826
    %v4363 = vpack.c.b16 %v2835, %v2827
    %v4364 = vpack.c.b16 %v2836, %v2828
    %v4365 = vpack.c.b16 %v2837, %v2829
    %v4366 = vpack.c.b16 %v2838, %v2830
    %v4367 = vpack.c.b16 %v2839, %v2831
    %v4368 = vpack.c.b16 %v2840, %v2832
    %v4369 = vpack.c.b16 %v2841, %v2833
    %v4370 = vpack.c.b16 %v2850, %v2842
    %v4371 = vpack.c.b16 %v2851, %v2843
    %v4372 = vpack.c.b16 %v2852, %v2844
    %v4373 = vpack.c.b16 %v2853, %v2845
    %v4374 = vpack.c.b16 %v2854, %v2846
    %v4375 = vpack.c.b16 %v2855, %v2847
    %v4376 = vpack.c.b16 %v2856, %v2848
    %v4377 = vpack.c.b16 %v2857, %v2849
    %v4378 = vpack.c.b16 %v2866, %v2858
    %v4379 = vpack.c.b16 %v2867, %v2859
    %v4380 = vpack.c.b16 %v2868, %v2860
    %v4381 = vpack.c.b16 %v2869, %v2861
    %v4382 = vpack.c.b16 %v2870, %v2862
    %v4383 = vpack.c.b16 %v2871, %v2863
    %v4384 = vpack.c.b16 %v2872, %v2864
    %v4385 = vpack.c.b16 %v2873, %v2865
    %v4386 = vpack.c.b16 %v2882, %v2874
    %v4387 = vpack.c.b16 %v2883, %v2875
    %v4388 = vpack.c.b16 %v2884, %v2876
    %v4389 = vpack.c.b16 %v2885, %v2877
    %v4390 = vpack.c.b16 %v2886, %v2878
    %v4391 = vpack.c.b16 %v2887, %v2879
    %v4392 = vpack.c.b16 %v2888, %v2880
    %v4393 = vpack.c.b16 %v2889, %v2881
    %v4394 = vpack.c.b16 %v2898, %v2890
    %v4395 = vpack.c.b16 %v2899, %v2891
    %v4396 = vpack.c.b16 %v2900, %v2892
    %v4397 = vpack.c.b16 %v2901, %v2893
    %v4398 = vpack.c.b16 %v2902, %v2894
    %v4399 = vpack.c.b16 %v2903, %v2895
    %v4400 = vpack.c.b16 %v2904, %v2896
    %v4401 = vpack.c.b16 %v2905, %v2897
    %v4402 = vpack.c.b16 %v2914, %v2906
    %v4403 = vpack.c.b16 %v2915, %v2907
    %v4404 = vpack.c.b16 %v2916, %v2908
    %v4405 = vpack.c.b16 %v2917, %v2909
    %v4406 = vpack.c.b16 %v2918, %v2910
    %v4407 = vpack.c.b16 %v2919, %v2911
    %v4408 = vpack.c.b16 %v2920, %v2912
    %v4409 = vpack.c.b16 %v2921, %v2913
    %v4410 = vpack.c.b16 %v2930, %v2922
    %v4411 = vpack.c.b16 %v2931, %v2923
    %v4412 = vpack.c.b16 %v2932, %v2924
    %v4413 = vpack.c.b16 %v2933, %v2925
    %v4414 = vpack.c.b16 %v2934, %v2926
    %v4415 = vpack.c.b16 %v2935, %v2927
    %v4416 = vpack.c.b16 %v2936, %v2928
    %v4417 = vpack.c.b16 %v2937, %v2929
    %v4418 = vpack.c.b16 %v2946, %v2938
    %v4419 = vpack.c.b16 %v2947, %v2939
    %v4420 = vpack.c.b16 %v2948, %v2940
    %v4421 = vpack.c.b16 %v2949, %v2941
    %v4422 = vpack.c.b16 %v2950, %v2942
    %v4423 = vpack.c.b16 %v2951, %v2943
    %v4424 = vpack.c.b16 %v2952, %v2944
    %v4425 = vpack.c.b16 %v2953, %v2945
    %v4426 = vpack.c.b16 %v2962, %v2954
    %v4427 = vpack.c.b16 %v2963, %v2955
    %v4428 = vpack.c.b16 %v2964, %v2956
    %v4429 = vpack.c.b16 %v2965, %v2957
    %v4430 = vpack.c.b16 %v2966, %v2958
    %v4431 = vpack.c.b16 %v2967, %v2959
    %v4432 = vpack.c.b16 %v2968, %v2960
    %v4433 = vpack.c.b16 %v2969, %v2961
    %v4434 = vpack.c.b16 %v2978, %v2970
    %v4435 = vpack.c.b16 %v2979, %v2971
    %v4436 = vpack.c.b16 %v2980, %v2972
    %v4437 = vpack.c.b16 %v2981, %v2973
    %v4438 = vpack.c.b16 %v2982, %v2974
    %v4439 = vpack.c.b16 %v2983, %v2975
    %v4440 = vpack.c.b16 %v2984, %v2976
    %v4441 = vpack.c.b16 %v2985, %v2977
    %v4442 = vpack.c.b16 %v2994, %v2986
    %v4443 = vpack.c.b16 %v2995, %v2987
    %v4444 = vpack.c.b16 %v2996, %v2988
    %v4445 = vpack.c.b16 %v2997, %v2989
    %v4446 = vpack.c.b16 %v2998, %v2990
    %v4447 = vpack.c.b16 %v2999, %v2991
    %v4448 = vpack.c.b16 %v3000, %v2992
    %v4449 = vpack.c.b16 %v3001, %v2993
    %v4450 = vpack.c.b16 %v3010, %v3002
    %v4451 = vpack.c.b16 %v3011, %v3003
    %v4452 = vpack.c.b16 %v3012, %v3004
    %v4453 = vpack.c.b16 %v3013, %v3005
    %v4454 = vpack.c.b16 %v3014, %v3006
    %v4455 = vpack.c.b16 %v3015, %v3007
    %v4456 = vpack.c.b16 %v3016, %v3008
    %v4457 = vpack.c.b16 %v3017, %v3009
    %v4458 = vpack.c.b16 %v3026, %v3018
    %v4459 = vpack.c.b16 %v3027, %v3019
    %v4460 = vpack.c.b16 %v3028, %v3020
    %v4461 = vpack.c.b16 %v3029, %v3021
    %v4462 = vpack.c.b16 %v3030, %v3022
    %v4463 = vpack.c.b16 %v3031, %v3023
    %v4464 = vpack.c.b16 %v3032, %v3024
    %v4465 = vpack.c.b16 %v3033, %v3025
    %v4466 = vpack.c.b16 %v3042, %v3034
    %v4467 = vpack.c.b16 %v3043, %v3035
    %v4468 = vpack.c.b16 %v3044, %v3036
    %v4469 = vpack.c.b16 %v3045, %v3037
    %v4470 = vpack.c.b16 %v3046, %v3038
    %v4471 = vpack.c.b16 %v3047, %v3039
    %v4472 = vpack.c.b16 %v3048, %v3040
    %v4473 = vpack.c.b16 %v3049, %v3041
    %v4474 = vpack.c.b16 %v3058, %v3050
    %v4475 = vpack.c.b16 %v3059, %v3051
    %v4476 = vpack.c.b16 %v3060, %v3052
    %v4477 = vpack.c.b16 %v3061, %v3053
    %v4478 = vpack.c.b16 %v3062, %v3054
    %v4479 = vpack.c.b16 %v3063, %v3055
    %v4480 = vpack.c.b16 %v3064, %v3056
    %v4481 = vpack.c.b16 %v3065, %v3057
    %v4482 = vpack.c.b16 %v3074, %v3066
    %v4483 = vpack.c.b16 %v3075, %v3067
    %v4484 = vpack.c.b16 %v3076, %v3068
    %v4485 = vpack.c.b16 %v3077, %v3069
    %v4486 = vpack.c.b16 %v3078, %v3070
    %v4487 = vpack.c.b16 %v3079, %v3071
    %v4488 = vpack.c.b16 %v3080, %v3072
    %v4489 = vpack.c.b16 %v3081, %v3073
    %v4490 = vpack.c.b16 %v3090, %v3082
    %v4491 = vpack.c.b16 %v3091, %v3083
    %v4492 = vpack.c.b16 %v3092, %v3084
    %v4493 = vpack.c.b16 %v3093, %v3085
    %v4494 = vpack.c.b16 %v3094, %v3086
    %v4495 = vpack.c.b16 %v3095, %v3087
    %v4496 = vpack.c.b16 %v3096, %v3088
    %v4497 = vpack.c.b16 %v3097, %v3089
    %v4498 = vpack.c.b16 %v3106, %v3098
    %v4499 = vpack.c.b16 %v3107, %v3099
    %v4500 = vpack.c.b16 %v3108, %v3100
    %v4501 = vpack.c.b16 %v3109, %v3101
    %v4502 = vpack.c.b16 %v3110, %v3102
    %v4503 = vpack.c.b16 %v3111, %v3103
    %v4504 = vpack.c.b16 %v3112, %v3104
    %v4505 = vpack.c.b16 %v3113, %v3105
    %v4506 = vpack.c.b16 %v3122, %v3114
    %v4507 = vpack.c.b16 %v3123, %v3115
    %v4508 = vpack.c.b16 %v3124, %v3116
    %v4509 = vpack.c.b16 %v3125, %v3117
    %v4510 = vpack.c.b16 %v3126, %v3118
    %v4511 = vpack.c.b16 %v3127, %v3119
    %v4512 = vpack.c.b16 %v3128, %v3120
    %v4513 = vpack.c.b16 %v3129, %v3121
    %v4514 = vpack.c.b16 %v3138, %v3130
    %v4515 = vpack.c.b16 %v3139, %v3131
    %v4516 = vpack.c.b16 %v3140, %v3132
    %v4517 = vpack.c.b16 %v3141, %v3133
    %v4518 = vpack.c.b16 %v3142, %v3134
    %v4519 = vpack.c.b16 %v3143, %v3135
    %v4520 = vpack.c.b16 %v3144, %v3136
    %v4521 = vpack.c.b16 %v3145, %v3137
    %v4522 = vpack.c.b16 %v3154, %v3146
    %v4523 = vpack.c.b16 %v3155, %v3147
    %v4524 = vpack.c.b16 %v3156, %v3148
    %v4525 = vpack.c.b16 %v3157, %v3149
    %v4526 = vpack.c.b16 %v3158, %v3150
    %v4527 = vpack.c.b16 %v3159, %v3151
    %v4528 = vpack.c.b16 %v3160, %v3152
    %v4529 = vpack.c.b16 %v3161, %v3153
    %v4530 = vpack.c.b16 %v3170, %v3162
    %v4531 = vpack.c.b16 %v3171, %v3163
    %v4532 = vpack.c.b16 %v3172, %v3164
    %v4533 = vpack.c.b16 %v3173, %v3165
    %v4534 = vpack.c.b16 %v3174, %v3166
    %v4535 = vpack.c.b16 %v3175, %v3167
    %v4536 = vpack.c.b16 %v3176, %v3168
    %v4537 = vpack.c.b16 %v3177, %v3169
    %v4538 = vpack.c.b16 %v3186, %v3178
    %v4539 = vpack.c.b16 %v3187, %v3179
    %v4540 = vpack.c.b16 %v3188, %v3180
    %v4541 = vpack.c.b16 %v3189, %v3181
    %v4542 = vpack.c.b16 %v3190, %v3182
    %v4543 = vpack.c.b16 %v3191, %v3183
    %v4544 = vpack.c.b16 %v3192, %v3184
    %v4545 = vpack.c.b16 %v3193, %v3185
    %v4546 = vpack.c.b16 %v3202, %v3194
    %v4547 = vpack.c.b16 %v3203, %v3195
    %v4548 = vpack.c.b16 %v3204, %v3196
    %v4549 = vpack.c.b16 %v3205, %v3197
    %v4550 = vpack.c.b16 %v3206, %v3198
    %v4551 = vpack.c.b16 %v3207, %v3199
    %v4552 = vpack.c.b16 %v3208, %v3200
    %v4553 = vpack.c.b16 %v3209, %v3201
    %v4554 = vpack.c.b16 %v3218, %v3210
    %v4555 = vpack.c.b16 %v3219, %v3211
    %v4556 = vpack.c.b16 %v3220, %v3212
    %v4557 = vpack.c.b16 %v3221, %v3213
    %v4558 = vpack.c.b16 %v3222, %v3214
    %v4559 = vpack.c.b16 %v3223, %v3215
    %v4560 = vpack.c.b16 %v3224, %v3216
    %v4561 = vpack.c.b16 %v3225, %v3217
    %v4562 = vpack.c.b16 %v3234, %v3226
    %v4563 = vpack.c.b16 %v3235, %v3227
    %v4564 = vpack.c.b16 %v3236, %v3228
    %v4565 = vpack.c.b16 %v3237, %v3229
    %v4566 = vpack.c.b16 %v3238, %v3230
    %v4567 = vpack.c.b16 %v3239, %v3231
    %v4568 = vpack.c.b16 %v3240, %v3232
    %v4569 = vpack.c.b16 %v3241, %v3233
    %v4570 = vpack.c.b16 %v3250, %v3242
    %v4571 = vpack.c.b16 %v3251, %v3243
    %v4572 = vpack.c.b16 %v3252, %v3244
    %v4573 = vpack.c.b16 %v3253, %v3245
    %v4574 = vpack.c.b16 %v3254, %v3246
    %v4575 = vpack.c.b16 %v3255, %v3247
    %v4576 = vpack.c.b16 %v3256, %v3248
    %v4577 = vpack.c.b16 %v3257, %v3249
    %v4578 = vpack.c.b16 %v3266, %v3258
    %v4579 = vpack.c.b16 %v3267, %v3259
    %v4580 = vpack.c.b16 %v3268, %v3260
    %v4581 = vpack.c.b16 %v3269, %v3261
    %v4582 = vpack.c.b16 %v3270, %v3262
    %v4583 = vpack.c.b16 %v3271, %v3263
    %v4584 = vpack.c.b16 %v3272, %v3264
    %v4585 = vpack.c.b16 %v3273, %v3265
    %v4586 = vpack.c.b16 %v3282, %v3274
    %v4587 = vpack.c.b16 %v3283, %v3275
    %v4588 = vpack.c.b16 %v3284, %v3276
    %v4589 = vpack.c.b16 %v3285, %v3277
    %v4590 = vpack.c.b16 %v3286, %v3278
    %v4591 = vpack.c.b16 %v3287, %v3279
    %v4592 = vpack.c.b16 %v3288, %v3280
    %v4593 = vpack.c.b16 %v3289, %v3281
    %v4594 = vpack.c.b16 %v3298, %v3290
    %v4595 = vpack.c.b16 %v3299, %v3291
    %v4596 = vpack.c.b16 %v3300, %v3292
    %v4597 = vpack.c.b16 %v3301, %v3293
    %v4598 = vpack.c.b16 %v3302, %v3294
    %v4599 = vpack.c.b16 %v3303, %v3295
    %v4600 = vpack.c.b16 %v3304, %v3296
    %v4601 = vpack.c.b16 %v3305, %v3297
    %v4602 = vpack.c.b16 %v3314, %v3306
    %v4603 = vpack.c.b16 %v3315, %v3307
    %v4604 = vpack.c.b16 %v3316, %v3308
    %v4605 = vpack.c.b16 %v3317, %v3309
    %v4606 = vpack.c.b16 %v3318, %v3310
    %v4607 = vpack.c.b16 %v3319, %v3311
    %v4608 = vpack.c.b16 %v3320, %v3312
    %v4609 = vpack.c.b16 %v3321, %v3313
    %v4610 = vpack.c.b16 %v3330, %v3322
    %v4611 = vpack.c.b16 %v3331, %v3323
    %v4612 = vpack.c.b16 %v3332, %v3324
    %v4613 = vpack.c.b16 %v3333, %v3325
    %v4614 = vpack.c.b16 %v3334, %v3326
    %v4615 = vpack.c.b16 %v3335, %v3327
    %v4616 = vpack.c.b16 %v3336, %v3328
    %v4617 = vpack.c.b16 %v3337, %v3329
    %v4618 = vpack.c.b16 %v3346, %v3338
    %v4619 = vpack.c.b16 %v3347, %v3339
    %v4620 = vpack.c.b16 %v3348, %v3340
    %v4621 = vpack.c.b16 %v3349, %v3341
    %v4622 = vpack.c.b16 %v3350, %v3342
    %v4623 = vpack.c.b16 %v3351, %v3343
    %v4624 = vpack.c.b16 %v3352, %v3344
    %v4625 = vpack.c.b16 %v3353, %v3345
    %v4626 = vpack.c.b16 %v3362, %v3354
    %v4627 = vpack.c.b16 %v3363, %v3355
    %v4628 = vpack.c.b16 %v3364, %v3356
    %v4629 = vpack.c.b16 %v3365, %v3357
    %v4630 = vpack.c.b16 %v3366, %v3358
    %v4631 = vpack.c.b16 %v3367, %v3359
    %v4632 = vpack.c.b16 %v3368, %v3360
    %v4633 = vpack.c.b16 %v3369, %v3361
    %v4634 = vpack.c.b16 %v3378, %v3370
    %v4635 = vpack.c.b16 %v3379, %v3371
    %v4636 = vpack.c.b16 %v3380, %v3372
    %v4637 = vpack.c.b16 %v3381, %v3373
    %v4638 = vpack.c.b16 %v3382, %v3374
    %v4639 = vpack.c.b16 %v3383, %v3375
    %v4640 = vpack.c.b16 %v3384, %v3376
    %v4641 = vpack.c.b16 %v3385, %v3377
    %v4642 = vpack.c.b16 %v3394, %v3386
    %v4643 = vpack.c.b16 %v3395, %v3387
    %v4644 = vpack.c.b16 %v3396, %v3388
    %v4645 = vpack.c.b16 %v3397, %v3389
    %v4646 = vpack.c.b16 %v3398, %v3390
    %v4647 = vpack.c.b16 %v3399, %v3391
    %v4648 = vpack.c.b16 %v3400, %v3392
    %v4649 = vpack.c.b16 %v3401, %v3393
    %v4650 = vpack.c.b16 %v3410, %v3402
    %v4651 = vpack.c.b16 %v3411, %v3403
    %v4652 = vpack.c.b16 %v3412, %v3404
    %v4653 = vpack.c.b16 %v3413, %v3405
    %v4654 = vpack.c.b16 %v3414, %v3406
    %v4655 = vpack.c.b16 %v3415, %v3407
    %v4656 = vpack.c.b16 %v3416, %v3408
    %v4657 = vpack.c.b16 %v3417, %v3409
    %v4658 = vpack.c.b16 %v3426, %v3418
    %v4659 = vpack.c.b16 %v3427, %v3419
    %v4660 = vpack.c.b16 %v3428, %v3420
    %v4661 = vpack.c.b16 %v3429, %v3421
    %v4662 = vpack.c.b16 %v3430, %v3422
    %v4663 = vpack.c.b16 %v3431, %v3423
    %v4664 = vpack.c.b16 %v3432, %v3424
    %v4665 = vpack.c.b16 %v3433, %v3425
    %v4666 = vpack.c.b16 %v3442, %v3434
    %v4667 = vpack.c.b16 %v3443, %v3435
    %v4668 = vpack.c.b16 %v3444, %v3436
    %v4669 = vpack.c.b16 %v3445, %v3437
    %v4670 = vpack.c.b16 %v3446, %v3438
    %v4671 = vpack.c.b16 %v3447, %v3439
    %v4672 = vpack.c.b16 %v3448, %v3440
    %v4673 = vpack.c.b16 %v3449, %v3441
    %v4674 = vpack.c.b16 %v3458, %v3450
    %v4675 = vpack.c.b16 %v3459, %v3451
    %v4676 = vpack.c.b16 %v3460, %v3452
    %v4677 = vpack.c.b16 %v3461, %v3453
    %v4678 = vpack.c.b16 %v3462, %v3454
    %v4679 = vpack.c.b16 %v3463, %v3455
    %v4680 = vpack.c.b16 %v3464, %v3456
    %v4681 = vpack.c.b16 %v3465, %v3457
    %v4682 = vpack.c.b16 %v3474, %v3466
    %v4683 = vpack.c.b16 %v3475, %v3467
    %v4684 = vpack.c.b16 %v3476, %v3468
    %v4685 = vpack.c.b16 %v3477, %v3469
    %v4686 = vpack.c.b16 %v3478, %v3470
    %v4687 = vpack.c.b16 %v3479, %v3471
    %v4688 = vpack.c.b16 %v3480, %v3472
    %v4689 = vpack.c.b16 %v3481, %v3473
    %v4690 = vpack.c.b16 %v3490, %v3482
    %v4691 = vpack.c.b16 %v3491, %v3483
    %v4692 = vpack.c.b16 %v3492, %v3484
    %v4693 = vpack.c.b16 %v3493, %v3485
    %v4694 = vpack.c.b16 %v3494, %v3486
    %v4695 = vpack.c.b16 %v3495, %v3487
    %v4696 = vpack.c.b16 %v3496, %v3488
    %v4697 = vpack.c.b16 %v3497, %v3489
    %v4698 = vpack.c.b16 %v3506, %v3498
    %v4699 = vpack.c.b16 %v3507, %v3499
    %v4700 = vpack.c.b16 %v3508, %v3500
    %v4701 = vpack.c.b16 %v3509, %v3501
    %v4702 = vpack.c.b16 %v3510, %v3502
    %v4703 = vpack.c.b16 %v3511, %v3503
    %v4704 = vpack.c.b16 %v3512, %v3504
    %v4705 = vpack.c.b16 %v3513, %v3505
    %v4706 = vpack.c.b16 %v3522, %v3514
    %v4707 = vpack.c.b16 %v3523, %v3515
    %v4708 = vpack.c.b16 %v3524, %v3516
    %v4709 = vpack.c.b16 %v3525, %v3517
    %v4710 = vpack.c.b16 %v3526, %v3518
    %v4711 = vpack.c.b16 %v3527, %v3519
    %v4712 = vpack.c.b16 %v3528, %v3520
    %v4713 = vpack.c.b16 %v3529, %v3521
    %v4714 = vpack.c.b16 %v3538, %v3530
    %v4715 = vpack.c.b16 %v3539, %v3531
    %v4716 = vpack.c.b16 %v3540, %v3532
    %v4717 = vpack.c.b16 %v3541, %v3533
    %v4718 = vpack.c.b16 %v3542, %v3534
    %v4719 = vpack.c.b16 %v3543, %v3535
    %v4720 = vpack.c.b16 %v3544, %v3536
    %v4721 = vpack.c.b16 %v3545, %v3537
    %v4722 = vpack.c.b16 %v3554, %v3546
    %v4723 = vpack.c.b16 %v3555, %v3547
    %v4724 = vpack.c.b16 %v3556, %v3548
    %v4725 = vpack.c.b16 %v3557, %v3549
    %v4726 = vpack.c.b16 %v3558, %v3550
    %v4727 = vpack.c.b16 %v3559, %v3551
    %v4728 = vpack.c.b16 %v3560, %v3552
    %v4729 = vpack.c.b16 %v3561, %v3553
    %v4730 = vpack.c.b16 %v3570, %v3562
    %v4731 = vpack.c.b16 %v3571, %v3563
    %v4732 = vpack.c.b16 %v3572, %v3564
    %v4733 = vpack.c.b16 %v3573, %v3565
    %v4734 = vpack.c.b16 %v3574, %v3566
    %v4735 = vpack.c.b16 %v3575, %v3567
    %v4736 = vpack.c.b16 %v3576, %v3568
    %v4737 = vpack.c.b16 %v3577, %v3569
    %v4738 = vpack.c.b16 %v3586, %v3578
    %v4739 = vpack.c.b16 %v3587, %v3579
    %v4740 = vpack.c.b16 %v3588, %v3580
    %v4741 = vpack.c.b16 %v3589, %v3581
    %v4742 = vpack.c.b16 %v3590, %v3582
    %v4743 = vpack.c.b16 %v3591, %v3583
    %v4744 = vpack.c.b16 %v3592, %v3584
    %v4745 = vpack.c.b16 %v3593, %v3585
    %v4746 = vpack.c.b16 %v3602, %v3594
    %v4747 = vpack.c.b16 %v3603, %v3595
    %v4748 = vpack.c.b16 %v3604, %v3596
    %v4749 = vpack.c.b16 %v3605, %v3597
    %v4750 = vpack.c.b16 %v3606, %v3598
    %v4751 = vpack.c.b16 %v3607, %v3599
    %v4752 = vpack.c.b16 %v3608, %v3600
    %v4753 = vpack.c.b16 %v3609, %v3601
    %v4754 = vpack.c.b16 %v3618, %v3610
    %v4755 = vpack.c.b16 %v3619, %v3611
    %v4756 = vpack.c.b16 %v3620, %v3612
    %v4757 = vpack.c.b16 %v3621, %v3613
    %v4758 = vpack.c.b16 %v3622, %v3614
    %v4759 = vpack.c.b16 %v3623, %v3615
    %v4760 = vpack.c.b16 %v3624, %v3616
    %v4761 = vpack.c.b16 %v3625, %v3617
    %v4762 = vpack.c.b16 %v3634, %v3626
    %v4763 = vpack.c.b16 %v3635, %v3627
    %v4764 = vpack.c.b16 %v3636, %v3628
    %v4765 = vpack.c.b16 %v3637, %v3629
    %v4766 = vpack.c.b16 %v3638, %v3630
    %v4767 = vpack.c.b16 %v3639, %v3631
    %v4768 = vpack.c.b16 %v3640, %v3632
    %v4769 = vpack.c.b16 %v3641, %v3633
    %v4770 = vpack.c.b16 %v3650, %v3642
    %v4771 = vpack.c.b16 %v3651, %v3643
    %v4772 = vpack.c.b16 %v3652, %v3644
    %v4773 = vpack.c.b16 %v3653, %v3645
    %v4774 = vpack.c.b16 %v3654, %v3646
    %v4775 = vpack.c.b16 %v3655, %v3647
    %v4776 = vpack.c.b16 %v3656, %v3648
    %v4777 = vpack.c.b16 %v3657, %v3649
    %v4778 = vpack.c.b16 %v3666, %v3658
    %v4779 = vpack.c.b16 %v3667, %v3659
    %v4780 = vpack.c.b16 %v3668, %v3660
    %v4781 = vpack.c.b16 %v3669, %v3661
    %v4782 = vpack.c.b16 %v3670, %v3662
    %v4783 = vpack.c.b16 %v3671, %v3663
    %v4784 = vpack.c.b16 %v3672, %v3664
    %v4785 = vpack.c.b16 %v3673, %v3665
    %v4786 = vpack.c.b16 %v3682, %v3674
    %v4787 = vpack.c.b16 %v3683, %v3675
    %v4788 = vpack.c.b16 %v3684, %v3676
    %v4789 = vpack.c.b16 %v3685, %v3677
    %v4790 = vpack.c.b16 %v3686, %v3678
    %v4791 = vpack.c.b16 %v3687, %v3679
    %v4792 = vpack.c.b16 %v3688, %v3680
    %v4793 = vpack.c.b16 %v3689, %v3681
    %v4794 = vpack.c.b16 %v3698, %v3690
    %v4795 = vpack.c.b16 %v3699, %v3691
    %v4796 = vpack.c.b16 %v3700, %v3692
    %v4797 = vpack.c.b16 %v3701, %v3693
    %v4798 = vpack.c.b16 %v3702, %v3694
    %v4799 = vpack.c.b16 %v3703, %v3695
    %v4800 = vpack.c.b16 %v3704, %v3696
    %v4801 = vpack.c.b16 %v3705, %v3697
    %v4802 = vpack.c.b16 %v3714, %v3706
    %v4803 = vpack.c.b16 %v3715, %v3707
    %v4804 = vpack.c.b16 %v3716, %v3708
    %v4805 = vpack.c.b16 %v3717, %v3709
    %v4806 = vpack.c.b16 %v3718, %v3710
    %v4807 = vpack.c.b16 %v3719, %v3711
    %v4808 = vpack.c.b16 %v3720, %v3712
    %v4809 = vpack.c.b16 %v3721, %v3713
    %v4810 = vpack.c.b16 %v3730, %v3722
    %v4811 = vpack.c.b16 %v3731, %v3723
    %v4812 = vpack.c.b16 %v3732, %v3724
    %v4813 = vpack.c.b16 %v3733, %v3725
    %v4814 = vpack.c.b16 %v3734, %v3726
    %v4815 = vpack.c.b16 %v3735, %v3727
    %v4816 = vpack.c.b16 %v3736, %v3728
    %v4817 = vpack.c.b16 %v3737, %v3729
    %v4818 = vpack.c.b16 %v3746, %v3738
    %v4819 = vpack.c.b16 %v3747, %v3739
    %v4820 = vpack.c.b16 %v3748, %v3740
    %v4821 = vpack.c.b16 %v3749, %v3741
    %v4822 = vpack.c.b16 %v3750, %v3742
    %v4823 = vpack.c.b16 %v3751, %v3743
    %v4824 = vpack.c.b16 %v3752, %v3744
    %v4825 = vpack.c.b16 %v3753, %v3745
    %v4826 = vpack.c.b16 %v3762, %v3754
    %v4827 = vpack.c.b16 %v3763, %v3755
    %v4828 = vpack.c.b16 %v3764, %v3756
    %v4829 = vpack.c.b16 %v3765, %v3757
    %v4830 = vpack.c.b16 %v3766, %v3758
    %v4831 = vpack.c.b16 %v3767, %v3759
    %v4832 = vpack.c.b16 %v3768, %v3760
    %v4833 = vpack.c.b16 %v3769, %v3761
    %v4834 = vpack.c.b16 %v3778, %v3770
    %v4835 = vpack.c.b16 %v3779, %v3771
    %v4836 = vpack.c.b16 %v3780, %v3772
    %v4837 = vpack.c.b16 %v3781, %v3773
    %v4838 = vpack.c.b16 %v3782, %v3774
    %v4839 = vpack.c.b16 %v3783, %v3775
    %v4840 = vpack.c.b16 %v3784, %v3776
    %v4841 = vpack.c.b16 %v3785, %v3777
    %v4842 = vpack.c.b16 %v3794, %v3786
    %v4843 = vpack.c.b16 %v3795, %v3787
    %v4844 = vpack.c.b16 %v3796, %v3788
    %v4845 = vpack.c.b16 %v3797, %v3789
    %v4846 = vpack.c.b16 %v3798, %v3790
    %v4847 = vpack.c.b16 %v3799, %v3791
    %v4848 = vpack.c.b16 %v3800, %v3792
    %v4849 = vpack.c.b16 %v3801, %v3793
    %v4850 = vpack.c.b16 %v3810, %v3802
    %v4851 = vpack.c.b16 %v3811, %v3803
    %v4852 = vpack.c.b16 %v3812, %v3804
    %v4853 = vpack.c.b16 %v3813, %v3805
    %v4854 = vpack.c.b16 %v3814, %v3806
    %v4855 = vpack.c.b16 %v3815, %v3807
    %v4856 = vpack.c.b16 %v3816, %v3808
    %v4857 = vpack.c.b16 %v3817, %v3809
    %v4858 = vpack.c.b16 %v3826, %v3818
    %v4859 = vpack.c.b16 %v3827, %v3819
    %v4860 = vpack.c.b16 %v3828, %v3820
    %v4861 = vpack.c.b16 %v3829, %v3821
    %v4862 = vpack.c.b16 %v3830, %v3822
    %v4863 = vpack.c.b16 %v3831, %v3823
    %v4864 = vpack.c.b16 %v3832, %v3824
    %v4865 = vpack.c.b16 %v3833, %v3825
    %v4866 = vpack.c.b16 %v3842, %v3834
    %v4867 = vpack.c.b16 %v3843, %v3835
    %v4868 = vpack.c.b16 %v3844, %v3836
    %v4869 = vpack.c.b16 %v3845, %v3837
    %v4870 = vpack.c.b16 %v3846, %v3838
    %v4871 = vpack.c.b16 %v3847, %v3839
    %v4872 = vpack.c.b16 %v3848, %v3840
    %v4873 = vpack.c.b16 %v3849, %v3841
    %v4874 = vpack.c.b16 %v3858, %v3850
    %v4875 = vpack.c.b16 %v3859, %v3851
    %v4876 = vpack.c.b16 %v3860, %v3852
    %v4877 = vpack.c.b16 %v3861, %v3853
    %v4878 = vpack.c.b16 %v3862, %v3854
    %v4879 = vpack.c.b16 %v3863, %v3855
    %v4880 = vpack.c.b16 %v3864, %v3856
    %v4881 = vpack.c.b16 %v3865, %v3857
    %v4882 = vpack.c.b16 %v3874, %v3866
    %v4883 = vpack.c.b16 %v3875, %v3867
    %v4884 = vpack.c.b16 %v3876, %v3868
    %v4885 = vpack.c.b16 %v3877, %v3869
    %v4886 = vpack.c.b16 %v3878, %v3870
    %v4887 = vpack.c.b16 %v3879, %v3871
    %v4888 = vpack.c.b16 %v3880, %v3872
    %v4889 = vpack.c.b16 %v3881, %v3873
    %v4890 = vpack.c.b16 %v3890, %v3882
    %v4891 = vpack.c.b16 %v3891, %v3883
    %v4892 = vpack.c.b16 %v3892, %v3884
    %v4893 = vpack.c.b16 %v3893, %v3885
    %v4894 = vpack.c.b16 %v3894, %v3886
    %v4895 = vpack.c.b16 %v3895, %v3887
    %v4896 = vpack.c.b16 %v3896, %v3888
    %v4897 = vpack.c.b16 %v3897, %v3889
    %v4898 = vpack.c.b16 %v3906, %v3898
    %v4899 = vpack.c.b16 %v3907, %v3899
    %v4900 = vpack.c.b16 %v3908, %v3900
    %v4901 = vpack.c.b16 %v3909, %v3901
    %v4902 = vpack.c.b16 %v3910, %v3902
    %v4903 = vpack.c.b16 %v3911, %v3903
    %v4904 = vpack.c.b16 %v3912, %v3904
    %v4905 = vpack.c.b16 %v3913, %v3905
    %v4906 = vpack.c.b16 %v3922, %v3914
    %v4907 = vpack.c.b16 %v3923, %v3915
    %v4908 = vpack.c.b16 %v3924, %v3916
    %v4909 = vpack.c.b16 %v3925, %v3917
    %v4910 = vpack.c.b16 %v3926, %v3918
    %v4911 = vpack.c.b16 %v3927, %v3919
    %v4912 = vpack.c.b16 %v3928, %v3920
    %v4913 = vpack.c.b16 %v3929, %v3921
    %v4914 = vpack.c.b16 %v3938, %v3930
    %v4915 = vpack.c.b16 %v3939, %v3931
    %v4916 = vpack.c.b16 %v3940, %v3932
    %v4917 = vpack.c.b16 %v3941, %v3933
    %v4918 = vpack.c.b16 %v3942, %v3934
    %v4919 = vpack.c.b16 %v3943, %v3935
    %v4920 = vpack.c.b16 %v3944, %v3936
    %v4921 = vpack.c.b16 %v3945, %v3937
    %v4922 = vpack.c.b16 %v3954, %v3946
    %v4923 = vpack.c.b16 %v3955, %v3947
    %v4924 = vpack.c.b16 %v3956, %v3948
    %v4925 = vpack.c.b16 %v3957, %v3949
    %v4926 = vpack.c.b16 %v3958, %v3950
    %v4927 = vpack.c.b16 %v3959, %v3951
    %v4928 = vpack.c.b16 %v3960, %v3952
    %v4929 = vpack.c.b16 %v3961, %v3953
    %v4930 = vpack.c.b16 %v3970, %v3962
    %v4931 = vpack.c.b16 %v3971, %v3963
    %v4932 = vpack.c.b16 %v3972, %v3964
    %v4933 = vpack.c.b16 %v3973, %v3965
    %v4934 = vpack.c.b16 %v3974, %v3966
    %v4935 = vpack.c.b16 %v3975, %v3967
    %v4936 = vpack.c.b16 %v3976, %v3968
    %v4937 = vpack.c.b16 %v3977, %v3969
    %v4938 = vpack.c.b16 %v3986, %v3978
    %v4939 = vpack.c.b16 %v3987, %v3979
    %v4940 = vpack.c.b16 %v3988, %v3980
    %v4941 = vpack.c.b16 %v3989, %v3981
    %v4942 = vpack.c.b16 %v3990, %v3982
    %v4943 = vpack.c.b16 %v3991, %v3983
    %v4944 = vpack.c.b16 %v3992, %v3984
    %v4945 = vpack.c.b16 %v3993, %v3985
    %v4946 = vpack.c.b16 %v4002, %v3994
    %v4947 = vpack.c.b16 %v4003, %v3995
    %v4948 = vpack.c.b16 %v4004, %v3996
    %v4949 = vpack.c.b16 %v4005, %v3997
    %v4950 = vpack.c.b16 %v4006, %v3998
    %v4951 = vpack.c.b16 %v4007, %v3999
    %v4952 = vpack.c.b16 %v4008, %v4000
    %v4953 = vpack.c.b16 %v4009, %v4001
    %v4954 = vpack.c.b16 %v4018, %v4010
    %v4955 = vpack.c.b16 %v4019, %v4011
    %v4956 = vpack.c.b16 %v4020, %v4012
    %v4957 = vpack.c.b16 %v4021, %v4013
    %v4958 = vpack.c.b16 %v4022, %v4014
    %v4959 = vpack.c.b16 %v4023, %v4015
    %v4960 = vpack.c.b16 %v4024, %v4016
    %v4961 = vpack.c.b16 %v4025, %v4017
    %v4962 = vpack.c.b16 %v4034, %v4026
    %v4963 = vpack.c.b16 %v4035, %v4027
    %v4964 = vpack.c.b16 %v4036, %v4028
    %v4965 = vpack.c.b16 %v4037, %v4029
    %v4966 = vpack.c.b16 %v4038, %v4030
    %v4967 = vpack.c.b16 %v4039, %v4031
    %v4968 = vpack.c.b16 %v4040, %v4032
    %v4969 = vpack.c.b16 %v4041, %v4033
    %v4970 = vpack.c.b16 %v4050, %v4042
    %v4971 = vpack.c.b16 %v4051, %v4043
    %v4972 = vpack.c.b16 %v4052, %v4044
    %v4973 = vpack.c.b16 %v4053, %v4045
    %v4974 = vpack.c.b16 %v4054, %v4046
    %v4975 = vpack.c.b16 %v4055, %v4047
    %v4976 = vpack.c.b16 %v4056, %v4048
    %v4977 = vpack.c.b16 %v4057, %v4049
    %v4978 = vpack.c.b16 %v4066, %v4058
    %v4979 = vpack.c.b16 %v4067, %v4059
    %v4980 = vpack.c.b16 %v4068, %v4060
    %v4981 = vpack.c.b16 %v4069, %v4061
    %v4982 = vpack.c.b16 %v4070, %v4062
    %v4983 = vpack.c.b16 %v4071, %v4063
    %v4984 = vpack.c.b16 %v4072, %v4064
    %v4985 = vpack.c.b16 %v4073, %v4065
    %v4986 = vpack.c.b16 %v4082, %v4074
    %v4987 = vpack.c.b16 %v4083, %v4075
    %v4988 = vpack.c.b16 %v4084, %v4076
    %v4989 = vpack.c.b16 %v4085, %v4077
    %v4990 = vpack.c.b16 %v4086, %v4078
    %v4991 = vpack.c.b16 %v4087, %v4079
    %v4992 = vpack.c.b16 %v4088, %v4080
    %v4993 = vpack.c.b16 %v4089, %v4081
    %v4994 = vpack.c.b16 %v4098, %v4090
    %v4995 = vpack.c.b16 %v4099, %v4091
    %v4996 = vpack.c.b16 %v4100, %v4092
    %v4997 = vpack.c.b16 %v4101, %v4093
    %v4998 = vpack.c.b16 %v4102, %v4094
    %v4999 = vpack.c.b16 %v4103, %v4095
    %v5000 = vpack.c.b16 %v4104, %v4096
    %v5001 = vpack.c.b16 %v4105, %v4097
    %5898 = vmatprep.subr.bf16.mxu0 %v4107
    %5899 = vmatpush1.bf16.msra.mxu0 %v4106
    %5900 = vmatprep.subr.bf16.mxu0 %v4115
    %5901 = vmatpush1.bf16.msra.mxu0 %v4114
    %5902 = vmatprep.subr.bf16.mxu0 %v4123
    %5903 = vmatpush1.bf16.msra.mxu0 %v4122
    %5904 = vmatprep.subr.bf16.mxu0 %v4131
    %5905 = vmatpush1.bf16.msra.mxu0 %v4130
    %5906 = vmatprep.subr.bf16.mxu0 %v4139
    %5907 = vmatpush1.bf16.msra.mxu0 %v4138
    %5908 = vmatprep.subr.bf16.mxu0 %v4147
    %5909 = vmatpush1.bf16.msra.mxu0 %v4146
    %5910 = vmatprep.subr.bf16.mxu0 %v4155
    %5911 = vmatpush1.bf16.msra.mxu0 %v4154
    %5912 = vmatprep.subr.bf16.mxu0 %v4163
    %5913 = vmatpush1.bf16.msra.mxu0 %v4162
    %5914 = vmatprep.subr.bf16.mxu0 %v4171
    %5915 = vmatpush1.bf16.msra.mxu0 %v4170
    %5916 = vmatprep.subr.bf16.mxu0 %v4179
    %5917 = vmatpush1.bf16.msra.mxu0 %v4178
    %5918 = vmatprep.subr.bf16.mxu0 %v4187
    %5919 = vmatpush1.bf16.msra.mxu0 %v4186
    %5920 = vmatprep.subr.bf16.mxu0 %v4195
    %5921 = vmatpush1.bf16.msra.mxu0 %v4194
    %5922 = vmatprep.subr.bf16.mxu0 %v4203
    %5923 = vmatpush1.bf16.msra.mxu0 %v4202
    %5924 = vmatprep.subr.bf16.mxu0 %v4211
    %5925 = vmatpush1.bf16.msra.mxu0 %v4210
    %5926 = vmatprep.subr.bf16.mxu0 %v4219
    %5927 = vmatpush1.bf16.msra.mxu0 %v4218
    %5928 = vmatprep.subr.bf16.mxu0 %v4227
    %5929 = vmatpush1.bf16.msra.mxu0 %v4226
    %5930 = vmatprep.mubr.bf16.mxu0 %v1391
    %5931 = vmatmul.mubr.bf16.gmra.mrb[0].mxu0 %v1390
    %v5932 = vpop.f32.mrb[0].mxu0
    %v5933 = vadd.f32 %v1282, %v5932
    %v5934 = vpop.f32.mrb[0].mxu0
    %v5935 = vadd.f32 %v1286, %v5934
    %v5936 = vpop.f32.mrb[0].mxu0
    %v5937 = vpop.f32.mrb[0].mxu0
    %5938 = vdwg.mxu0
    %5939 = vmatprep.subr.bf16.mxu0 %v4235
    %5940 = vmatpush1.bf16.msra.mxu0 %v4234
    %5941 = vmatprep.subr.bf16.mxu0 %v4243
    %5942 = vmatpush1.bf16.msra.mxu0 %v4242
    %5943 = vmatprep.subr.bf16.mxu0 %v4251
    %5944 = vmatpush1.bf16.msra.mxu0 %v4250
    %5945 = vmatprep.subr.bf16.mxu0 %v4259
    %5946 = vmatpush1.bf16.msra.mxu0 %v4258
    %5947 = vmatprep.subr.bf16.mxu0 %v4267
    %5948 = vmatpush1.bf16.msra.mxu0 %v4266
    %5949 = vmatprep.subr.bf16.mxu0 %v4275
    %5950 = vmatpush1.bf16.msra.mxu0 %v4274
    %5951 = vmatprep.subr.bf16.mxu0 %v4283
    %5952 = vmatpush1.bf16.msra.mxu0 %v4282
    %5953 = vmatprep.subr.bf16.mxu0 %v4291
    %5954 = vmatpush1.bf16.msra.mxu0 %v4290
    %5955 = vmatprep.subr.bf16.mxu0 %v4299
    %5956 = vmatpush1.bf16.msra.mxu0 %v4298
    %5957 = vmatprep.subr.bf16.mxu0 %v4307
    %5958 = vmatpush1.bf16.msra.mxu0 %v4306
    %5959 = vmatprep.subr.bf16.mxu0 %v4315
    %5960 = vmatpush1.bf16.msra.mxu0 %v4314
    %5961 = vmatprep.subr.bf16.mxu0 %v4323
    %5962 = vmatpush1.bf16.msra.mxu0 %v4322
    %5963 = vmatprep.subr.bf16.mxu0 %v4331
    %5964 = vmatpush1.bf16.msra.mxu0 %v4330
    %5965 = vmatprep.subr.bf16.mxu0 %v4339
    %5966 = vmatpush1.bf16.msra.mxu0 %v4338
    %5967 = vmatprep.subr.bf16.mxu0 %v4347
    %5968 = vmatpush1.bf16.msra.mxu0 %v4346
    %5969 = vmatprep.subr.bf16.mxu0 %v4355
    %5970 = vmatpush1.bf16.msra.mxu0 %v4354
    %5971 = vmatprep.mubr.bf16.mxu0 %v1393
    %5972 = vmatmul.mubr.bf16.gmra.mrb[0].mxu0 %v1392
    %v5973 = vpop.f32.mrb[0].mxu0
    %v5974 = vadd.f32 %v5933, %v5973
    %v5975 = vpop.f32.mrb[0].mxu0
    %v5976 = vadd.f32 %v5935, %v5975
    %v5977 = vpop.f32.mrb[0].mxu0
    %v5978 = vpop.f32.mrb[0].mxu0
    %5979 = vdwg.mxu0
    %5980 = vmatprep.subr.bf16.mxu0 %v4363
    %5981 = vmatpush1.bf16.msra.mxu0 %v4362
    %5982 = vmatprep.subr.bf16.mxu0 %v4371
    %5983 = vmatpush1.bf16.msra.mxu0 %v4370
    %5984 = vmatprep.subr.bf16.mxu0 %v4379
    %5985 = vmatpush1.bf16.msra.mxu0 %v4378
    %5986 = vmatprep.subr.bf16.mxu0 %v4387
    %5987 = vmatpush1.bf16.msra.mxu0 %v4386
    %5988 = vmatprep.subr.bf16.mxu0 %v4395
    %5989 = vmatpush1.bf16.msra.mxu0 %v4394
    %5990 = vmatprep.subr.bf16.mxu0 %v4403
    %5991 = vmatpush1.bf16.msra.mxu0 %v4402
    %5992 = vmatprep.subr.bf16.mxu0 %v4411
    %5993 = vmatpush1.bf16.msra.mxu0 %v4410
    %5994 = vmatprep.subr.bf16.mxu0 %v4419
    %5995 = vmatpush1.bf16.msra.mxu0 %v4418
    %5996 = vmatprep.subr.bf16.mxu0 %v4427
    %5997 = vmatpush1.bf16.msra.mxu0 %v4426
    %5998 = vmatprep.subr.bf16.mxu0 %v4435
    %5999 = vmatpush1.bf16.msra.mxu0 %v4434
    %6000 = vmatprep.subr.bf16.mxu0 %v4443
    %6001 = vmatpush1.bf16.msra.mxu0 %v4442
    %6002 = vmatprep.subr.bf16.mxu0 %v4451
    %6003 = vmatpush1.bf16.msra.mxu0 %v4450
    %6004 = vmatprep.subr.bf16.mxu0 %v4459
    %6005 = vmatpush1.bf16.msra.mxu0 %v4458
    %6006 = vmatprep.subr.bf16.mxu0 %v4467
    %6007 = vmatpush1.bf16.msra.mxu0 %v4466
    %6008 = vmatprep.subr.bf16.mxu0 %v4475
    %6009 = vmatpush1.bf16.msra.mxu0 %v4474
    %6010 = vmatprep.subr.bf16.mxu0 %v4483
    %6011 = vmatpush1.bf16.msra.mxu0 %v4482
    %6012 = vmatprep.mubr.bf16.mxu0 %v1395
    %6013 = vmatmul.mubr.bf16.gmra.mrb[0].mxu0 %v1394
    %v6014 = vpop.f32.mrb[0].mxu0
    %v6015 = vadd.f32 %v5974, %v6014
    %v6016 = vpop.f32.mrb[0].mxu0
    %v6017 = vadd.f32 %v5976, %v6016
    %v6018 = vpop.f32.mrb[0].mxu0
    %v6019 = vpop.f32.mrb[0].mxu0
    %6020 = vdwg.mxu0
    %6021 = vmatprep.subr.bf16.mxu0 %v4491
    %6022 = vmatpush1.bf16.msra.mxu0 %v4490
    %6023 = vmatprep.subr.bf16.mxu0 %v4499
    %6024 = vmatpush1.bf16.msra.mxu0 %v4498
    %6025 = vmatprep.subr.bf16.mxu0 %v4507
    %6026 = vmatpush1.bf16.msra.mxu0 %v4506
    %6027 = vmatprep.subr.bf16.mxu0 %v4515
    %6028 = vmatpush1.bf16.msra.mxu0 %v4514
    %6029 = vmatprep.subr.bf16.mxu0 %v4523
    %6030 = vmatpush1.bf16.msra.mxu0 %v4522
    %6031 = vmatprep.subr.bf16.mxu0 %v4531
    %6032 = vmatpush1.bf16.msra.mxu0 %v4530
    %6033 = vmatprep.subr.bf16.mxu0 %v4539
    %6034 = vmatpush1.bf16.msra.mxu0 %v4538
    %6035 = vmatprep.subr.bf16.mxu0 %v4547
    %6036 = vmatpush1.bf16.msra.mxu0 %v4546
    %6037 = vmatprep.subr.bf16.mxu0 %v4555
    %6038 = vmatpush1.bf16.msra.mxu0 %v4554
    %6039 = vmatprep.subr.bf16.mxu0 %v4563
    %6040 = vmatpush1.bf16.msra.mxu0 %v4562
    %6041 = vmatprep.subr.bf16.mxu0 %v4571
    %6042 = vmatpush1.bf16.msra.mxu0 %v4570
    %6043 = vmatprep.subr.bf16.mxu0 %v4579
    %6044 = vmatpush1.bf16.msra.mxu0 %v4578
    %6045 = vmatprep.subr.bf16.mxu0 %v4587
    %6046 = vmatpush1.bf16.msra.mxu0 %v4586
    %6047 = vmatprep.subr.bf16.mxu0 %v4595
    %6048 = vmatpush1.bf16.msra.mxu0 %v4594
    %6049 = vmatprep.subr.bf16.mxu0 %v4603
    %6050 = vmatpush1.bf16.msra.mxu0 %v4602
    %6051 = vmatprep.subr.bf16.mxu0 %v4611
    %6052 = vmatpush1.bf16.msra.mxu0 %v4610
    %6053 = vmatprep.mubr.bf16.mxu0 %v1397
    %6054 = vmatmul.mubr.bf16.gmra.mrb[0].mxu0 %v1396
    %v6055 = vpop.f32.mrb[0].mxu0
    %v6056 = vadd.f32 %v6015, %v6055
    %v6057 = vpop.f32.mrb[0].mxu0
    %v6058 = vadd.f32 %v6017, %v6057
    %v6059 = vpop.f32.mrb[0].mxu0
    %v6060 = vpop.f32.mrb[0].mxu0
    %6061 = vdwg.mxu0
    %6062 = vmatprep.subr.bf16.mxu0 %v4619
    %6063 = vmatpush1.bf16.msra.mxu0 %v4618
    %6064 = vmatprep.subr.bf16.mxu0 %v4627
    %6065 = vmatpush1.bf16.msra.mxu0 %v4626
    %6066 = vmatprep.subr.bf16.mxu0 %v4635
    %6067 = vmatpush1.bf16.msra.mxu0 %v4634
    %6068 = vmatprep.subr.bf16.mxu0 %v4643
    %6069 = vmatpush1.bf16.msra.mxu0 %v4642
    %6070 = vmatprep.subr.bf16.mxu0 %v4651
    %6071 = vmatpush1.bf16.msra.mxu0 %v4650
    %6072 = vmatprep.subr.bf16.mxu0 %v4659
    %6073 = vmatpush1.bf16.msra.mxu0 %v4658
    %6074 = vmatprep.subr.bf16.mxu0 %v4667
    %6075 = vmatpush1.bf16.msra.mxu0 %v4666
    %6076 = vmatprep.subr.bf16.mxu0 %v4675
    %6077 = vmatpush1.bf16.msra.mxu0 %v4674
    %6078 = vmatprep.subr.bf16.mxu0 %v4683
    %6079 = vmatpush1.bf16.msra.mxu0 %v4682
    %6080 = vmatprep.subr.bf16.mxu0 %v4691
    %6081 = vmatpush1.bf16.msra.mxu0 %v4690
    %6082 = vmatprep.subr.bf16.mxu0 %v4699
    %6083 = vmatpush1.bf16.msra.mxu0 %v4698
    %6084 = vmatprep.subr.bf16.mxu0 %v4707
    %6085 = vmatpush1.bf16.msra.mxu0 %v4706
    %6086 = vmatprep.subr.bf16.mxu0 %v4715
    %6087 = vmatpush1.bf16.msra.mxu0 %v4714
    %6088 = vmatprep.subr.bf16.mxu0 %v4723
    %6089 = vmatpush1.bf16.msra.mxu0 %v4722
    %6090 = vmatprep.subr.bf16.mxu0 %v4731
    %6091 = vmatpush1.bf16.msra.mxu0 %v4730
    %6092 = vmatprep.subr.bf16.mxu0 %v4739
    %6093 = vmatpush1.bf16.msra.mxu0 %v4738
    %6094 = vmatprep.mubr.bf16.mxu0 %v1399
    %6095 = vmatmul.mubr.bf16.gmra.mrb[0].mxu0 %v1398
    %v6096 = vpop.f32.mrb[0].mxu0
    %v6097 = vadd.f32 %v6056, %v6096
    %v6098 = vpop.f32.mrb[0].mxu0
    %v6099 = vadd.f32 %v6058, %v6098
    %v6100 = vpop.f32.mrb[0].mxu0
    %v6101 = vpop.f32.mrb[0].mxu0
    %6102 = vdwg.mxu0
    %6103 = vmatprep.subr.bf16.mxu0 %v4747
    %6104 = vmatpush1.bf16.msra.mxu0 %v4746
    %6105 = vmatprep.subr.bf16.mxu0 %v4755
    %6106 = vmatpush1.bf16.msra.mxu0 %v4754
    %6107 = vmatprep.subr.bf16.mxu0 %v4763
    %6108 = vmatpush1.bf16.msra.mxu0 %v4762
    %6109 = vmatprep.subr.bf16.mxu0 %v4771
    %6110 = vmatpush1.bf16.msra.mxu0 %v4770
    %6111 = vmatprep.subr.bf16.mxu0 %v4779
    %6112 = vmatpush1.bf16.msra.mxu0 %v4778
    %6113 = vmatprep.subr.bf16.mxu0 %v4787
    %6114 = vmatpush1.bf16.msra.mxu0 %v4786
    %6115 = vmatprep.subr.bf16.mxu0 %v4795
    %6116 = vmatpush1.bf16.msra.mxu0 %v4794
    %6117 = vmatprep.subr.bf16.mxu0 %v4803
    %6118 = vmatpush1.bf16.msra.mxu0 %v4802
    %6119 = vmatprep.subr.bf16.mxu0 %v4811
    %6120 = vmatpush1.bf16.msra.mxu0 %v4810
    %6121 = vmatprep.subr.bf16.mxu0 %v4819
    %6122 = vmatpush1.bf16.msra.mxu0 %v4818
    %6123 = vmatprep.subr.bf16.mxu0 %v4827
    %6124 = vmatpush1.bf16.msra.mxu0 %v4826
    %6125 = vmatprep.subr.bf16.mxu0 %v4835
    %6126 = vmatpush1.bf16.msra.mxu0 %v4834
    %6127 = vmatprep.subr.bf16.mxu0 %v4843
    %6128 = vmatpush1.bf16.msra.mxu0 %v4842
    %6129 = vmatprep.subr.bf16.mxu0 %v4851
    %6130 = vmatpush1.bf16.msra.mxu0 %v4850
    %6131 = vmatprep.subr.bf16.mxu0 %v4859
    %6132 = vmatpush1.bf16.msra.mxu0 %v4858
    %6133 = vmatprep.subr.bf16.mxu0 %v4867
    %6134 = vmatpush1.bf16.msra.mxu0 %v4866
    %6135 = vmatprep.mubr.bf16.mxu0 %v1401
    %6136 = vmatmul.mubr.bf16.gmra.mrb[0].mxu0 %v1400
    %v6137 = vpop.f32.mrb[0].mxu0
    %v6138 = vadd.f32 %v6097, %v6137
    %v6139 = vpop.f32.mrb[0].mxu0
    %v6140 = vadd.f32 %v6099, %v6139
    %v6141 = vpop.f32.mrb[0].mxu0
    %v6142 = vpop.f32.mrb[0].mxu0
    %6143 = vdwg.mxu0
    %6144 = vmatprep.subr.bf16.mxu0 %v4875
    %6145 = vmatpush1.bf16.msra.mxu0 %v4874
    %6146 = vmatprep.subr.bf16.mxu0 %v4883
    %6147 = vmatpush1.bf16.msra.mxu0 %v4882
    %6148 = vmatprep.subr.bf16.mxu0 %v4891
    %6149 = vmatpush1.bf16.msra.mxu0 %v4890
    %6150 = vmatprep.subr.bf16.mxu0 %v4899
    %6151 = vmatpush1.bf16.msra.mxu0 %v4898
    %6152 = vmatprep.subr.bf16.mxu0 %v4907
    %6153 = vmatpush1.bf16.msra.mxu0 %v4906
    %6154 = vmatprep.subr.bf16.mxu0 %v4915
    %6155 = vmatpush1.bf16.msra.mxu0 %v4914
    %6156 = vmatprep.subr.bf16.mxu0 %v4923
    %6157 = vmatpush1.bf16.msra.mxu0 %v4922
    %6158 = vmatprep.subr.bf16.mxu0 %v4931
    %6159 = vmatpush1.bf16.msra.mxu0 %v4930
    %6160 = vmatprep.subr.bf16.mxu0 %v4939
    %6161 = vmatpush1.bf16.msra.mxu0 %v4938
    %6162 = vmatprep.subr.bf16.mxu0 %v4947
    %6163 = vmatpush1.bf16.msra.mxu0 %v4946
    %6164 = vmatprep.subr.bf16.mxu0 %v4955
    %6165 = vmatpush1.bf16.msra.mxu0 %v4954
    %6166 = vmatprep.subr.bf16.mxu0 %v4963
    %6167 = vmatpush1.bf16.msra.mxu0 %v4962
    %6168 = vmatprep.subr.bf16.mxu0 %v4971
    %6169 = vmatpush1.bf16.msra.mxu0 %v4970
    %6170 = vmatprep.subr.bf16.mxu0 %v4979
    %6171 = vmatpush1.bf16.msra.mxu0 %v4978
    %6172 = vmatprep.subr.bf16.mxu0 %v4987
    %6173 = vmatpush1.bf16.msra.mxu0 %v4986
    %6174 = vmatprep.subr.bf16.mxu0 %v4995
    %6175 = vmatpush1.bf16.msra.mxu0 %v4994
    %6176 = vmatprep.mubr.bf16.mxu0 %v1403
    %6177 = vmatmul.mubr.bf16.gmra.mrb[0].mxu0 %v1402
    %v6178 = vpop.f32.mrb[0].mxu0
    %v6179 = vadd.f32 %v6138, %v6178
    %v6180 = vpop.f32.mrb[0].mxu0
    %v6181 = vadd.f32 %v6140, %v6180
    %v6182 = vpop.f32.mrb[0].mxu0
    %v6183 = vpop.f32.mrb[0].mxu0
    %6184 = vdwg.mxu0
    %6185 = vmatprep.subr.bf16.mxu0 %v4109
    %6186 = vmatpush1.bf16.msra.mxu0 %v4108
    %6187 = vmatprep.subr.bf16.mxu0 %v4117
    %6188 = vmatpush1.bf16.msra.mxu0 %v4116
    %6189 = vmatprep.subr.bf16.mxu0 %v4125
    %6190 = vmatpush1.bf16.msra.mxu0 %v4124
    %6191 = vmatprep.subr.bf16.mxu0 %v4133
    %6192 = vmatpush1.bf16.msra.mxu0 %v4132
    %6193 = vmatprep.subr.bf16.mxu0 %v4141
    %6194 = vmatpush1.bf16.msra.mxu0 %v4140
    %6195 = vmatprep.subr.bf16.mxu0 %v4149
    %6196 = vmatpush1.bf16.msra.mxu0 %v4148
    %6197 = vmatprep.subr.bf16.mxu0 %v4157
    %6198 = vmatpush1.bf16.msra.mxu0 %v4156
    %6199 = vmatprep.subr.bf16.mxu0 %v4165
    %6200 = vmatpush1.bf16.msra.mxu0 %v4164
    %6201 = vmatprep.subr.bf16.mxu0 %v4173
    %6202 = vmatpush1.bf16.msra.mxu0 %v4172
    %6203 = vmatprep.subr.bf16.mxu0 %v4181
    %6204 = vmatpush1.bf16.msra.mxu0 %v4180
    %6205 = vmatprep.subr.bf16.mxu0 %v4189
    %6206 = vmatpush1.bf16.msra.mxu0 %v4188
    %6207 = vmatprep.subr.bf16.mxu0 %v4197
    %6208 = vmatpush1.bf16.msra.mxu0 %v4196
    %6209 = vmatprep.subr.bf16.mxu0 %v4205
    %6210 = vmatpush1.bf16.msra.mxu0 %v4204
    %6211 = vmatprep.subr.bf16.mxu0 %v4213
    %6212 = vmatpush1.bf16.msra.mxu0 %v4212
    %6213 = vmatprep.subr.bf16.mxu0 %v4221
    %6214 = vmatpush1.bf16.msra.mxu0 %v4220
    %6215 = vmatprep.subr.bf16.mxu0 %v4229
    %6216 = vmatpush1.bf16.msra.mxu0 %v4228
    %6217 = vmatprep.mubr.bf16.mxu0 %v1391
    %6218 = vmatmul.mubr.bf16.gmra.mrb[0].mxu0 %v1390
    %v6219 = vpop.f32.mrb[0].mxu0
    %v6220 = vadd.f32 %v1290, %v6219
    %v6221 = vpop.f32.mrb[0].mxu0
    %v6222 = vadd.f32 %v1294, %v6221
    %v6223 = vpop.f32.mrb[0].mxu0
    %v6224 = vpop.f32.mrb[0].mxu0
    %6225 = vdwg.mxu0
    %6226 = vmatprep.subr.bf16.mxu0 %v4237
    %6227 = vmatpush1.bf16.msra.mxu0 %v4236
    %6228 = vmatprep.subr.bf16.mxu0 %v4245
    %6229 = vmatpush1.bf16.msra.mxu0 %v4244
    %6230 = vmatprep.subr.bf16.mxu0 %v4253
    %6231 = vmatpush1.bf16.msra.mxu0 %v4252
    %6232 = vmatprep.subr.bf16.mxu0 %v4261
    %6233 = vmatpush1.bf16.msra.mxu0 %v4260
    %6234 = vmatprep.subr.bf16.mxu0 %v4269
    %6235 = vmatpush1.bf16.msra.mxu0 %v4268
    %6236 = vmatprep.subr.bf16.mxu0 %v4277
    %6237 = vmatpush1.bf16.msra.mxu0 %v4276
    %6238 = vmatprep.subr.bf16.mxu0 %v4285
    %6239 = vmatpush1.bf16.msra.mxu0 %v4284
    %6240 = vmatprep.subr.bf16.mxu0 %v4293
    %6241 = vmatpush1.bf16.msra.mxu0 %v4292
    %6242 = vmatprep.subr.bf16.mxu0 %v4301
    %6243 = vmatpush1.bf16.msra.mxu0 %v4300
    %6244 = vmatprep.subr.bf16.mxu0 %v4309
    %6245 = vmatpush1.bf16.msra.mxu0 %v4308
    %6246 = vmatprep.subr.bf16.mxu0 %v4317
    %6247 = vmatpush1.bf16.msra.mxu0 %v4316
    %6248 = vmatprep.subr.bf16.mxu0 %v4325
    %6249 = vmatpush1.bf16.msra.mxu0 %v4324
    %6250 = vmatprep.subr.bf16.mxu0 %v4333
    %6251 = vmatpush1.bf16.msra.mxu0 %v4332
    %6252 = vmatprep.subr.bf16.mxu0 %v4341
    %6253 = vmatpush1.bf16.msra.mxu0 %v4340
    %6254 = vmatprep.subr.bf16.mxu0 %v4349
    %6255 = vmatpush1.bf16.msra.mxu0 %v4348
    %6256 = vmatprep.subr.bf16.mxu0 %v4357
    %6257 = vmatpush1.bf16.msra.mxu0 %v4356
    %6258 = vmatprep.mubr.bf16.mxu0 %v1393
    %6259 = vmatmul.mubr.bf16.gmra.mrb[0].mxu0 %v1392
    %v6260 = vpop.f32.mrb[0].mxu0
    %v6261 = vadd.f32 %v6220, %v6260
    %v6262 = vpop.f32.mrb[0].mxu0
    %v6263 = vadd.f32 %v6222, %v6262
    %v6264 = vpop.f32.mrb[0].mxu0
    %v6265 = vpop.f32.mrb[0].mxu0
    %6266 = vdwg.mxu0
    %6267 = vmatprep.subr.bf16.mxu0 %v4365
    %6268 = vmatpush1.bf16.msra.mxu0 %v4364
    %6269 = vmatprep.subr.bf16.mxu0 %v4373
    %6270 = vmatpush1.bf16.msra.mxu0 %v4372
    %6271 = vmatprep.subr.bf16.mxu0 %v4381
    %6272 = vmatpush1.bf16.msra.mxu0 %v4380
    %6273 = vmatprep.subr.bf16.mxu0 %v4389
    %6274 = vmatpush1.bf16.msra.mxu0 %v4388
    %6275 = vmatprep.subr.bf16.mxu0 %v4397
    %6276 = vmatpush1.bf16.msra.mxu0 %v4396
    %6277 = vmatprep.subr.bf16.mxu0 %v4405
    %6278 = vmatpush1.bf16.msra.mxu0 %v4404
    %6279 = vmatprep.subr.bf16.mxu0 %v4413
    %6280 = vmatpush1.bf16.msra.mxu0 %v4412
    %6281 = vmatprep.subr.bf16.mxu0 %v4421
    %6282 = vmatpush1.bf16.msra.mxu0 %v4420
    %6283 = vmatprep.subr.bf16.mxu0 %v4429
    %6284 = vmatpush1.bf16.msra.mxu0 %v4428
    %6285 = vmatprep.subr.bf16.mxu0 %v4437
    %6286 = vmatpush1.bf16.msra.mxu0 %v4436
    %6287 = vmatprep.subr.bf16.mxu0 %v4445
    %6288 = vmatpush1.bf16.msra.mxu0 %v4444
    %6289 = vmatprep.subr.bf16.mxu0 %v4453
    %6290 = vmatpush1.bf16.msra.mxu0 %v4452
    %6291 = vmatprep.subr.bf16.mxu0 %v4461
    %6292 = vmatpush1.bf16.msra.mxu0 %v4460
    %6293 = vmatprep.subr.bf16.mxu0 %v4469
    %6294 = vmatpush1.bf16.msra.mxu0 %v4468
    %6295 = vmatprep.subr.bf16.mxu0 %v4477
    %6296 = vmatpush1.bf16.msra.mxu0 %v4476
    %6297 = vmatprep.subr.bf16.mxu0 %v4485
    %6298 = vmatpush1.bf16.msra.mxu0 %v4484
    %6299 = vmatprep.mubr.bf16.mxu0 %v1395
    %6300 = vmatmul.mubr.bf16.gmra.mrb[0].mxu0 %v1394
    %v6301 = vpop.f32.mrb[0].mxu0
    %v6302 = vadd.f32 %v6261, %v6301
    %v6303 = vpop.f32.mrb[0].mxu0
    %v6304 = vadd.f32 %v6263, %v6303
    %v6305 = vpop.f32.mrb[0].mxu0
    %v6306 = vpop.f32.mrb[0].mxu0
    %6307 = vdwg.mxu0
    %6308 = vmatprep.subr.bf16.mxu0 %v4493
    %6309 = vmatpush1.bf16.msra.mxu0 %v4492
    %6310 = vmatprep.subr.bf16.mxu0 %v4501
    %6311 = vmatpush1.bf16.msra.mxu0 %v4500
    %6312 = vmatprep.subr.bf16.mxu0 %v4509
    %6313 = vmatpush1.bf16.msra.mxu0 %v4508
    %6314 = vmatprep.subr.bf16.mxu0 %v4517
    %6315 = vmatpush1.bf16.msra.mxu0 %v4516
    %6316 = vmatprep.subr.bf16.mxu0 %v4525
    %6317 = vmatpush1.bf16.msra.mxu0 %v4524
    %6318 = vmatprep.subr.bf16.mxu0 %v4533
    %6319 = vmatpush1.bf16.msra.mxu0 %v4532
    %6320 = vmatprep.subr.bf16.mxu0 %v4541
    %6321 = vmatpush1.bf16.msra.mxu0 %v4540
    %6322 = vmatprep.subr.bf16.mxu0 %v4549
    %6323 = vmatpush1.bf16.msra.mxu0 %v4548
    %6324 = vmatprep.subr.bf16.mxu0 %v4557
    %6325 = vmatpush1.bf16.msra.mxu0 %v4556
    %6326 = vmatprep.subr.bf16.mxu0 %v4565
    %6327 = vmatpush1.bf16.msra.mxu0 %v4564
    %6328 = vmatprep.subr.bf16.mxu0 %v4573
    %6329 = vmatpush1.bf16.msra.mxu0 %v4572
    %6330 = vmatprep.subr.bf16.mxu0 %v4581
    %6331 = vmatpush1.bf16.msra.mxu0 %v4580
    %6332 = vmatprep.subr.bf16.mxu0 %v4589
    %6333 = vmatpush1.bf16.msra.mxu0 %v4588
    %6334 = vmatprep.subr.bf16.mxu0 %v4597
    %6335 = vmatpush1.bf16.msra.mxu0 %v4596
    %6336 = vmatprep.subr.bf16.mxu0 %v4605
    %6337 = vmatpush1.bf16.msra.mxu0 %v4604
    %6338 = vmatprep.subr.bf16.mxu0 %v4613
    %6339 = vmatpush1.bf16.msra.mxu0 %v4612
    %6340 = vmatprep.mubr.bf16.mxu0 %v1397
    %6341 = vmatmul.mubr.bf16.gmra.mrb[0].mxu0 %v1396
    %v6342 = vpop.f32.mrb[0].mxu0
    %v6343 = vadd.f32 %v6302, %v6342
    %v6344 = vpop.f32.mrb[0].mxu0
    %v6345 = vadd.f32 %v6304, %v6344
    %v6346 = vpop.f32.mrb[0].mxu0
    %v6347 = vpop.f32.mrb[0].mxu0
    %6348 = vdwg.mxu0
    %6349 = vmatprep.subr.bf16.mxu0 %v4621
    %6350 = vmatpush1.bf16.msra.mxu0 %v4620
    %6351 = vmatprep.subr.bf16.mxu0 %v4629
    %6352 = vmatpush1.bf16.msra.mxu0 %v4628
    %6353 = vmatprep.subr.bf16.mxu0 %v4637
    %6354 = vmatpush1.bf16.msra.mxu0 %v4636
    %6355 = vmatprep.subr.bf16.mxu0 %v4645
    %6356 = vmatpush1.bf16.msra.mxu0 %v4644
    %6357 = vmatprep.subr.bf16.mxu0 %v4653
    %6358 = vmatpush1.bf16.msra.mxu0 %v4652
    %6359 = vmatprep.subr.bf16.mxu0 %v4661
    %6360 = vmatpush1.bf16.msra.mxu0 %v4660
    %6361 = vmatprep.subr.bf16.mxu0 %v4669
    %6362 = vmatpush1.bf16.msra.mxu0 %v4668
    %6363 = vmatprep.subr.bf16.mxu0 %v4677
    %6364 = vmatpush1.bf16.msra.mxu0 %v4676
    %6365 = vmatprep.subr.bf16.mxu0 %v4685
    %6366 = vmatpush1.bf16.msra.mxu0 %v4684
    %6367 = vmatprep.subr.bf16.mxu0 %v4693
    %6368 = vmatpush1.bf16.msra.mxu0 %v4692
    %6369 = vmatprep.subr.bf16.mxu0 %v4701
    %6370 = vmatpush1.bf16.msra.mxu0 %v4700
    %6371 = vmatprep.subr.bf16.mxu0 %v4709
    %6372 = vmatpush1.bf16.msra.mxu0 %v4708
    %6373 = vmatprep.subr.bf16.mxu0 %v4717
    %6374 = vmatpush1.bf16.msra.mxu0 %v4716
    %6375 = vmatprep.subr.bf16.mxu0 %v4725
    %6376 = vmatpush1.bf16.msra.mxu0 %v4724
    %6377 = vmatprep.subr.bf16.mxu0 %v4733
    %6378 = vmatpush1.bf16.msra.mxu0 %v4732
    %6379 = vmatprep.subr.bf16.mxu0 %v4741
    %6380 = vmatpush1.bf16.msra.mxu0 %v4740
    %6381 = vmatprep.mubr.bf16.mxu0 %v1399
    %6382 = vmatmul.mubr.bf16.gmra.mrb[0].mxu0 %v1398
    %v6383 = vpop.f32.mrb[0].mxu0
    %v6384 = vadd.f32 %v6343, %v6383
    %v6385 = vpop.f32.mrb[0].mxu0
    %v6386 = vadd.f32 %v6345, %v6385
    %v6387 = vpop.f32.mrb[0].mxu0
    %v6388 = vpop.f32.mrb[0].mxu0
    %6389 = vdwg.mxu0
    %6390 = vmatprep.subr.bf16.mxu0 %v4749
    %6391 = vmatpush1.bf16.msra.mxu0 %v4748
    %6392 = vmatprep.subr.bf16.mxu0 %v4757
    %6393 = vmatpush1.bf16.msra.mxu0 %v4756
    %6394 = vmatprep.subr.bf16.mxu0 %v4765
    %6395 = vmatpush1.bf16.msra.mxu0 %v4764
    %6396 = vmatprep.subr.bf16.mxu0 %v4773
    %6397 = vmatpush1.bf16.msra.mxu0 %v4772
    %6398 = vmatprep.subr.bf16.mxu0 %v4781
    %6399 = vmatpush1.bf16.msra.mxu0 %v4780
    %6400 = vmatprep.subr.bf16.mxu0 %v4789
    %6401 = vmatpush1.bf16.msra.mxu0 %v4788
    %6402 = vmatprep.subr.bf16.mxu0 %v4797
    %6403 = vmatpush1.bf16.msra.mxu0 %v4796
    %6404 = vmatprep.subr.bf16.mxu0 %v4805
    %6405 = vmatpush1.bf16.msra.mxu0 %v4804
    %6406 = vmatprep.subr.bf16.mxu0 %v4813
    %6407 = vmatpush1.bf16.msra.mxu0 %v4812
    %6408 = vmatprep.subr.bf16.mxu0 %v4821
    %6409 = vmatpush1.bf16.msra.mxu0 %v4820
    %6410 = vmatprep.subr.bf16.mxu0 %v4829
    %6411 = vmatpush1.bf16.msra.mxu0 %v4828
    %6412 = vmatprep.subr.bf16.mxu0 %v4837
    %6413 = vmatpush1.bf16.msra.mxu0 %v4836
    %6414 = vmatprep.subr.bf16.mxu0 %v4845
    %6415 = vmatpush1.bf16.msra.mxu0 %v4844
    %6416 = vmatprep.subr.bf16.mxu0 %v4853
    %6417 = vmatpush1.bf16.msra.mxu0 %v4852
    %6418 = vmatprep.subr.bf16.mxu0 %v4861
    %6419 = vmatpush1.bf16.msra.mxu0 %v4860
    %6420 = vmatprep.subr.bf16.mxu0 %v4869
    %6421 = vmatpush1.bf16.msra.mxu0 %v4868
    %6422 = vmatprep.mubr.bf16.mxu0 %v1401
    %6423 = vmatmul.mubr.bf16.gmra.mrb[0].mxu0 %v1400
    %v6424 = vpop.f32.mrb[0].mxu0
    %v6425 = vadd.f32 %v6384, %v6424
    %v6426 = vpop.f32.mrb[0].mxu0
    %v6427 = vadd.f32 %v6386, %v6426
    %v6428 = vpop.f32.mrb[0].mxu0
    %v6429 = vpop.f32.mrb[0].mxu0
    %6430 = vdwg.mxu0
    %6431 = vmatprep.subr.bf16.mxu0 %v4877
    %6432 = vmatpush1.bf16.msra.mxu0 %v4876
    %6433 = vmatprep.subr.bf16.mxu0 %v4885
    %6434 = vmatpush1.bf16.msra.mxu0 %v4884
    %6435 = vmatprep.subr.bf16.mxu0 %v4893
    %6436 = vmatpush1.bf16.msra.mxu0 %v4892
    %6437 = vmatprep.subr.bf16.mxu0 %v4901
    %6438 = vmatpush1.bf16.msra.mxu0 %v4900
    %6439 = vmatprep.subr.bf16.mxu0 %v4909
    %6440 = vmatpush1.bf16.msra.mxu0 %v4908
    %6441 = vmatprep.subr.bf16.mxu0 %v4917
    %6442 = vmatpush1.bf16.msra.mxu0 %v4916
    %6443 = vmatprep.subr.bf16.mxu0 %v4925
    %6444 = vmatpush1.bf16.msra.mxu0 %v4924
    %6445 = vmatprep.subr.bf16.mxu0 %v4933
    %6446 = vmatpush1.bf16.msra.mxu0 %v4932
    %6447 = vmatprep.subr.bf16.mxu0 %v4941
    %6448 = vmatpush1.bf16.msra.mxu0 %v4940
    %6449 = vmatprep.subr.bf16.mxu0 %v4949
    %6450 = vmatpush1.bf16.msra.mxu0 %v4948
    %6451 = vmatprep.subr.bf16.mxu0 %v4957
    %6452 = vmatpush1.bf16.msra.mxu0 %v4956
    %6453 = vmatprep.subr.bf16.mxu0 %v4965
    %6454 = vmatpush1.bf16.msra.mxu0 %v4964
    %6455 = vmatprep.subr.bf16.mxu0 %v4973
    %6456 = vmatpush1.bf16.msra.mxu0 %v4972
    %6457 = vmatprep.subr.bf16.mxu0 %v4981
    %6458 = vmatpush1.bf16.msra.mxu0 %v4980
    %6459 = vmatprep.subr.bf16.mxu0 %v4989
    %6460 = vmatpush1.bf16.msra.mxu0 %v4988
    %6461 = vmatprep.subr.bf16.mxu0 %v4997
    %6462 = vmatpush1.bf16.msra.mxu0 %v4996
    %6463 = vmatprep.mubr.bf16.mxu0 %v1403
    %6464 = vmatmul.mubr.bf16.gmra.mrb[0].mxu0 %v1402
    %v6465 = vpop.f32.mrb[0].mxu0
    %v6466 = vadd.f32 %v6425, %v6465
    %v6467 = vpop.f32.mrb[0].mxu0
    %v6468 = vadd.f32 %v6427, %v6467
    %v6469 = vpop.f32.mrb[0].mxu0
    %v6470 = vpop.f32.mrb[0].mxu0
    %6471 = vdwg.mxu0
    %6472 = vmatprep.subr.bf16.mxu0 %v4111
    %6473 = vmatpush1.bf16.msra.mxu0 %v4110
    %6474 = vmatprep.subr.bf16.mxu0 %v4119
    %6475 = vmatpush1.bf16.msra.mxu0 %v4118
    %6476 = vmatprep.subr.bf16.mxu0 %v4127
    %6477 = vmatpush1.bf16.msra.mxu0 %v4126
    %6478 = vmatprep.subr.bf16.mxu0 %v4135
    %6479 = vmatpush1.bf16.msra.mxu0 %v4134
    %6480 = vmatprep.subr.bf16.mxu0 %v4143
    %6481 = vmatpush1.bf16.msra.mxu0 %v4142
    %6482 = vmatprep.subr.bf16.mxu0 %v4151
    %6483 = vmatpush1.bf16.msra.mxu0 %v4150
    %6484 = vmatprep.subr.bf16.mxu0 %v4159
    %6485 = vmatpush1.bf16.msra.mxu0 %v4158
    %6486 = vmatprep.subr.bf16.mxu0 %v4167
    %6487 = vmatpush1.bf16.msra.mxu0 %v4166
    %6488 = vmatprep.subr.bf16.mxu0 %v4175
    %6489 = vmatpush1.bf16.msra.mxu0 %v4174
    %6490 = vmatprep.subr.bf16.mxu0 %v4183
    %6491 = vmatpush1.bf16.msra.mxu0 %v4182
    %6492 = vmatprep.subr.bf16.mxu0 %v4191
    %6493 = vmatpush1.bf16.msra.mxu0 %v4190
    %6494 = vmatprep.subr.bf16.mxu0 %v4199
    %6495 = vmatpush1.bf16.msra.mxu0 %v4198
    %6496 = vmatprep.subr.bf16.mxu0 %v4207
    %6497 = vmatpush1.bf16.msra.mxu0 %v4206
    %6498 = vmatprep.subr.bf16.mxu0 %v4215
    %6499 = vmatpush1.bf16.msra.mxu0 %v4214
    %6500 = vmatprep.subr.bf16.mxu0 %v4223
    %6501 = vmatpush1.bf16.msra.mxu0 %v4222
    %6502 = vmatprep.subr.bf16.mxu0 %v4231
    %6503 = vmatpush1.bf16.msra.mxu0 %v4230
    %6504 = vmatprep.mubr.bf16.mxu0 %v1391
    %6505 = vmatmul.mubr.bf16.gmra.mrb[0].mxu0 %v1390
    %v6506 = vpop.f32.mrb[0].mxu0
    %v6507 = vadd.f32 %v1298, %v6506
    %v6508 = vpop.f32.mrb[0].mxu0
    %v6509 = vadd.f32 %v1302, %v6508
    %v6510 = vpop.f32.mrb[0].mxu0
    %v6511 = vpop.f32.mrb[0].mxu0
    %6512 = vdwg.mxu0
    %6513 = vmatprep.subr.bf16.mxu0 %v4239
    %6514 = vmatpush1.bf16.msra.mxu0 %v4238
    %6515 = vmatprep.subr.bf16.mxu0 %v4247
    %6516 = vmatpush1.bf16.msra.mxu0 %v4246
    %6517 = vmatprep.subr.bf16.mxu0 %v4255
    %6518 = vmatpush1.bf16.msra.mxu0 %v4254
    %6519 = vmatprep.subr.bf16.mxu0 %v4263
    %6520 = vmatpush1.bf16.msra.mxu0 %v4262
    %6521 = vmatprep.subr.bf16.mxu0 %v4271
    %6522 = vmatpush1.bf16.msra.mxu0 %v4270
    %6523 = vmatprep.subr.bf16.mxu0 %v4279
    %6524 = vmatpush1.bf16.msra.mxu0 %v4278
    %6525 = vmatprep.subr.bf16.mxu0 %v4287
    %6526 = vmatpush1.bf16.msra.mxu0 %v4286
    %6527 = vmatprep.subr.bf16.mxu0 %v4295
    %6528 = vmatpush1.bf16.msra.mxu0 %v4294
    %6529 = vmatprep.subr.bf16.mxu0 %v4303
    %6530 = vmatpush1.bf16.msra.mxu0 %v4302
    %6531 = vmatprep.subr.bf16.mxu0 %v4311
    %6532 = vmatpush1.bf16.msra.mxu0 %v4310
    %6533 = vmatprep.subr.bf16.mxu0 %v4319
    %6534 = vmatpush1.bf16.msra.mxu0 %v4318
    %6535 = vmatprep.subr.bf16.mxu0 %v4327
    %6536 = vmatpush1.bf16.msra.mxu0 %v4326
    %6537 = vmatprep.subr.bf16.mxu0 %v4335
    %6538 = vmatpush1.bf16.msra.mxu0 %v4334
    %6539 = vmatprep.subr.bf16.mxu0 %v4343
    %6540 = vmatpush1.bf16.msra.mxu0 %v4342
    %6541 = vmatprep.subr.bf16.mxu0 %v4351
    %6542 = vmatpush1.bf16.msra.mxu0 %v4350
    %6543 = vmatprep.subr.bf16.mxu0 %v4359
    %6544 = vmatpush1.bf16.msra.mxu0 %v4358
    %6545 = vmatprep.mubr.bf16.mxu0 %v1393
    %6546 = vmatmul.mubr.bf16.gmra.mrb[0].mxu0 %v1392
    %v6547 = vpop.f32.mrb[0].mxu0
    %v6548 = vadd.f32 %v6507, %v6547
    %v6549 = vpop.f32.mrb[0].mxu0
    %v6550 = vadd.f32 %v6509, %v6549
    %v6551 = vpop.f32.mrb[0].mxu0
    %v6552 = vpop.f32.mrb[0].mxu0
    %6553 = vdwg.mxu0
    %6554 = vmatprep.subr.bf16.mxu0 %v4367
    %6555 = vmatpush1.bf16.msra.mxu0 %v4366
    %6556 = vmatprep.subr.bf16.mxu0 %v4375
    %6557 = vmatpush1.bf16.msra.mxu0 %v4374
    %6558 = vmatprep.subr.bf16.mxu0 %v4383
    %6559 = vmatpush1.bf16.msra.mxu0 %v4382
    %6560 = vmatprep.subr.bf16.mxu0 %v4391
    %6561 = vmatpush1.bf16.msra.mxu0 %v4390
    %6562 = vmatprep.subr.bf16.mxu0 %v4399
    %6563 = vmatpush1.bf16.msra.mxu0 %v4398
    %6564 = vmatprep.subr.bf16.mxu0 %v4407
    %6565 = vmatpush1.bf16.msra.mxu0 %v4406
    %6566 = vmatprep.subr.bf16.mxu0 %v4415
    %6567 = vmatpush1.bf16.msra.mxu0 %v4414
    %6568 = vmatprep.subr.bf16.mxu0 %v4423
    %6569 = vmatpush1.bf16.msra.mxu0 %v4422
    %6570 = vmatprep.subr.bf16.mxu0 %v4431
    %6571 = vmatpush1.bf16.msra.mxu0 %v4430
    %6572 = vmatprep.subr.bf16.mxu0 %v4439
    %6573 = vmatpush1.bf16.msra.mxu0 %v4438
    %6574 = vmatprep.subr.bf16.mxu0 %v4447
    %6575 = vmatpush1.bf16.msra.mxu0 %v4446
    %6576 = vmatprep.subr.bf16.mxu0 %v4455
    %6577 = vmatpush1.bf16.msra.mxu0 %v4454
    %6578 = vmatprep.subr.bf16.mxu0 %v4463
    %6579 = vmatpush1.bf16.msra.mxu0 %v4462
    %6580 = vmatprep.subr.bf16.mxu0 %v4471
    %6581 = vmatpush1.bf16.msra.mxu0 %v4470
    %6582 = vmatprep.subr.bf16.mxu0 %v4479
    %6583 = vmatpush1.bf16.msra.mxu0 %v4478
    %6584 = vmatprep.subr.bf16.mxu0 %v4487
    %6585 = vmatpush1.bf16.msra.mxu0 %v4486
    %6586 = vmatprep.mubr.bf16.mxu0 %v1395
    %6587 = vmatmul.mubr.bf16.gmra.mrb[0].mxu0 %v1394
    %v6588 = vpop.f32.mrb[0].mxu0
    %v6589 = vadd.f32 %v6548, %v6588
    %v6590 = vpop.f32.mrb[0].mxu0
    %v6591 = vadd.f32 %v6550, %v6590
    %v6592 = vpop.f32.mrb[0].mxu0
    %v6593 = vpop.f32.mrb[0].mxu0
    %6594 = vdwg.mxu0
    %6595 = vmatprep.subr.bf16.mxu0 %v4495
    %6596 = vmatpush1.bf16.msra.mxu0 %v4494
    %6597 = vmatprep.subr.bf16.mxu0 %v4503
    %6598 = vmatpush1.bf16.msra.mxu0 %v4502
    %6599 = vmatprep.subr.bf16.mxu0 %v4511
    %6600 = vmatpush1.bf16.msra.mxu0 %v4510
    %6601 = vmatprep.subr.bf16.mxu0 %v4519
    %6602 = vmatpush1.bf16.msra.mxu0 %v4518
    %6603 = vmatprep.subr.bf16.mxu0 %v4527
    %6604 = vmatpush1.bf16.msra.mxu0 %v4526
    %6605 = vmatprep.subr.bf16.mxu0 %v4535
    %6606 = vmatpush1.bf16.msra.mxu0 %v4534
    %6607 = vmatprep.subr.bf16.mxu0 %v4543
    %6608 = vmatpush1.bf16.msra.mxu0 %v4542
    %6609 = vmatprep.subr.bf16.mxu0 %v4551
    %6610 = vmatpush1.bf16.msra.mxu0 %v4550
    %6611 = vmatprep.subr.bf16.mxu0 %v4559
    %6612 = vmatpush1.bf16.msra.mxu0 %v4558
    %6613 = vmatprep.subr.bf16.mxu0 %v4567
    %6614 = vmatpush1.bf16.msra.mxu0 %v4566
    %6615 = vmatprep.subr.bf16.mxu0 %v4575
    %6616 = vmatpush1.bf16.msra.mxu0 %v4574
    %6617 = vmatprep.subr.bf16.mxu0 %v4583
    %6618 = vmatpush1.bf16.msra.mxu0 %v4582
    %6619 = vmatprep.subr.bf16.mxu0 %v4591
    %6620 = vmatpush1.bf16.msra.mxu0 %v4590
    %6621 = vmatprep.subr.bf16.mxu0 %v4599
    %6622 = vmatpush1.bf16.msra.mxu0 %v4598
    %6623 = vmatprep.subr.bf16.mxu0 %v4607
    %6624 = vmatpush1.bf16.msra.mxu0 %v4606
    %6625 = vmatprep.subr.bf16.mxu0 %v4615
    %6626 = vmatpush1.bf16.msra.mxu0 %v4614
    %6627 = vmatprep.mubr.bf16.mxu0 %v1397
    %6628 = vmatmul.mubr.bf16.gmra.mrb[0].mxu0 %v1396
    %v6629 = vpop.f32.mrb[0].mxu0
    %v6630 = vadd.f32 %v6589, %v6629
    %v6631 = vpop.f32.mrb[0].mxu0
    %v6632 = vadd.f32 %v6591, %v6631
    %v6633 = vpop.f32.mrb[0].mxu0
    %v6634 = vpop.f32.mrb[0].mxu0
    %6635 = vdwg.mxu0
    %6636 = vmatprep.subr.bf16.mxu0 %v4623
    %6637 = vmatpush1.bf16.msra.mxu0 %v4622
    %6638 = vmatprep.subr.bf16.mxu0 %v4631
    %6639 = vmatpush1.bf16.msra.mxu0 %v4630
    %6640 = vmatprep.subr.bf16.mxu0 %v4639
    %6641 = vmatpush1.bf16.msra.mxu0 %v4638
    %6642 = vmatprep.subr.bf16.mxu0 %v4647
    %6643 = vmatpush1.bf16.msra.mxu0 %v4646
    %6644 = vmatprep.subr.bf16.mxu0 %v4655
    %6645 = vmatpush1.bf16.msra.mxu0 %v4654
    %6646 = vmatprep.subr.bf16.mxu0 %v4663
    %6647 = vmatpush1.bf16.msra.mxu0 %v4662
    %6648 = vmatprep.subr.bf16.mxu0 %v4671
    %6649 = vmatpush1.bf16.msra.mxu0 %v4670
    %6650 = vmatprep.subr.bf16.mxu0 %v4679
    %6651 = vmatpush1.bf16.msra.mxu0 %v4678
    %6652 = vmatprep.subr.bf16.mxu0 %v4687
    %6653 = vmatpush1.bf16.msra.mxu0 %v4686
    %6654 = vmatprep.subr.bf16.mxu0 %v4695
    %6655 = vmatpush1.bf16.msra.mxu0 %v4694
    %6656 = vmatprep.subr.bf16.mxu0 %v4703
    %6657 = vmatpush1.bf16.msra.mxu0 %v4702
    %6658 = vmatprep.subr.bf16.mxu0 %v4711
    %6659 = vmatpush1.bf16.msra.mxu0 %v4710
    %6660 = vmatprep.subr.bf16.mxu0 %v4719
    %6661 = vmatpush1.bf16.msra.mxu0 %v4718
    %6662 = vmatprep.subr.bf16.mxu0 %v4727
    %6663 = vmatpush1.bf16.msra.mxu0 %v4726
    %6664 = vmatprep.subr.bf16.mxu0 %v4735
    %6665 = vmatpush1.bf16.msra.mxu0 %v4734
    %6666 = vmatprep.subr.bf16.mxu0 %v4743
    %6667 = vmatpush1.bf16.msra.mxu0 %v4742
    %6668 = vmatprep.mubr.bf16.mxu0 %v1399
    %6669 = vmatmul.mubr.bf16.gmra.mrb[0].mxu0 %v1398
    %v6670 = vpop.f32.mrb[0].mxu0
    %v6671 = vadd.f32 %v6630, %v6670
    %v6672 = vpop.f32.mrb[0].mxu0
    %v6673 = vadd.f32 %v6632, %v6672
    %v6674 = vpop.f32.mrb[0].mxu0
    %v6675 = vpop.f32.mrb[0].mxu0
    %6676 = vdwg.mxu0
    %6677 = vmatprep.subr.bf16.mxu0 %v4751
    %6678 = vmatpush1.bf16.msra.mxu0 %v4750
    %6679 = vmatprep.subr.bf16.mxu0 %v4759
    %6680 = vmatpush1.bf16.msra.mxu0 %v4758
    %6681 = vmatprep.subr.bf16.mxu0 %v4767
    %6682 = vmatpush1.bf16.msra.mxu0 %v4766
    %6683 = vmatprep.subr.bf16.mxu0 %v4775
    %6684 = vmatpush1.bf16.msra.mxu0 %v4774
    %6685 = vmatprep.subr.bf16.mxu0 %v4783
    %6686 = vmatpush1.bf16.msra.mxu0 %v4782
    %6687 = vmatprep.subr.bf16.mxu0 %v4791
    %6688 = vmatpush1.bf16.msra.mxu0 %v4790
    %6689 = vmatprep.subr.bf16.mxu0 %v4799
    %6690 = vmatpush1.bf16.msra.mxu0 %v4798
    %6691 = vmatprep.subr.bf16.mxu0 %v4807
    %6692 = vmatpush1.bf16.msra.mxu0 %v4806
    %6693 = vmatprep.subr.bf16.mxu0 %v4815
    %6694 = vmatpush1.bf16.msra.mxu0 %v4814
    %6695 = vmatprep.subr.bf16.mxu0 %v4823
    %6696 = vmatpush1.bf16.msra.mxu0 %v4822
    %6697 = vmatprep.subr.bf16.mxu0 %v4831
    %6698 = vmatpush1.bf16.msra.mxu0 %v4830
    %6699 = vmatprep.subr.bf16.mxu0 %v4839
    %6700 = vmatpush1.bf16.msra.mxu0 %v4838
    %6701 = vmatprep.subr.bf16.mxu0 %v4847
    %6702 = vmatpush1.bf16.msra.mxu0 %v4846
    %6703 = vmatprep.subr.bf16.mxu0 %v4855
    %6704 = vmatpush1.bf16.msra.mxu0 %v4854
    %6705 = vmatprep.subr.bf16.mxu0 %v4863
    %6706 = vmatpush1.bf16.msra.mxu0 %v4862
    %6707 = vmatprep.subr.bf16.mxu0 %v4871
    %6708 = vmatpush1.bf16.msra.mxu0 %v4870
    %6709 = vmatprep.mubr.bf16.mxu0 %v1401
    %6710 = vmatmul.mubr.bf16.gmra.mrb[0].mxu0 %v1400
    %v6711 = vpop.f32.mrb[0].mxu0
    %v6712 = vadd.f32 %v6671, %v6711
    %v6713 = vpop.f32.mrb[0].mxu0
    %v6714 = vadd.f32 %v6673, %v6713
    %v6715 = vpop.f32.mrb[0].mxu0
    %v6716 = vpop.f32.mrb[0].mxu0
    %6717 = vdwg.mxu0
    %6718 = vmatprep.subr.bf16.mxu0 %v4879
    %6719 = vmatpush1.bf16.msra.mxu0 %v4878
    %6720 = vmatprep.subr.bf16.mxu0 %v4887
    %6721 = vmatpush1.bf16.msra.mxu0 %v4886
    %6722 = vmatprep.subr.bf16.mxu0 %v4895
    %6723 = vmatpush1.bf16.msra.mxu0 %v4894
    %6724 = vmatprep.subr.bf16.mxu0 %v4903
    %6725 = vmatpush1.bf16.msra.mxu0 %v4902
    %6726 = vmatprep.subr.bf16.mxu0 %v4911
    %6727 = vmatpush1.bf16.msra.mxu0 %v4910
    %6728 = vmatprep.subr.bf16.mxu0 %v4919
    %6729 = vmatpush1.bf16.msra.mxu0 %v4918
    %6730 = vmatprep.subr.bf16.mxu0 %v4927
    %6731 = vmatpush1.bf16.msra.mxu0 %v4926
    %6732 = vmatprep.subr.bf16.mxu0 %v4935
    %6733 = vmatpush1.bf16.msra.mxu0 %v4934
    %6734 = vmatprep.subr.bf16.mxu0 %v4943
    %6735 = vmatpush1.bf16.msra.mxu0 %v4942
    %6736 = vmatprep.subr.bf16.mxu0 %v4951
    %6737 = vmatpush1.bf16.msra.mxu0 %v4950
    %6738 = vmatprep.subr.bf16.mxu0 %v4959
    %6739 = vmatpush1.bf16.msra.mxu0 %v4958
    %6740 = vmatprep.subr.bf16.mxu0 %v4967
    %6741 = vmatpush1.bf16.msra.mxu0 %v4966
    %6742 = vmatprep.subr.bf16.mxu0 %v4975
    %6743 = vmatpush1.bf16.msra.mxu0 %v4974
    %6744 = vmatprep.subr.bf16.mxu0 %v4983
    %6745 = vmatpush1.bf16.msra.mxu0 %v4982
    %6746 = vmatprep.subr.bf16.mxu0 %v4991
    %6747 = vmatpush1.bf16.msra.mxu0 %v4990
    %6748 = vmatprep.subr.bf16.mxu0 %v4999
    %6749 = vmatpush1.bf16.msra.mxu0 %v4998
    %6750 = vmatprep.mubr.bf16.mxu0 %v1403
    %6751 = vmatmul.mubr.bf16.gmra.mrb[0].mxu0 %v1402
    %v6752 = vpop.f32.mrb[0].mxu0
    %v6753 = vadd.f32 %v6712, %v6752
    %v6754 = vpop.f32.mrb[0].mxu0
    %v6755 = vadd.f32 %v6714, %v6754
    %v6756 = vpop.f32.mrb[0].mxu0
    %v6757 = vpop.f32.mrb[0].mxu0
    %6758 = vdwg.mxu0
    %6759 = vmatprep.subr.bf16.mxu0 %v4113
    %6760 = vmatpush1.bf16.msra.mxu0 %v4112
    %6761 = vmatprep.subr.bf16.mxu0 %v4121
    %6762 = vmatpush1.bf16.msra.mxu0 %v4120
    %6763 = vmatprep.subr.bf16.mxu0 %v4129
    %6764 = vmatpush1.bf16.msra.mxu0 %v4128
    %6765 = vmatprep.subr.bf16.mxu0 %v4137
    %6766 = vmatpush1.bf16.msra.mxu0 %v4136
    %6767 = vmatprep.subr.bf16.mxu0 %v4145
    %6768 = vmatpush1.bf16.msra.mxu0 %v4144
    %6769 = vmatprep.subr.bf16.mxu0 %v4153
    %6770 = vmatpush1.bf16.msra.mxu0 %v4152
    %6771 = vmatprep.subr.bf16.mxu0 %v4161
    %6772 = vmatpush1.bf16.msra.mxu0 %v4160
    %6773 = vmatprep.subr.bf16.mxu0 %v4169
    %6774 = vmatpush1.bf16.msra.mxu0 %v4168
    %6775 = vmatprep.subr.bf16.mxu0 %v4177
    %6776 = vmatpush1.bf16.msra.mxu0 %v4176
    %6777 = vmatprep.subr.bf16.mxu0 %v4185
    %6778 = vmatpush1.bf16.msra.mxu0 %v4184
    %6779 = vmatprep.subr.bf16.mxu0 %v4193
    %6780 = vmatpush1.bf16.msra.mxu0 %v4192
    %6781 = vmatprep.subr.bf16.mxu0 %v4201
    %6782 = vmatpush1.bf16.msra.mxu0 %v4200
    %6783 = vmatprep.subr.bf16.mxu0 %v4209
    %6784 = vmatpush1.bf16.msra.mxu0 %v4208
    %6785 = vmatprep.subr.bf16.mxu0 %v4217
    %6786 = vmatpush1.bf16.msra.mxu0 %v4216
    %6787 = vmatprep.subr.bf16.mxu0 %v4225
    %6788 = vmatpush1.bf16.msra.mxu0 %v4224
    %6789 = vmatprep.subr.bf16.mxu0 %v4233
    %6790 = vmatpush1.bf16.msra.mxu0 %v4232
    %6791 = vmatprep.mubr.bf16.mxu0 %v1391
    %6792 = vmatmul.mubr.bf16.gmra.mrb[0].mxu0 %v1390
    %v6793 = vpop.f32.mrb[0].mxu0
    %v6794 = vadd.f32 %v1306, %v6793
    %v6795 = vpop.f32.mrb[0].mxu0
    %v6796 = vadd.f32 %v1310, %v6795
    %v6797 = vpop.f32.mrb[0].mxu0
    %v6798 = vpop.f32.mrb[0].mxu0
    %6799 = vdwg.mxu0
    %6800 = vmatprep.subr.bf16.mxu0 %v4241
    %6801 = vmatpush1.bf16.msra.mxu0 %v4240
    %6802 = vmatprep.subr.bf16.mxu0 %v4249
    %6803 = vmatpush1.bf16.msra.mxu0 %v4248
    %6804 = vmatprep.subr.bf16.mxu0 %v4257
    %6805 = vmatpush1.bf16.msra.mxu0 %v4256
    %6806 = vmatprep.subr.bf16.mxu0 %v4265
    %6807 = vmatpush1.bf16.msra.mxu0 %v4264
    %6808 = vmatprep.subr.bf16.mxu0 %v4273
    %6809 = vmatpush1.bf16.msra.mxu0 %v4272
    %6810 = vmatprep.subr.bf16.mxu0 %v4281
    %6811 = vmatpush1.bf16.msra.mxu0 %v4280
    %6812 = vmatprep.subr.bf16.mxu0 %v4289
    %6813 = vmatpush1.bf16.msra.mxu0 %v4288
    %6814 = vmatprep.subr.bf16.mxu0 %v4297
    %6815 = vmatpush1.bf16.msra.mxu0 %v4296
    %6816 = vmatprep.subr.bf16.mxu0 %v4305
    %6817 = vmatpush1.bf16.msra.mxu0 %v4304
    %6818 = vmatprep.subr.bf16.mxu0 %v4313
    %6819 = vmatpush1.bf16.msra.mxu0 %v4312
    %6820 = vmatprep.subr.bf16.mxu0 %v4321
    %6821 = vmatpush1.bf16.msra.mxu0 %v4320
    %6822 = vmatprep.subr.bf16.mxu0 %v4329
    %6823 = vmatpush1.bf16.msra.mxu0 %v4328
    %6824 = vmatprep.subr.bf16.mxu0 %v4337
    %6825 = vmatpush1.bf16.msra.mxu0 %v4336
    %6826 = vmatprep.subr.bf16.mxu0 %v4345
    %6827 = vmatpush1.bf16.msra.mxu0 %v4344
    %6828 = vmatprep.subr.bf16.mxu0 %v4353
    %6829 = vmatpush1.bf16.msra.mxu0 %v4352
    %6830 = vmatprep.subr.bf16.mxu0 %v4361
    %6831 = vmatpush1.bf16.msra.mxu0 %v4360
    %6832 = vmatprep.mubr.bf16.mxu0 %v1393
    %6833 = vmatmul.mubr.bf16.gmra.mrb[0].mxu0 %v1392
    %v6834 = vpop.f32.mrb[0].mxu0
    %v6835 = vadd.f32 %v6794, %v6834
    %v6836 = vpop.f32.mrb[0].mxu0
    %v6837 = vadd.f32 %v6796, %v6836
    %v6838 = vpop.f32.mrb[0].mxu0
    %v6839 = vpop.f32.mrb[0].mxu0
    %6840 = vdwg.mxu0
    %6841 = vmatprep.subr.bf16.mxu0 %v4369
    %6842 = vmatpush1.bf16.msra.mxu0 %v4368
    %6843 = vmatprep.subr.bf16.mxu0 %v4377
    %6844 = vmatpush1.bf16.msra.mxu0 %v4376
    %6845 = vmatprep.subr.bf16.mxu0 %v4385
    %6846 = vmatpush1.bf16.msra.mxu0 %v4384
    %6847 = vmatprep.subr.bf16.mxu0 %v4393
    %6848 = vmatpush1.bf16.msra.mxu0 %v4392
    %6849 = vmatprep.subr.bf16.mxu0 %v4401
    %6850 = vmatpush1.bf16.msra.mxu0 %v4400
    %6851 = vmatprep.subr.bf16.mxu0 %v4409
    %6852 = vmatpush1.bf16.msra.mxu0 %v4408
    %6853 = vmatprep.subr.bf16.mxu0 %v4417
    %6854 = vmatpush1.bf16.msra.mxu0 %v4416
    %6855 = vmatprep.subr.bf16.mxu0 %v4425
    %6856 = vmatpush1.bf16.msra.mxu0 %v4424
    %6857 = vmatprep.subr.bf16.mxu0 %v4433
    %6858 = vmatpush1.bf16.msra.mxu0 %v4432
    %6859 = vmatprep.subr.bf16.mxu0 %v4441
    %6860 = vmatpush1.bf16.msra.mxu0 %v4440
    %6861 = vmatprep.subr.bf16.mxu0 %v4449
    %6862 = vmatpush1.bf16.msra.mxu0 %v4448
    %6863 = vmatprep.subr.bf16.mxu0 %v4457
    %6864 = vmatpush1.bf16.msra.mxu0 %v4456
    %6865 = vmatprep.subr.bf16.mxu0 %v4465
    %6866 = vmatpush1.bf16.msra.mxu0 %v4464
    %6867 = vmatprep.subr.bf16.mxu0 %v4473
    %6868 = vmatpush1.bf16.msra.mxu0 %v4472
    %6869 = vmatprep.subr.bf16.mxu0 %v4481
    %6870 = vmatpush1.bf16.msra.mxu0 %v4480
    %6871 = vmatprep.subr.bf16.mxu0 %v4489
    %6872 = vmatpush1.bf16.msra.mxu0 %v4488
    %6873 = vmatprep.mubr.bf16.mxu0 %v1395
    %6874 = vmatmul.mubr.bf16.gmra.mrb[0].mxu0 %v1394
    %v6875 = vpop.f32.mrb[0].mxu0
    %v6876 = vadd.f32 %v6835, %v6875
    %v6877 = vpop.f32.mrb[0].mxu0
    %v6878 = vadd.f32 %v6837, %v6877
    %v6879 = vpop.f32.mrb[0].mxu0
    %v6880 = vpop.f32.mrb[0].mxu0
    %6881 = vdwg.mxu0
    %6882 = vmatprep.subr.bf16.mxu0 %v4497
    %6883 = vmatpush1.bf16.msra.mxu0 %v4496
    %6884 = vmatprep.subr.bf16.mxu0 %v4505
    %6885 = vmatpush1.bf16.msra.mxu0 %v4504
    %6886 = vmatprep.subr.bf16.mxu0 %v4513
    %6887 = vmatpush1.bf16.msra.mxu0 %v4512
    %6888 = vmatprep.subr.bf16.mxu0 %v4521
    %6889 = vmatpush1.bf16.msra.mxu0 %v4520
    %6890 = vmatprep.subr.bf16.mxu0 %v4529
    %6891 = vmatpush1.bf16.msra.mxu0 %v4528
    %6892 = vmatprep.subr.bf16.mxu0 %v4537
    %6893 = vmatpush1.bf16.msra.mxu0 %v4536
    %6894 = vmatprep.subr.bf16.mxu0 %v4545
    %6895 = vmatpush1.bf16.msra.mxu0 %v4544
    %6896 = vmatprep.subr.bf16.mxu0 %v4553
    %6897 = vmatpush1.bf16.msra.mxu0 %v4552
    %6898 = vmatprep.subr.bf16.mxu0 %v4561
    %6899 = vmatpush1.bf16.msra.mxu0 %v4560
    %6900 = vmatprep.subr.bf16.mxu0 %v4569
    %6901 = vmatpush1.bf16.msra.mxu0 %v4568
    %6902 = vmatprep.subr.bf16.mxu0 %v4577
    %6903 = vmatpush1.bf16.msra.mxu0 %v4576
    %6904 = vmatprep.subr.bf16.mxu0 %v4585
    %6905 = vmatpush1.bf16.msra.mxu0 %v4584
    %6906 = vmatprep.subr.bf16.mxu0 %v4593
    %6907 = vmatpush1.bf16.msra.mxu0 %v4592
    %6908 = vmatprep.subr.bf16.mxu0 %v4601
    %6909 = vmatpush1.bf16.msra.mxu0 %v4600
    %6910 = vmatprep.subr.bf16.mxu0 %v4609
    %6911 = vmatpush1.bf16.msra.mxu0 %v4608
    %6912 = vmatprep.subr.bf16.mxu0 %v4617
    %6913 = vmatpush1.bf16.msra.mxu0 %v4616
    %6914 = vmatprep.mubr.bf16.mxu0 %v1397
    %6915 = vmatmul.mubr.bf16.gmra.mrb[0].mxu0 %v1396
    %v6916 = vpop.f32.mrb[0].mxu0
    %v6917 = vadd.f32 %v6876, %v6916
    %v6918 = vpop.f32.mrb[0].mxu0
    %v6919 = vadd.f32 %v6878, %v6918
    %v6920 = vpop.f32.mrb[0].mxu0
    %v6921 = vpop.f32.mrb[0].mxu0
    %6922 = vdwg.mxu0
    %6923 = vmatprep.subr.bf16.mxu0 %v4625
    %6924 = vmatpush1.bf16.msra.mxu0 %v4624
    %6925 = vmatprep.subr.bf16.mxu0 %v4633
    %6926 = vmatpush1.bf16.msra.mxu0 %v4632
    %6927 = vmatprep.subr.bf16.mxu0 %v4641
    %6928 = vmatpush1.bf16.msra.mxu0 %v4640
    %6929 = vmatprep.subr.bf16.mxu0 %v4649
    %6930 = vmatpush1.bf16.msra.mxu0 %v4648
    %6931 = vmatprep.subr.bf16.mxu0 %v4657
    %6932 = vmatpush1.bf16.msra.mxu0 %v4656
    %6933 = vmatprep.subr.bf16.mxu0 %v4665
    %6934 = vmatpush1.bf16.msra.mxu0 %v4664
    %6935 = vmatprep.subr.bf16.mxu0 %v4673
    %6936 = vmatpush1.bf16.msra.mxu0 %v4672
    %6937 = vmatprep.subr.bf16.mxu0 %v4681
    %6938 = vmatpush1.bf16.msra.mxu0 %v4680
    %6939 = vmatprep.subr.bf16.mxu0 %v4689
    %6940 = vmatpush1.bf16.msra.mxu0 %v4688
    %6941 = vmatprep.subr.bf16.mxu0 %v4697
    %6942 = vmatpush1.bf16.msra.mxu0 %v4696
    %6943 = vmatprep.subr.bf16.mxu0 %v4705
    %6944 = vmatpush1.bf16.msra.mxu0 %v4704
    %6945 = vmatprep.subr.bf16.mxu0 %v4713
    %6946 = vmatpush1.bf16.msra.mxu0 %v4712
    %6947 = vmatprep.subr.bf16.mxu0 %v4721
    %6948 = vmatpush1.bf16.msra.mxu0 %v4720
    %6949 = vmatprep.subr.bf16.mxu0 %v4729
    %6950 = vmatpush1.bf16.msra.mxu0 %v4728
    %6951 = vmatprep.subr.bf16.mxu0 %v4737
    %6952 = vmatpush1.bf16.msra.mxu0 %v4736
    %6953 = vmatprep.subr.bf16.mxu0 %v4745
    %6954 = vmatpush1.bf16.msra.mxu0 %v4744
    %6955 = vmatprep.mubr.bf16.mxu0 %v1399
    %6956 = vmatmul.mubr.bf16.gmra.mrb[0].mxu0 %v1398
    %v6957 = vpop.f32.mrb[0].mxu0
    %v6958 = vadd.f32 %v6917, %v6957
    %v6959 = vpop.f32.mrb[0].mxu0
    %v6960 = vadd.f32 %v6919, %v6959
    %v6961 = vpop.f32.mrb[0].mxu0
    %v6962 = vpop.f32.mrb[0].mxu0
    %6963 = vdwg.mxu0
    %6964 = vmatprep.subr.bf16.mxu0 %v4753
    %6965 = vmatpush1.bf16.msra.mxu0 %v4752
    %6966 = vmatprep.subr.bf16.mxu0 %v4761
    %6967 = vmatpush1.bf16.msra.mxu0 %v4760
    %6968 = vmatprep.subr.bf16.mxu0 %v4769
    %6969 = vmatpush1.bf16.msra.mxu0 %v4768
    %6970 = vmatprep.subr.bf16.mxu0 %v4777
    %6971 = vmatpush1.bf16.msra.mxu0 %v4776
    %6972 = vmatprep.subr.bf16.mxu0 %v4785
    %6973 = vmatpush1.bf16.msra.mxu0 %v4784
    %6974 = vmatprep.subr.bf16.mxu0 %v4793
    %6975 = vmatpush1.bf16.msra.mxu0 %v4792
    %6976 = vmatprep.subr.bf16.mxu0 %v4801
    %6977 = vmatpush1.bf16.msra.mxu0 %v4800
    %6978 = vmatprep.subr.bf16.mxu0 %v4809
    %6979 = vmatpush1.bf16.msra.mxu0 %v4808
    %6980 = vmatprep.subr.bf16.mxu0 %v4817
    %6981 = vmatpush1.bf16.msra.mxu0 %v4816
    %6982 = vmatprep.subr.bf16.mxu0 %v4825
    %6983 = vmatpush1.bf16.msra.mxu0 %v4824
    %6984 = vmatprep.subr.bf16.mxu0 %v4833
    %6985 = vmatpush1.bf16.msra.mxu0 %v4832
    %6986 = vmatprep.subr.bf16.mxu0 %v4841
    %6987 = vmatpush1.bf16.msra.mxu0 %v4840
    %6988 = vmatprep.subr.bf16.mxu0 %v4849
    %6989 = vmatpush1.bf16.msra.mxu0 %v4848
    %6990 = vmatprep.subr.bf16.mxu0 %v4857
    %6991 = vmatpush1.bf16.msra.mxu0 %v4856
    %6992 = vmatprep.subr.bf16.mxu0 %v4865
    %6993 = vmatpush1.bf16.msra.mxu0 %v4864
    %6994 = vmatprep.subr.bf16.mxu0 %v4873
    %6995 = vmatpush1.bf16.msra.mxu0 %v4872
    %6996 = vmatprep.mubr.bf16.mxu0 %v1401
    %6997 = vmatmul.mubr.bf16.gmra.mrb[0].mxu0 %v1400
    %v6998 = vpop.f32.mrb[0].mxu0
    %v6999 = vadd.f32 %v6958, %v6998
    %v7000 = vpop.f32.mrb[0].mxu0
    %v7001 = vadd.f32 %v6960, %v7000
    %v7002 = vpop.f32.mrb[0].mxu0
    %v7003 = vpop.f32.mrb[0].mxu0
    %7004 = vdwg.mxu0
    %7005 = vmatprep.subr.bf16.mxu0 %v4881
    %7006 = vmatpush1.bf16.msra.mxu0 %v4880
    %7007 = vmatprep.subr.bf16.mxu0 %v4889
    %7008 = vmatpush1.bf16.msra.mxu0 %v4888
    %7009 = vmatprep.subr.bf16.mxu0 %v4897
    %7010 = vmatpush1.bf16.msra.mxu0 %v4896
    %7011 = vmatprep.subr.bf16.mxu0 %v4905
    %7012 = vmatpush1.bf16.msra.mxu0 %v4904
    %7013 = vmatprep.subr.bf16.mxu0 %v4913
    %7014 = vmatpush1.bf16.msra.mxu0 %v4912
    %7015 = vmatprep.subr.bf16.mxu0 %v4921
    %7016 = vmatpush1.bf16.msra.mxu0 %v4920
    %7017 = vmatprep.subr.bf16.mxu0 %v4929
    %7018 = vmatpush1.bf16.msra.mxu0 %v4928
    %7019 = vmatprep.subr.bf16.mxu0 %v4937
    %7020 = vmatpush1.bf16.msra.mxu0 %v4936
    %7021 = vmatprep.subr.bf16.mxu0 %v4945
    %7022 = vmatpush1.bf16.msra.mxu0 %v4944
    %7023 = vmatprep.subr.bf16.mxu0 %v4953
    %7024 = vmatpush1.bf16.msra.mxu0 %v4952
    %7025 = vmatprep.subr.bf16.mxu0 %v4961
    %7026 = vmatpush1.bf16.msra.mxu0 %v4960
    %7027 = vmatprep.subr.bf16.mxu0 %v4969
    %7028 = vmatpush1.bf16.msra.mxu0 %v4968
    %7029 = vmatprep.subr.bf16.mxu0 %v4977
    %7030 = vmatpush1.bf16.msra.mxu0 %v4976
    %7031 = vmatprep.subr.bf16.mxu0 %v4985
    %7032 = vmatpush1.bf16.msra.mxu0 %v4984
    %7033 = vmatprep.subr.bf16.mxu0 %v4993
    %7034 = vmatpush1.bf16.msra.mxu0 %v4992
    %7035 = vmatprep.subr.bf16.mxu0 %v5001
    %7036 = vmatpush1.bf16.msra.mxu0 %v5000
    %7037 = vmatprep.mubr.bf16.mxu0 %v1403
    %7038 = vmatmul.mubr.bf16.gmra.mrb[0].mxu0 %v1402
    %v7039 = vpop.f32.mrb[0].mxu0
    %v7040 = vadd.f32 %v6999, %v7039
    %v7041 = vpop.f32.mrb[0].mxu0
    %v7042 = vadd.f32 %v7001, %v7041
    %v7043 = vpop.f32.mrb[0].mxu0
    %v7044 = vpop.f32.mrb[0].mxu0
    %7045 = vdwg.mxu0
    %v7046 = vpack.c.bf16 %v6179, %v6179
    %v7047 = vpack.c.bf16 %v6181, %v6181
    %v7048 = vpack.c.bf16 %v6466, %v6466
    %v7049 = vpack.c.bf16 %v6468, %v6468
    %v7050 = vpack.c.bf16 %v6753, %v6753
    %v7051 = vpack.c.bf16 %v6755, %v6755
    %v7052 = vpack.c.bf16 %v7040, %v7040
    %v7053 = vpack.c.bf16 %v7042, %v7042
    %v7054 = vld [vmem:[#allocation7] sm:$0xf]
    %v7055 = vld [vmem:[#allocation7 + $0x4] sm:$0xf]
    %v7056 = vld [vmem:[#allocation7 + $0x8] sm:$0xf]
    %v7057 = vld [vmem:[#allocation7 + $0xc] sm:$0xf]
    %v7058 = vld [vmem:[#allocation7 + $0x10] sm:$0xf]
    %v7059 = vld [vmem:[#allocation7 + $0x14] sm:$0xf]
    %v7060 = vld [vmem:[#allocation7 + $0x18] sm:$0xf]
    %v7061 = vld [vmem:[#allocation7 + $0x1c] sm:$0xf]
    %v7062 = vld [vmem:[#allocation7 + $0x20] sm:$0xf]
    %v7063 = vld [vmem:[#allocation7 + $0x24] sm:$0xf]
    %v7064 = vld [vmem:[#allocation7 + $0x28] sm:$0xf]
    %v7065 = vld [vmem:[#allocation7 + $0x2c] sm:$0xf]
    %v7066 = vld [vmem:[#allocation7 + $0x30] sm:$0xf]
    %v7067 = vld [vmem:[#allocation7 + $0x34] sm:$0xf]
    %v7068 = vld [vmem:[#allocation7 + $0x38] sm:$0xf]
    %v7069 = vld [vmem:[#allocation7 + $0x3c] sm:$0xf]
    %v7070 = vld [vmem:[#allocation7 + $0x40] sm:$0xf]
    %v7071 = vld [vmem:[#allocation7 + $0x44] sm:$0xf]
    %v7072 = vld [vmem:[#allocation7 + $0x48] sm:$0xf]
    %v7073 = vld [vmem:[#allocation7 + $0x4c] sm:$0xf]
    %v7074 = vld [vmem:[#allocation7 + $0x50] sm:$0xf]
    %v7075 = vld [vmem:[#allocation7 + $0x54] sm:$0xf]
    %v7076 = vld [vmem:[#allocation7 + $0x58] sm:$0xf]
    %v7077 = vld [vmem:[#allocation7 + $0x5c] sm:$0xf]
    %v7078 = vld [vmem:[#allocation7 + $0x60] sm:$0xf]
    %v7079 = vld [vmem:[#allocation7 + $0x64] sm:$0xf]
    %v7080 = vld [vmem:[#allocation7 + $0x68] sm:$0xf]
    %v7081 = vld [vmem:[#allocation7 + $0x6c] sm:$0xf]
    %v7082 = vld [vmem:[#allocation7 + $0x70] sm:$0xf]
    %v7083 = vld [vmem:[#allocation7 + $0x74] sm:$0xf]
    %v7084 = vld [vmem:[#allocation7 + $0x78] sm:$0xf]
    %v7085 = vld [vmem:[#allocation7 + $0x7c] sm:$0xf]
    %v7086 = vld [vmem:[#allocation7 + $0x80] sm:$0xf]
    %v7087 = vld [vmem:[#allocation7 + $0x84] sm:$0xf]
    %v7088 = vld [vmem:[#allocation7 + $0x88] sm:$0xf]
    %v7089 = vld [vmem:[#allocation7 + $0x8c] sm:$0xf]
    %v7090 = vld [vmem:[#allocation7 + $0x90] sm:$0xf]
    %v7091 = vld [vmem:[#allocation7 + $0x94] sm:$0xf]
    %v7092 = vld [vmem:[#allocation7 + $0x98] sm:$0xf]
    %v7093 = vld [vmem:[#allocation7 + $0x9c] sm:$0xf]
    %v7094 = vld [vmem:[#allocation7 + $0xa0] sm:$0xf]
    %v7095 = vld [vmem:[#allocation7 + $0xa4] sm:$0xf]
    %v7096 = vld [vmem:[#allocation7 + $0xa8] sm:$0xf]
    %v7097 = vld [vmem:[#allocation7 + $0xac] sm:$0xf]
    %v7098 = vld [vmem:[#allocation7 + $0xb0] sm:$0xf]
    %v7099 = vld [vmem:[#allocation7 + $0xb4] sm:$0xf]
    %v7100 = vld [vmem:[#allocation7 + $0xb8] sm:$0xf]
    %v7101 = vld [vmem:[#allocation7 + $0xbc] sm:$0xf]
    %v7102 = vld [vmem:[#allocation7 + $0xc0] sm:$0xf]
    %v7103 = vld [vmem:[#allocation7 + $0xc4] sm:$0xf]
    %v7104 = vld [vmem:[#allocation7 + $0xc8] sm:$0xf]
    %v7105 = vld [vmem:[#allocation7 + $0xcc] sm:$0xf]
    %v7106 = vld [vmem:[#allocation7 + $0xd0] sm:$0xf]
    %v7107 = vld [vmem:[#allocation7 + $0xd4] sm:$0xf]
    %v7108 = vld [vmem:[#allocation7 + $0xd8] sm:$0xf]
    %v7109 = vld [vmem:[#allocation7 + $0xdc] sm:$0xf]
    %v7110 = vld [vmem:[#allocation7 + $0xe0] sm:$0xf]
    %v7111 = vld [vmem:[#allocation7 + $0xe4] sm:$0xf]
    %v7112 = vld [vmem:[#allocation7 + $0xe8] sm:$0xf]
    %v7113 = vld [vmem:[#allocation7 + $0xec] sm:$0xf]
    %v7114 = vld [vmem:[#allocation7 + $0xf0] sm:$0xf]
    %v7115 = vld [vmem:[#allocation7 + $0xf4] sm:$0xf]
    %v7116 = vld [vmem:[#allocation7 + $0xf8] sm:$0xf]
    %v7117 = vld [vmem:[#allocation7 + $0xfc] sm:$0xf]
    %v7118 = vld [vmem:[#allocation7 + $0x100] sm:$0xf]
    %v7119 = vld [vmem:[#allocation7 + $0x104] sm:$0xf]
    %v7120 = vld [vmem:[#allocation7 + $0x108] sm:$0xf]
    %v7121 = vld [vmem:[#allocation7 + $0x10c] sm:$0xf]
    %v7122 = vld [vmem:[#allocation7 + $0x110] sm:$0xf]
    %v7123 = vld [vmem:[#allocation7 + $0x114] sm:$0xf]
    %v7124 = vld [vmem:[#allocation7 + $0x118] sm:$0xf]
    %v7125 = vld [vmem:[#allocation7 + $0x11c] sm:$0xf]
    %v7126 = vld [vmem:[#allocation7 + $0x120] sm:$0xf]
    %v7127 = vld [vmem:[#allocation7 + $0x124] sm:$0xf]
    %v7128 = vld [vmem:[#allocation7 + $0x128] sm:$0xf]
    %v7129 = vld [vmem:[#allocation7 + $0x12c] sm:$0xf]
    %v7130 = vld [vmem:[#allocation7 + $0x130] sm:$0xf]
    %v7131 = vld [vmem:[#allocation7 + $0x134] sm:$0xf]
    %v7132 = vld [vmem:[#allocation7 + $0x138] sm:$0xf]
    %v7133 = vld [vmem:[#allocation7 + $0x13c] sm:$0xf]
    %v7134 = vld [vmem:[#allocation7 + $0x140] sm:$0xf]
    %v7135 = vld [vmem:[#allocation7 + $0x144] sm:$0xf]
    %v7136 = vld [vmem:[#allocation7 + $0x148] sm:$0xf]
    %v7137 = vld [vmem:[#allocation7 + $0x14c] sm:$0xf]
    %v7138 = vld [vmem:[#allocation7 + $0x150] sm:$0xf]
    %v7139 = vld [vmem:[#allocation7 + $0x154] sm:$0xf]
    %v7140 = vld [vmem:[#allocation7 + $0x158] sm:$0xf]
    %v7141 = vld [vmem:[#allocation7 + $0x15c] sm:$0xf]
    %v7142 = vld [vmem:[#allocation7 + $0x160] sm:$0xf]
    %v7143 = vld [vmem:[#allocation7 + $0x164] sm:$0xf]
    %v7144 = vld [vmem:[#allocation7 + $0x168] sm:$0xf]
    %v7145 = vld [vmem:[#allocation7 + $0x16c] sm:$0xf]
    %v7146 = vld [vmem:[#allocation7 + $0x170] sm:$0xf]
    %v7147 = vld [vmem:[#allocation7 + $0x174] sm:$0xf]
    %v7148 = vld [vmem:[#allocation7 + $0x178] sm:$0xf]
    %v7149 = vld [vmem:[#allocation7 + $0x17c] sm:$0xf]
    %v7150 = vld [vmem:[#allocation7 + $0x180] sm:$0xf]
    %v7151 = vld [vmem:[#allocation7 + $0x184] sm:$0xf]
    %v7152 = vld [vmem:[#allocation7 + $0x188] sm:$0xf]
    %v7153 = vld [vmem:[#allocation7 + $0x18c] sm:$0xf]
    %v7154 = vld [vmem:[#allocation7 + $0x190] sm:$0xf]
    %v7155 = vld [vmem:[#allocation7 + $0x194] sm:$0xf]
    %v7156 = vld [vmem:[#allocation7 + $0x198] sm:$0xf]
    %v7157 = vld [vmem:[#allocation7 + $0x19c] sm:$0xf]
    %v7158 = vld [vmem:[#allocation7 + $0x1a0] sm:$0xf]
    %v7159 = vld [vmem:[#allocation7 + $0x1a4] sm:$0xf]
    %v7160 = vld [vmem:[#allocation7 + $0x1a8] sm:$0xf]
    %v7161 = vld [vmem:[#allocation7 + $0x1ac] sm:$0xf]
    %v7162 = vld [vmem:[#allocation7 + $0x1b0] sm:$0xf]
    %v7163 = vld [vmem:[#allocation7 + $0x1b4] sm:$0xf]
    %v7164 = vld [vmem:[#allocation7 + $0x1b8] sm:$0xf]
    %v7165 = vld [vmem:[#allocation7 + $0x1bc] sm:$0xf]
    %v7166 = vld [vmem:[#allocation7 + $0x1c0] sm:$0xf]
    %v7167 = vld [vmem:[#allocation7 + $0x1c4] sm:$0xf]
    %v7168 = vld [vmem:[#allocation7 + $0x1c8] sm:$0xf]
    %v7169 = vld [vmem:[#allocation7 + $0x1cc] sm:$0xf]
    %v7170 = vld [vmem:[#allocation7 + $0x1d0] sm:$0xf]
    %v7171 = vld [vmem:[#allocation7 + $0x1d4] sm:$0xf]
    %v7172 = vld [vmem:[#allocation7 + $0x1d8] sm:$0xf]
    %v7173 = vld [vmem:[#allocation7 + $0x1dc] sm:$0xf]
    %v7174 = vld [vmem:[#allocation7 + $0x1e0] sm:$0xf]
    %v7175 = vld [vmem:[#allocation7 + $0x1e4] sm:$0xf]
    %v7176 = vld [vmem:[#allocation7 + $0x1e8] sm:$0xf]
    %v7177 = vld [vmem:[#allocation7 + $0x1ec] sm:$0xf]
    %v7178 = vld [vmem:[#allocation7 + $0x1f0] sm:$0xf]
    %v7179 = vld [vmem:[#allocation7 + $0x1f4] sm:$0xf]
    %v7180 = vld [vmem:[#allocation7 + $0x1f8] sm:$0xf]
    %v7181 = vld [vmem:[#allocation7 + $0x1fc] sm:$0xf]
    %v7182 = vld [vmem:[#allocation8] sm:$0x1]
    %v7184 = vlaneseq
    %v7185 = vshrl.u32 %v7184, 7
    %v7186 = vsub.s32 0, %v7185
    %v7187 = vrot.slane %v7182, %v7186
    %v7317 = vunpack.c.l.b16 %v7054
    %v7318 = vunpack.c.l.b16 %v7055
    %v7319 = vunpack.c.l.b16 %v7056
    %v7320 = vunpack.c.l.b16 %v7057
    %v7321 = vunpack.c.l.b16 %v7058
    %v7322 = vunpack.c.l.b16 %v7059
    %v7323 = vunpack.c.l.b16 %v7060
    %v7324 = vunpack.c.l.b16 %v7061
    %v7325 = vunpack.c.l.b16 %v7062
    %v7326 = vunpack.c.l.b16 %v7063
    %v7327 = vunpack.c.l.b16 %v7064
    %v7328 = vunpack.c.l.b16 %v7065
    %v7329 = vunpack.c.l.b16 %v7066
    %v7330 = vunpack.c.l.b16 %v7067
    %v7331 = vunpack.c.l.b16 %v7068
    %v7332 = vunpack.c.l.b16 %v7069
    %v7333 = vunpack.c.l.b16 %v7070
    %v7334 = vunpack.c.l.b16 %v7071
    %v7335 = vunpack.c.l.b16 %v7072
    %v7336 = vunpack.c.l.b16 %v7073
    %v7337 = vunpack.c.l.b16 %v7074
    %v7338 = vunpack.c.l.b16 %v7075
    %v7339 = vunpack.c.l.b16 %v7076
    %v7340 = vunpack.c.l.b16 %v7077
    %v7341 = vunpack.c.l.b16 %v7078
    %v7342 = vunpack.c.l.b16 %v7079
    %v7343 = vunpack.c.l.b16 %v7080
    %v7344 = vunpack.c.l.b16 %v7081
    %v7345 = vunpack.c.l.b16 %v7082
    %v7346 = vunpack.c.l.b16 %v7083
    %v7347 = vunpack.c.l.b16 %v7084
    %v7348 = vunpack.c.l.b16 %v7085
    %v7349 = vunpack.c.l.b16 %v7086
    %v7350 = vunpack.c.l.b16 %v7087
    %v7351 = vunpack.c.l.b16 %v7088
    %v7352 = vunpack.c.l.b16 %v7089
    %v7353 = vunpack.c.l.b16 %v7090
    %v7354 = vunpack.c.l.b16 %v7091
    %v7355 = vunpack.c.l.b16 %v7092
    %v7356 = vunpack.c.l.b16 %v7093
    %v7357 = vunpack.c.l.b16 %v7094
    %v7358 = vunpack.c.l.b16 %v7095
    %v7359 = vunpack.c.l.b16 %v7096
    %v7360 = vunpack.c.l.b16 %v7097
    %v7361 = vunpack.c.l.b16 %v7098
    %v7362 = vunpack.c.l.b16 %v7099
    %v7363 = vunpack.c.l.b16 %v7100
    %v7364 = vunpack.c.l.b16 %v7101
    %v7365 = vunpack.c.l.b16 %v7102
    %v7366 = vunpack.c.l.b16 %v7103
    %v7367 = vunpack.c.l.b16 %v7104
    %v7368 = vunpack.c.l.b16 %v7105
    %v7369 = vunpack.c.l.b16 %v7106
    %v7370 = vunpack.c.l.b16 %v7107
    %v7371 = vunpack.c.l.b16 %v7108
    %v7372 = vunpack.c.l.b16 %v7109
    %v7373 = vunpack.c.l.b16 %v7110
    %v7374 = vunpack.c.l.b16 %v7111
    %v7375 = vunpack.c.l.b16 %v7112
    %v7376 = vunpack.c.l.b16 %v7113
    %v7377 = vunpack.c.l.b16 %v7114
    %v7378 = vunpack.c.l.b16 %v7115
    %v7379 = vunpack.c.l.b16 %v7116
    %v7380 = vunpack.c.l.b16 %v7117
    %v7381 = vunpack.c.l.b16 %v7118
    %v7382 = vunpack.c.l.b16 %v7119
    %v7383 = vunpack.c.l.b16 %v7120
    %v7384 = vunpack.c.l.b16 %v7121
    %v7385 = vunpack.c.l.b16 %v7122
    %v7386 = vunpack.c.l.b16 %v7123
    %v7387 = vunpack.c.l.b16 %v7124
    %v7388 = vunpack.c.l.b16 %v7125
    %v7389 = vunpack.c.l.b16 %v7126
    %v7390 = vunpack.c.l.b16 %v7127
    %v7391 = vunpack.c.l.b16 %v7128
    %v7392 = vunpack.c.l.b16 %v7129
    %v7393 = vunpack.c.l.b16 %v7130
    %v7394 = vunpack.c.l.b16 %v7131
    %v7395 = vunpack.c.l.b16 %v7132
    %v7396 = vunpack.c.l.b16 %v7133
    %v7397 = vunpack.c.l.b16 %v7134
    %v7398 = vunpack.c.l.b16 %v7135
    %v7399 = vunpack.c.l.b16 %v7136
    %v7400 = vunpack.c.l.b16 %v7137
    %v7401 = vunpack.c.l.b16 %v7138
    %v7402 = vunpack.c.l.b16 %v7139
    %v7403 = vunpack.c.l.b16 %v7140
    %v7404 = vunpack.c.l.b16 %v7141
    %v7405 = vunpack.c.l.b16 %v7142
    %v7406 = vunpack.c.l.b16 %v7143
    %v7407 = vunpack.c.l.b16 %v7144
    %v7408 = vunpack.c.l.b16 %v7145
    %v7409 = vunpack.c.l.b16 %v7146
    %v7410 = vunpack.c.l.b16 %v7147
    %v7411 = vunpack.c.l.b16 %v7148
    %v7412 = vunpack.c.l.b16 %v7149
    %v7413 = vunpack.c.l.b16 %v7150
    %v7414 = vunpack.c.l.b16 %v7151
    %v7415 = vunpack.c.l.b16 %v7152
    %v7416 = vunpack.c.l.b16 %v7153
    %v7417 = vunpack.c.l.b16 %v7154
    %v7418 = vunpack.c.l.b16 %v7155
    %v7419 = vunpack.c.l.b16 %v7156
    %v7420 = vunpack.c.l.b16 %v7157
    %v7421 = vunpack.c.l.b16 %v7158
    %v7422 = vunpack.c.l.b16 %v7159
    %v7423 = vunpack.c.l.b16 %v7160
    %v7424 = vunpack.c.l.b16 %v7161
    %v7425 = vunpack.c.l.b16 %v7162
    %v7426 = vunpack.c.l.b16 %v7163
    %v7427 = vunpack.c.l.b16 %v7164
    %v7428 = vunpack.c.l.b16 %v7165
    %v7429 = vunpack.c.l.b16 %v7166
    %v7430 = vunpack.c.l.b16 %v7167
    %v7431 = vunpack.c.l.b16 %v7168
    %v7432 = vunpack.c.l.b16 %v7169
    %v7433 = vunpack.c.l.b16 %v7170
    %v7434 = vunpack.c.l.b16 %v7171
    %v7435 = vunpack.c.l.b16 %v7172
    %v7436 = vunpack.c.l.b16 %v7173
    %v7437 = vunpack.c.l.b16 %v7174
    %v7438 = vunpack.c.l.b16 %v7175
    %v7439 = vunpack.c.l.b16 %v7176
    %v7440 = vunpack.c.l.b16 %v7177
    %v7441 = vunpack.c.l.b16 %v7178
    %v7442 = vunpack.c.l.b16 %v7179
    %v7443 = vunpack.c.l.b16 %v7180
    %v7444 = vunpack.c.l.b16 %v7181
    %v7445 = vpack.c.b16 %v7318, %v7317
    %v7446 = vpack.c.b16 %v7320, %v7319
    %v7447 = vpack.c.b16 %v7322, %v7321
    %v7448 = vpack.c.b16 %v7324, %v7323
    %v7449 = vpack.c.b16 %v7326, %v7325
    %v7450 = vpack.c.b16 %v7328, %v7327
    %v7451 = vpack.c.b16 %v7330, %v7329
    %v7452 = vpack.c.b16 %v7332, %v7331
    %v7453 = vpack.c.b16 %v7334, %v7333
    %v7454 = vpack.c.b16 %v7336, %v7335
    %v7455 = vpack.c.b16 %v7338, %v7337
    %v7456 = vpack.c.b16 %v7340, %v7339
    %v7457 = vpack.c.b16 %v7342, %v7341
    %v7458 = vpack.c.b16 %v7344, %v7343
    %v7459 = vpack.c.b16 %v7346, %v7345
    %v7460 = vpack.c.b16 %v7348, %v7347
    %v7461 = vpack.c.b16 %v7350, %v7349
    %v7462 = vpack.c.b16 %v7352, %v7351
    %v7463 = vpack.c.b16 %v7354, %v7353
    %v7464 = vpack.c.b16 %v7356, %v7355
    %v7465 = vpack.c.b16 %v7358, %v7357
    %v7466 = vpack.c.b16 %v7360, %v7359
    %v7467 = vpack.c.b16 %v7362, %v7361
    %v7468 = vpack.c.b16 %v7364, %v7363
    %v7469 = vpack.c.b16 %v7366, %v7365
    %v7470 = vpack.c.b16 %v7368, %v7367
    %v7471 = vpack.c.b16 %v7370, %v7369
    %v7472 = vpack.c.b16 %v7372, %v7371
    %v7473 = vpack.c.b16 %v7374, %v7373
    %v7474 = vpack.c.b16 %v7376, %v7375
    %v7475 = vpack.c.b16 %v7378, %v7377
    %v7476 = vpack.c.b16 %v7380, %v7379
    %v7477 = vpack.c.b16 %v7382, %v7381
    %v7478 = vpack.c.b16 %v7384, %v7383
    %v7479 = vpack.c.b16 %v7386, %v7385
    %v7480 = vpack.c.b16 %v7388, %v7387
    %v7481 = vpack.c.b16 %v7390, %v7389
    %v7482 = vpack.c.b16 %v7392, %v7391
    %v7483 = vpack.c.b16 %v7394, %v7393
    %v7484 = vpack.c.b16 %v7396, %v7395
    %v7485 = vpack.c.b16 %v7398, %v7397
    %v7486 = vpack.c.b16 %v7400, %v7399
    %v7487 = vpack.c.b16 %v7402, %v7401
    %v7488 = vpack.c.b16 %v7404, %v7403
    %v7489 = vpack.c.b16 %v7406, %v7405
    %v7490 = vpack.c.b16 %v7408, %v7407
    %v7491 = vpack.c.b16 %v7410, %v7409
    %v7492 = vpack.c.b16 %v7412, %v7411
    %v7493 = vpack.c.b16 %v7414, %v7413
    %v7494 = vpack.c.b16 %v7416, %v7415
    %v7495 = vpack.c.b16 %v7418, %v7417
    %v7496 = vpack.c.b16 %v7420, %v7419
    %v7497 = vpack.c.b16 %v7422, %v7421
    %v7498 = vpack.c.b16 %v7424, %v7423
    %v7499 = vpack.c.b16 %v7426, %v7425
    %v7500 = vpack.c.b16 %v7428, %v7427
    %v7501 = vpack.c.b16 %v7430, %v7429
    %v7502 = vpack.c.b16 %v7432, %v7431
    %v7503 = vpack.c.b16 %v7434, %v7433
    %v7504 = vpack.c.b16 %v7436, %v7435
    %v7505 = vpack.c.b16 %v7438, %v7437
    %v7506 = vpack.c.b16 %v7440, %v7439
    %v7507 = vpack.c.b16 %v7442, %v7441
    %v7508 = vpack.c.b16 %v7444, %v7443
    %7573 = vmatprep.subr.bf16.mxu0 0
    %7574 = vmatpush1.bf16.msra.mxu0 %v7445
    %7575 = vmatprep.subr.bf16.mxu0 0
    %7576 = vmatpush1.bf16.msra.mxu0 %v7446
    %7577 = vmatprep.subr.bf16.mxu0 0
    %7578 = vmatpush1.bf16.msra.mxu0 %v7447
    %7579 = vmatprep.subr.bf16.mxu0 0
    %7580 = vmatpush1.bf16.msra.mxu0 %v7448
    %7581 = vmatprep.subr.bf16.mxu0 0
    %7582 = vmatpush1.bf16.msra.mxu0 %v7449
    %7583 = vmatprep.subr.bf16.mxu0 0
    %7584 = vmatpush1.bf16.msra.mxu0 %v7450
    %7585 = vmatprep.subr.bf16.mxu0 0
    %7586 = vmatpush1.bf16.msra.mxu0 %v7451
    %7587 = vmatprep.subr.bf16.mxu0 0
    %7588 = vmatpush1.bf16.msra.mxu0 %v7452
    %7589 = vmatprep.subr.bf16.mxu0 0
    %7590 = vmatpush1.bf16.msra.mxu0 %v7453
    %7591 = vmatprep.subr.bf16.mxu0 0
    %7592 = vmatpush1.bf16.msra.mxu0 %v7454
    %7593 = vmatprep.subr.bf16.mxu0 0
    %7594 = vmatpush1.bf16.msra.mxu0 %v7455
    %7595 = vmatprep.subr.bf16.mxu0 0
    %7596 = vmatpush1.bf16.msra.mxu0 %v7456
    %7597 = vmatprep.subr.bf16.mxu0 0
    %7598 = vmatpush1.bf16.msra.mxu0 %v7457
    %7599 = vmatprep.subr.bf16.mxu0 0
    %7600 = vmatpush1.bf16.msra.mxu0 %v7458
    %7601 = vmatprep.subr.bf16.mxu0 0
    %7602 = vmatpush1.bf16.msra.mxu0 %v7459
    %7603 = vmatprep.subr.bf16.mxu0 0
    %7604 = vmatpush1.bf16.msra.mxu0 %v7460
    %7605 = vmatprep.mubr.bf16.mxu0 %v7047
    %7606 = vmatmul.mubr.bf16.gmra.mrb[0].mxu0 %v7046
    %v7607 = vpop.f32.mrb[0].mxu0
    %v7608 = vadd.f32 %v7187, %v7607
    %v7609 = vpop.f32.mrb[0].mxu0
    %v7610 = vpop.f32.mrb[0].mxu0
    %v7611 = vpop.f32.mrb[0].mxu0
    %7612 = vdwg.mxu0
    %7613 = vmatprep.subr.bf16.mxu0 0
    %7614 = vmatpush1.bf16.msra.mxu0 %v7461
    %7615 = vmatprep.subr.bf16.mxu0 0
    %7616 = vmatpush1.bf16.msra.mxu0 %v7462
    %7617 = vmatprep.subr.bf16.mxu0 0
    %7618 = vmatpush1.bf16.msra.mxu0 %v7463
    %7619 = vmatprep.subr.bf16.mxu0 0
    %7620 = vmatpush1.bf16.msra.mxu0 %v7464
    %7621 = vmatprep.subr.bf16.mxu0 0
    %7622 = vmatpush1.bf16.msra.mxu0 %v7465
    %7623 = vmatprep.subr.bf16.mxu0 0
    %7624 = vmatpush1.bf16.msra.mxu0 %v7466
    %7625 = vmatprep.subr.bf16.mxu0 0
    %7626 = vmatpush1.bf16.msra.mxu0 %v7467
    %7627 = vmatprep.subr.bf16.mxu0 0
    %7628 = vmatpush1.bf16.msra.mxu0 %v7468
    %7629 = vmatprep.subr.bf16.mxu0 0
    %7630 = vmatpush1.bf16.msra.mxu0 %v7469
    %7631 = vmatprep.subr.bf16.mxu0 0
    %7632 = vmatpush1.bf16.msra.mxu0 %v7470
    %7633 = vmatprep.subr.bf16.mxu0 0
    %7634 = vmatpush1.bf16.msra.mxu0 %v7471
    %7635 = vmatprep.subr.bf16.mxu0 0
    %7636 = vmatpush1.bf16.msra.mxu0 %v7472
    %7637 = vmatprep.subr.bf16.mxu0 0
    %7638 = vmatpush1.bf16.msra.mxu0 %v7473
    %7639 = vmatprep.subr.bf16.mxu0 0
    %7640 = vmatpush1.bf16.msra.mxu0 %v7474
    %7641 = vmatprep.subr.bf16.mxu0 0
    %7642 = vmatpush1.bf16.msra.mxu0 %v7475
    %7643 = vmatprep.subr.bf16.mxu0 0
    %7644 = vmatpush1.bf16.msra.mxu0 %v7476
    %7645 = vmatprep.mubr.bf16.mxu0 %v7049
    %7646 = vmatmul.mubr.bf16.gmra.mrb[0].mxu0 %v7048
    %v7647 = vpop.f32.mrb[0].mxu0
    %v7648 = vadd.f32 %v7608, %v7647
    %v7649 = vpop.f32.mrb[0].mxu0
    %v7650 = vpop.f32.mrb[0].mxu0
    %v7651 = vpop.f32.mrb[0].mxu0
    %7652 = vdwg.mxu0
    %7653 = vmatprep.subr.bf16.mxu0 0
    %7654 = vmatpush1.bf16.msra.mxu0 %v7477
    %7655 = vmatprep.subr.bf16.mxu0 0
    %7656 = vmatpush1.bf16.msra.mxu0 %v7478
    %7657 = vmatprep.subr.bf16.mxu0 0
    %7658 = vmatpush1.bf16.msra.mxu0 %v7479
    %7659 = vmatprep.subr.bf16.mxu0 0
    %7660 = vmatpush1.bf16.msra.mxu0 %v7480
    %7661 = vmatprep.subr.bf16.mxu0 0
    %7662 = vmatpush1.bf16.msra.mxu0 %v7481
    %7663 = vmatprep.subr.bf16.mxu0 0
    %7664 = vmatpush1.bf16.msra.mxu0 %v7482
    %7665 = vmatprep.subr.bf16.mxu0 0
    %7666 = vmatpush1.bf16.msra.mxu0 %v7483
    %7667 = vmatprep.subr.bf16.mxu0 0
    %7668 = vmatpush1.bf16.msra.mxu0 %v7484
    %7669 = vmatprep.subr.bf16.mxu0 0
    %7670 = vmatpush1.bf16.msra.mxu0 %v7485
    %7671 = vmatprep.subr.bf16.mxu0 0
    %7672 = vmatpush1.bf16.msra.mxu0 %v7486
    %7673 = vmatprep.subr.bf16.mxu0 0
    %7674 = vmatpush1.bf16.msra.mxu0 %v7487
    %7675 = vmatprep.subr.bf16.mxu0 0
    %7676 = vmatpush1.bf16.msra.mxu0 %v7488
    %7677 = vmatprep.subr.bf16.mxu0 0
    %7678 = vmatpush1.bf16.msra.mxu0 %v7489
    %7679 = vmatprep.subr.bf16.mxu0 0
    %7680 = vmatpush1.bf16.msra.mxu0 %v7490
    %7681 = vmatprep.subr.bf16.mxu0 0
    %7682 = vmatpush1.bf16.msra.mxu0 %v7491
    %7683 = vmatprep.subr.bf16.mxu0 0
    %7684 = vmatpush1.bf16.msra.mxu0 %v7492
    %7685 = vmatprep.mubr.bf16.mxu0 %v7051
    %7686 = vmatmul.mubr.bf16.gmra.mrb[0].mxu0 %v7050
    %v7687 = vpop.f32.mrb[0].mxu0
    %v7688 = vadd.f32 %v7648, %v7687
    %v7689 = vpop.f32.mrb[0].mxu0
    %v7690 = vpop.f32.mrb[0].mxu0
    %v7691 = vpop.f32.mrb[0].mxu0
    %7692 = vdwg.mxu0
    %7693 = vmatprep.subr.bf16.mxu0 0
    %7694 = vmatpush1.bf16.msra.mxu0 %v7493
    %7695 = vmatprep.subr.bf16.mxu0 0
    %7696 = vmatpush1.bf16.msra.mxu0 %v7494
    %7697 = vmatprep.subr.bf16.mxu0 0
    %7698 = vmatpush1.bf16.msra.mxu0 %v7495
    %7699 = vmatprep.subr.bf16.mxu0 0
    %7700 = vmatpush1.bf16.msra.mxu0 %v7496
    %7701 = vmatprep.subr.bf16.mxu0 0
    %7702 = vmatpush1.bf16.msra.mxu0 %v7497
    %7703 = vmatprep.subr.bf16.mxu0 0
    %7704 = vmatpush1.bf16.msra.mxu0 %v7498
    %7705 = vmatprep.subr.bf16.mxu0 0
    %7706 = vmatpush1.bf16.msra.mxu0 %v7499
    %7707 = vmatprep.subr.bf16.mxu0 0
    %7708 = vmatpush1.bf16.msra.mxu0 %v7500
    %7709 = vmatprep.subr.bf16.mxu0 0
    %7710 = vmatpush1.bf16.msra.mxu0 %v7501
    %7711 = vmatprep.subr.bf16.mxu0 0
    %7712 = vmatpush1.bf16.msra.mxu0 %v7502
    %7713 = vmatprep.subr.bf16.mxu0 0
    %7714 = vmatpush1.bf16.msra.mxu0 %v7503
    %7715 = vmatprep.subr.bf16.mxu0 0
    %7716 = vmatpush1.bf16.msra.mxu0 %v7504
    %7717 = vmatprep.subr.bf16.mxu0 0
    %7718 = vmatpush1.bf16.msra.mxu0 %v7505
    %7719 = vmatprep.subr.bf16.mxu0 0
    %7720 = vmatpush1.bf16.msra.mxu0 %v7506
    %7721 = vmatprep.subr.bf16.mxu0 0
    %7722 = vmatpush1.bf16.msra.mxu0 %v7507
    %7723 = vmatprep.subr.bf16.mxu0 0
    %7724 = vmatpush1.bf16.msra.mxu0 %v7508
    %7725 = vmatprep.mubr.bf16.mxu0 %v7053
    %7726 = vmatmul.mubr.bf16.gmra.mrb[0].mxu0 %v7052
    %v7727 = vpop.f32.mrb[0].mxu0
    %v7728 = vadd.f32 %v7688, %v7727
    %v7729 = vpop.f32.mrb[0].mxu0
    %v7730 = vpop.f32.mrb[0].mxu0
    %v7731 = vpop.f32.mrb[0].mxu0
    %7732 = vdwg.mxu0
    %vm7733 = vcmask 1041408
    %v7734 = vsel %vm7733, %v7728, -inf
    %7735 = vmax.xlane.f32.xlu0 %v7734
    %v7736 = vpop.xlane.xlu0 %7735
    %v7737 = vsub.f32 %v7728, %v7736
    %v7738 = vmul.f32 %v7737, 1.442695
    %v7739 = vpow.pop %v7738
    %v7740 = vsel %vm7733, %v7739, 0.0
    %7741 = vadd.xlane.f32.xlu0 %v7740
    %v7742 = vpop.xlane.xlu0 %7741
    %v7743 = vrcp.pop %v7742
    %v7744 = vmul.f32 %v7739, %v7743
    %7745 = vst [vmem:[#allocation10] sm:$0x3] %v7744
    // Predicated region
    $region38: #{model_out_head.1} parent=1 // pred_check
      _
    $region39: #{model_out_head.1} parent=1 // pred_check_branch
      %7747 = sbr.rel (0) target = $region41
    $region40: #{model_out_head.1} parent=1 // pred_region
      %s7749 = ssub.s32 32, 32
      %7750 = vsyncadd [#allocation4], %s7749
      %s7752 = sshll.u32 [#allocation10], 4
      %s7753 = int_to_ptr.vmem [resolvable:$true] %s7752
      %7755 = dma.vmem_to_hbm [thread:$0]  %s7753, 32, %s5, [#allocation4]
    $region41: #{model_out_head.1} parent=1 // pred_fallthru
      _
    // Predicated region
    $region42: #{model_out_head.1} parent=1 // pred_check
      _
    $region43: #{model_out_head.1} parent=1 // pred_check_branch
      %7757 = sbr.rel (0) target = $region45
    $region44: #{model_out_head.1} parent=1 // pred_region
      %7758 = dma.done [#allocation4], 32
    $region45: #{model_out_head.1} parent=1 // pred_fallthru
      _
    %7759 = vsyncpa [#allocation3], 1
    %7760 = vsyncpa [#allocation6], 1
    %7761 = vsyncpa [#allocation9], 1
    %7762 = vsyncpa [#allocation4], 1

</llo_original>
